<compile_context>
chip_gen: v7x
topology: tpu7x:2x2x1
jax: 0.10.0
libtpu: 0.0.40
codegen_flags: <defaults>
</compile_context>

<pallas_src>
import jax
import jax.numpy as jnp
from jax.experimental import pallas as pl
from jax.experimental.pallas import tpu as pltpu

# logical (PyTorch) dims
IN_DIM = 784
HID_DIM = 400
LATENT_DIM = 20   # fc3 is Linear(20, 400) => params.latent_dimension == 20

# lane-aligned (padded) dims for the hidden/latent axes only
HID_PAD = 512      # 4 * 128
LATENT_PAD = 128   # 1 * 128


def _round_up(n, m):
    return ((n + m - 1) // m) * m


def _tpu_generation():
    """Best-effort TPU generation detection (perf tuning only, never correctness)."""
    try:
        kind = jax.devices()[0].device_kind.lower()
    except Exception:
        return 0
    if "v5" in kind:
        return 5
    if "v6" in kind:
        return 6
    if "v7" in kind or "7x" in kind:
        return 7
    return 0


def _make_kernel(elem_dtype):
    def kernel(x_ref, eps_ref,
               w1_ref, b1_ref,
               w2_ref, b2_ref,      # fused [mu | logvar] projection
               w3_ref, b3_ref,
               w4_ref, b4_ref,
               recon_ref, mu_ref, logvar_ref):
        # ---- encode: h1 = relu(x @ W1 + b1) ----
        x = x_ref[...].astype(jnp.bfloat16)          # in-kernel cast (no wrapper pad/copy)
        h1 = jnp.dot(x, w1_ref[...], preferred_element_type=jnp.float32)
        h1 = jnp.maximum(h1.astype(elem_dtype) + b1_ref[...], 0.0)

        # fused mu/logvar projection: one lane-dense [HID_PAD, 2*LATENT_PAD] matmul (f32)
        muvar = jnp.dot(h1.astype(jnp.bfloat16), w2_ref[...],
                        preferred_element_type=jnp.float32) + b2_ref[...]
        mu = muvar[:, :LATENT_PAD]          # 128-lane aligned slices
        logvar = muvar[:, LATENT_PAD:]

        # ---- reparameterize (training): z = eps * exp(0.5*logvar) + mu ----
        # padded latent lanes: eps=0, mu=0, logvar=0 -> z=0; w3's padded rows are 0 too.
        z = eps_ref[...] * jnp.exp(0.5 * logvar) + mu

        # ---- decode ----
        h3 = jnp.dot(z.astype(jnp.bfloat16), w3_ref[...],
                     preferred_element_type=jnp.float32)
        h3 = jnp.maximum(h3.astype(elem_dtype) + b3_ref[...], 0.0)
        logits = jnp.dot(h3.astype(jnp.bfloat16), w4_ref[...],
                         preferred_element_type=jnp.float32)
        logits = logits.astype(elem_dtype) + b4_ref[...]
        recon_ref[...] = jax.nn.sigmoid(logits).astype(recon_ref.dtype)

        # narrow f32 outputs (tiny; avoids padded mu/logvar HBM streams)
        mu_ref[...] = mu[:, :LATENT_DIM]
        logvar_ref[...] = logvar[:, :LATENT_DIM]
    return kernel


def pack_params(params, elem_dtype):
    """Pad hidden/latent dims to lane-aligned widths, fuse fc21/fc22, bf16 weights."""
    (w1, b1, w21, b21, w22, b22, w3, b3, w4, b4) = params

    def padw(a, rows, cols):
        out = jnp.zeros((rows, cols), jnp.float32)
        out = out.at[: a.shape[0], : a.shape[1]].set(a.astype(jnp.float32))
        return out.astype(jnp.bfloat16)

    def padb(a, cols, dtype):
        out = jnp.zeros((1, cols), jnp.float32)
        out = out.at[:, : a.shape[-1]].set(a.reshape(1, -1).astype(jnp.float32))
        return out.astype(dtype)

    w1p = padw(w1, IN_DIM, HID_PAD)            # (784, 512): zero cols >= 400
    b1p = padb(b1, HID_PAD, elem_dtype)

    # fused [mu | logvar] weight: (HID_PAD, 2*LATENT_PAD), zero-padded lanes
    w2p = jnp.zeros((HID_PAD, 2 * LATENT_PAD), jnp.float32)
    w2p = w2p.at[:HID_DIM, :LATENT_DIM].set(w21.astype(jnp.float32))
    w2p = w2p.at[:HID_DIM, LATENT_PAD:LATENT_PAD + LATENT_DIM].set(w22.astype(jnp.float32))
    w2p = w2p.astype(jnp.bfloat16)
    b2p = jnp.zeros((1, 2 * LATENT_PAD), jnp.float32)
    b2p = b2p.at[:, :LATENT_DIM].set(b21.reshape(1, -1).astype(jnp.float32))
    b2p = b2p.at[:, LATENT_PAD:LATENT_PAD + LATENT_DIM].set(b22.reshape(1, -1).astype(jnp.float32))

    w3p = padw(w3, LATENT_PAD, HID_PAD)        # zero rows >= 20, zero cols >= 400
    b3p = padb(b3, HID_PAD, elem_dtype)
    w4p = padw(w4, HID_PAD, IN_DIM)            # zero rows >= 400; last dim stays 784
    b4p = padb(b4, IN_DIM, elem_dtype)
    return (w1p, b1p, w2p, b2p, w3p, b3p, w4p, b4p)


def introvae_forward(x, eps, params):
    """x: [B, 1, 28, 28] or [B, 784] (f32); eps: [B, LATENT_DIM] (f32).

    Returns (recon[B,784] bf16, mu[B,20] f32, logvar[B,20] f32)."""
    B = x.shape[0]
    x_flat = x.reshape(B, IN_DIM).astype(jnp.float32)   # x.view(-1, 784)
    # tiny lane pad (20 -> 128) with exact zeros; keeps padded latent lanes neutral
    epsp = jnp.pad(eps.astype(jnp.float32), ((0, 0), (0, LATENT_PAD - LATENT_DIM)))

    gen = _tpu_generation()
    if gen in (5, 6):
        # single TensorCore, 128 MiB VMEM: big steps amortize pipeline overhead
        elem_dtype = jnp.float32 if gen == 5 else jnp.bfloat16  # v5e has no bf16 VPU/EUP
        tb_cap, min_steps = 1024, 1
        vmem_limit = 64 * 1024 * 1024
    else:
        # v7x (2 TCs, 64 MiB VMEM) or unknown: keep >= 2 grid steps, default VMEM limit
        elem_dtype = jnp.bfloat16
        tb_cap, min_steps = 256, 2
        vmem_limit = None

    # keep the batch a multiple of 8 sublanes (tiny pad only for odd batches)
    Bp = _round_up(B, 8)
    if Bp != B:
        x_flat = jnp.pad(x_flat, ((0, Bp - B), (0, 0)))
        epsp = jnp.pad(epsp, ((0, Bp - B), (0, 0)))

    TB = min(tb_cap, _round_up(max(-(-Bp // min_steps), 8), 8))
    grid = (pl.cdiv(Bp, TB),)   # ragged last block handled by Pallas (rows independent)

    packed = pack_params(params, elem_dtype)

    def batch_spec(feat):
        return pl.BlockSpec((TB, feat), lambda i: (i, 0))

    def const_spec(shape):
        # constant block index -> weights stay VMEM-resident, no per-step re-DMA
        return pl.BlockSpec(shape, lambda i: (0, 0))

    in_specs = [
        batch_spec(IN_DIM),                       # x  (f32, cast in kernel)
        batch_spec(LATENT_PAD),                   # eps (lane-padded)
        const_spec((IN_DIM, HID_PAD)),            # w1
        const_spec((1, HID_PAD)),                 # b1
        const_spec((HID_PAD, 2 * LATENT_PAD)),    # w2 (fused mu|logvar)
        const_spec((1, 2 * LATENT_PAD)),          # b2
        const_spec((LATENT_PAD, HID_PAD)),        # w3
        const_spec((1, HID_PAD)),                 # b3
        const_spec((HID_PAD, IN_DIM)),            # w4
        const_spec((1, IN_DIM)),                  # b4
    ]
    out_specs = (
        batch_spec(IN_DIM),       # recon (bf16)
        batch_spec(LATENT_DIM),   # mu    (f32, narrow)
        batch_spec(LATENT_DIM),   # logvar(f32, narrow)
    )

    # advisory cost estimate for the XLA scheduler
    flops = 2 * Bp * (IN_DIM * HID_PAD + HID_PAD * 2 * LATENT_PAD
                      + LATENT_PAD * HID_PAD + HID_PAD * IN_DIM)
    trans = Bp * (LATENT_PAD + IN_DIM)           # exp + sigmoid
    w_bytes = 2 * (IN_DIM * HID_PAD + HID_PAD * 2 * LATENT_PAD
                   + LATENT_PAD * HID_PAD + HID_PAD * IN_DIM)
    io_bytes = Bp * (IN_DIM * 4 + LATENT_PAD * 4) \
        + Bp * (IN_DIM * 2 + 2 * LATENT_DIM * 4)
    cost = pl.CostEstimate(flops=int(flops), transcendentals=int(trans),
                           bytes_accessed=int(w_bytes + io_bytes))

    recon, mu, logvar = pl.pallas_call(
        _make_kernel(elem_dtype),
        out_shape=(
            jax.ShapeDtypeStruct((Bp, IN_DIM), jnp.bfloat16),
            jax.ShapeDtypeStruct((Bp, LATENT_DIM), jnp.float32),
            jax.ShapeDtypeStruct((Bp, LATENT_DIM), jnp.float32),
        ),
        grid=grid,
        in_specs=in_specs,
        out_specs=out_specs,
        compiler_params=pltpu.CompilerParams(
            dimension_semantics=("parallel",),
            vmem_limit_bytes=vmem_limit),
        cost_estimate=cost,
    )(x_flat, epsp, *packed)

    if Bp != B:
        recon, mu, logvar = recon[:B], mu[:B], logvar[:B]
    return recon, mu, logvar


def init_params(key):
    """Deterministic init mimicking nn.Linear default (U[-1/sqrt(fan_in), +])."""
    def linear(k, fan_in, fan_out):
        kw, kb = jax.random.split(k)
        bound = 1.0 / jnp.sqrt(float(fan_in))
        # stored as [in, out] (transposed vs. PyTorch's [out, in])
        w = jax.random.uniform(kw, (fan_in, fan_out), jnp.float32, -bound, bound)
        b = jax.random.uniform(kb, (1, fan_out), jnp.float32, -bound, bound)
        return w, b

    k1, k21, k22, k3, k4 = jax.random.split(key, 5)
    w1, b1 = linear(k1, IN_DIM, HID_DIM)
    w21, b21 = linear(k21, HID_DIM, LATENT_DIM)
    w22, b22 = linear(k22, HID_DIM, LATENT_DIM)
    w3, b3 = linear(k3, LATENT_DIM, HID_DIM)
    w4, b4 = linear(k4, HID_DIM, IN_DIM)
    return (w1, b1, w21, b21, w22, b22, w3, b3, w4, b4)


def reference_forward(x, eps, params):
    """Pure-JAX f32 reference of the PyTorch forward (for correctness check)."""
    (w1, b1, w21, b21, w22, b22, w3, b3, w4, b4) = params
    B = x.shape[0]
    xf = x.reshape(B, IN_DIM).astype(jnp.float32)
    h1 = jnp.maximum(xf @ w1 + b1, 0.0)
    mu = h1 @ w21 + b21
    logvar = h1 @ w22 + b22
    z = eps * jnp.exp(0.5 * logvar) + mu
    h3 = jnp.maximum(z @ w3 + b3, 0.0)
    recon = jax.nn.sigmoid(h3 @ w4 + b4)
    return recon, mu, logvar


if __name__ == "__main__":
    key = jax.random.PRNGKey(0)
    k_param, k_x, k_eps = jax.random.split(key, 3)

    B = 8  # small batch
    x = jax.random.normal(k_x, (B, 1, 28, 28), dtype=jnp.float32)
    eps = jax.random.normal(k_eps, (B, LATENT_DIM), dtype=jnp.float32)
    params = init_params(k_param)

    recon, mu, logvar = jax.block_until_ready(introvae_forward(x, eps, params))

    # sanity check against pure-JAX f32 reference (bf16 weights/recon => loose tol)
    r_ref, mu_ref, lv_ref = reference_forward(x, eps, params)
    recon_f32 = recon.astype(jnp.float32)
    assert recon.shape == (B, IN_DIM)
    assert mu.shape == (B, LATENT_DIM) and logvar.shape == (B, LATENT_DIM)
    assert jnp.allclose(recon_f32, r_ref, atol=5e-2), float(jnp.max(jnp.abs(recon_f32 - r_ref)))
    assert jnp.allclose(mu, mu_ref, atol=5e-2), float(jnp.max(jnp.abs(mu - mu_ref)))
    assert jnp.allclose(logvar, lv_ref, atol=5e-2), float(jnp.max(jnp.abs(logvar - lv_ref)))

    print("KERNEL_OK")
</pallas_src>

<mosaic_0001>
module attributes {stable_mosaic.version = 11 : i64} {
  func.func @kernel(%arg0: i32, %arg1: memref<8x784xf32, #tpu.memory_space<vmem>>, %arg2: memref<8x128xf32, #tpu.memory_space<vmem>>, %arg3: memref<784x512xbf16, #tpu.memory_space<vmem>>, %arg4: memref<1x512xbf16, #tpu.memory_space<vmem>>, %arg5: memref<512x256xbf16, #tpu.memory_space<vmem>>, %arg6: memref<1x256xf32, #tpu.memory_space<vmem>>, %arg7: memref<128x512xbf16, #tpu.memory_space<vmem>>, %arg8: memref<1x512xbf16, #tpu.memory_space<vmem>>, %arg9: memref<512x784xbf16, #tpu.memory_space<vmem>>, %arg10: memref<1x784xbf16, #tpu.memory_space<vmem>>, %arg11: memref<8x784xbf16, #tpu.memory_space<vmem>>, %arg12: memref<8x20xf32, #tpu.memory_space<vmem>>, %arg13: memref<8x20xf32, #tpu.memory_space<vmem>>) attributes {dimension_semantics = [#tpu.dimension_semantics<parallel>], iteration_bounds = array<i64: 1>, scalar_prefetch = 0 : i64, scratch_operands = 0 : i64, tpu.core_type = #tpu.core_type<tc>, window_params = [{transform_indices = @transform_0, window_bounds = array<i64: 8, 784>}, {transform_indices = @transform_1, window_bounds = array<i64: 8, 128>}, {pipeline_mode = #tpu.pipeline_mode<synchronous>, transform_indices = @transform_2, window_bounds = array<i64: 784, 512>}, {pipeline_mode = #tpu.pipeline_mode<synchronous>, transform_indices = @transform_3, window_bounds = array<i64: 1, 512>}, {pipeline_mode = #tpu.pipeline_mode<synchronous>, transform_indices = @transform_4, window_bounds = array<i64: 512, 256>}, {pipeline_mode = #tpu.pipeline_mode<synchronous>, transform_indices = @transform_5, window_bounds = array<i64: 1, 256>}, {pipeline_mode = #tpu.pipeline_mode<synchronous>, transform_indices = @transform_6, window_bounds = array<i64: 128, 512>}, {pipeline_mode = #tpu.pipeline_mode<synchronous>, transform_indices = @transform_7, window_bounds = array<i64: 1, 512>}, {pipeline_mode = #tpu.pipeline_mode<synchronous>, transform_indices = @transform_8, window_bounds = array<i64: 512, 784>}, {pipeline_mode = #tpu.pipeline_mode<synchronous>, transform_indices = @transform_9, window_bounds = array<i64: 1, 784>}, {transform_indices = @transform_10, window_bounds = array<i64: 8, 784>}, {transform_indices = @transform_11, window_bounds = array<i64: 8, 20>}, {transform_indices = @transform_12, window_bounds = array<i64: 8, 20>}]} {
    %c0 = arith.constant 0 : index
    %c0_0 = arith.constant 0 : index
    %0 = vector.load %arg1[%c0, %c0_0] : memref<8x784xf32, #tpu.memory_space<vmem>>, vector<8x784xf32>
    %1 = arith.truncf %0 : vector<8x784xf32> to vector<8x784xbf16>
    %c0_1 = arith.constant 0 : index
    %c0_2 = arith.constant 0 : index
    %2 = vector.load %arg3[%c0_1, %c0_2] : memref<784x512xbf16, #tpu.memory_space<vmem>>, vector<784x512xbf16>
    %cst = arith.constant dense<0.000000e+00> : vector<8x512xf32>
    %3 = tpu.matmul %1, %2, %cst {dimension_numbers = #tpu.dot_dimension_numbers<[1], [0], [0], [1], [0, 0, 1, 1], [], []>} : vector<8x784xbf16>, vector<784x512xbf16>, vector<8x512xf32> -> vector<8x512xf32>
    %4 = arith.truncf %3 : vector<8x512xf32> to vector<8x512xbf16>
    %c0_3 = arith.constant 0 : index
    %c0_4 = arith.constant 0 : index
    %5 = vector.load %arg4[%c0_3, %c0_4] : memref<1x512xbf16, #tpu.memory_space<vmem>>, vector<1x512xbf16>
    %6 = vector.broadcast %5 : vector<1x512xbf16> to vector<8x512xbf16>
    %7 = arith.addf %4, %6 : vector<8x512xbf16>
    %cst_5 = arith.constant 0.000000e+00 : bf16
    %8 = vector.broadcast %cst_5 : bf16 to vector<8x512xbf16>
    %9 = arith.maximumf %7, %8 : vector<8x512xbf16>
    %c0_6 = arith.constant 0 : index
    %c0_7 = arith.constant 0 : index
    %10 = vector.load %arg5[%c0_6, %c0_7] : memref<512x256xbf16, #tpu.memory_space<vmem>>, vector<512x256xbf16>
    %cst_8 = arith.constant dense<0.000000e+00> : vector<8x256xf32>
    %11 = tpu.matmul %9, %10, %cst_8 {dimension_numbers = #tpu.dot_dimension_numbers<[1], [0], [0], [1], [0, 0, 1, 1], [], []>} : vector<8x512xbf16>, vector<512x256xbf16>, vector<8x256xf32> -> vector<8x256xf32>
    %c0_9 = arith.constant 0 : index
    %c0_10 = arith.constant 0 : index
    %12 = vector.load %arg6[%c0_9, %c0_10] : memref<1x256xf32, #tpu.memory_space<vmem>>, vector<1x256xf32>
    %13 = vector.broadcast %12 : vector<1x256xf32> to vector<8x256xf32>
    %14 = arith.addf %11, %13 : vector<8x256xf32>
    %15 = vector.extract_strided_slice %14 {offsets = [0, 0], sizes = [8, 128], strides = [1, 1]} : vector<8x256xf32> to vector<8x128xf32>
    %16 = vector.extract_strided_slice %14 {offsets = [0, 128], sizes = [8, 128], strides = [1, 1]} : vector<8x256xf32> to vector<8x128xf32>
    %c0_11 = arith.constant 0 : index
    %c0_12 = arith.constant 0 : index
    %17 = vector.load %arg2[%c0_11, %c0_12] : memref<8x128xf32, #tpu.memory_space<vmem>>, vector<8x128xf32>
    %cst_13 = arith.constant 5.000000e-01 : f32
    %18 = vector.broadcast %cst_13 : f32 to vector<8x128xf32>
    %19 = arith.mulf %18, %16 : vector<8x128xf32>
    %20 = math.exp %19 : vector<8x128xf32>
    %21 = arith.mulf %17, %20 : vector<8x128xf32>
    %22 = arith.addf %21, %15 : vector<8x128xf32>
    %23 = arith.truncf %22 : vector<8x128xf32> to vector<8x128xbf16>
    %c0_14 = arith.constant 0 : index
    %c0_15 = arith.constant 0 : index
    %24 = vector.load %arg7[%c0_14, %c0_15] : memref<128x512xbf16, #tpu.memory_space<vmem>>, vector<128x512xbf16>
    %cst_16 = arith.constant dense<0.000000e+00> : vector<8x512xf32>
    %25 = tpu.matmul %23, %24, %cst_16 {dimension_numbers = #tpu.dot_dimension_numbers<[1], [0], [0], [1], [0, 0, 1, 1], [], []>} : vector<8x128xbf16>, vector<128x512xbf16>, vector<8x512xf32> -> vector<8x512xf32>
    %26 = arith.truncf %25 : vector<8x512xf32> to vector<8x512xbf16>
    %c0_17 = arith.constant 0 : index
    %c0_18 = arith.constant 0 : index
    %27 = vector.load %arg8[%c0_17, %c0_18] : memref<1x512xbf16, #tpu.memory_space<vmem>>, vector<1x512xbf16>
    %28 = vector.broadcast %27 : vector<1x512xbf16> to vector<8x512xbf16>
    %29 = arith.addf %26, %28 : vector<8x512xbf16>
    %cst_19 = arith.constant 0.000000e+00 : bf16
    %30 = vector.broadcast %cst_19 : bf16 to vector<8x512xbf16>
    %31 = arith.maximumf %29, %30 : vector<8x512xbf16>
    %c0_20 = arith.constant 0 : index
    %c0_21 = arith.constant 0 : index
    %32 = vector.load %arg9[%c0_20, %c0_21] : memref<512x784xbf16, #tpu.memory_space<vmem>>, vector<512x784xbf16>
    %cst_22 = arith.constant dense<0.000000e+00> : vector<8x784xf32>
    %33 = tpu.matmul %31, %32, %cst_22 {dimension_numbers = #tpu.dot_dimension_numbers<[1], [0], [0], [1], [0, 0, 1, 1], [], []>} : vector<8x512xbf16>, vector<512x784xbf16>, vector<8x784xf32> -> vector<8x784xf32>
    %34 = arith.truncf %33 : vector<8x784xf32> to vector<8x784xbf16>
    %c0_23 = arith.constant 0 : index
    %c0_24 = arith.constant 0 : index
    %35 = vector.load %arg10[%c0_23, %c0_24] : memref<1x784xbf16, #tpu.memory_space<vmem>>, vector<1x784xbf16>
    %36 = vector.broadcast %35 : vector<1x784xbf16> to vector<8x784xbf16>
    %37 = arith.addf %34, %36 : vector<8x784xbf16>
    %38 = arith.negf %37 : vector<8x784xbf16>
    %39 = math.exp %38 : vector<8x784xbf16>
    %cst_25 = arith.constant 1.000000e+00 : bf16
    %40 = vector.broadcast %cst_25 : bf16 to vector<8x784xbf16>
    %41 = arith.addf %40, %39 : vector<8x784xbf16>
    %42 = arith.divf %40, %41 : vector<8x784xbf16>
    %c0_26 = arith.constant 0 : index
    %c0_27 = arith.constant 0 : index
    %43 = vector.load %arg11[%c0_26, %c0_27] : memref<8x784xbf16, #tpu.memory_space<vmem>>, vector<8x784xbf16>
    tpu.vector_store %arg11[%c0_26, %c0_27], %42 {strides = array<i32>} : memref<8x784xbf16, #tpu.memory_space<vmem>>, vector<8x784xbf16>,
    %44 = vector.extract_strided_slice %15 {offsets = [0, 0], sizes = [8, 20], strides = [1, 1]} : vector<8x128xf32> to vector<8x20xf32>
    %c0_28 = arith.constant 0 : index
    %c0_29 = arith.constant 0 : index
    %45 = vector.load %arg12[%c0_28, %c0_29] : memref<8x20xf32, #tpu.memory_space<vmem>>, vector<8x20xf32>
    tpu.vector_store %arg12[%c0_28, %c0_29], %44 {strides = array<i32>} : memref<8x20xf32, #tpu.memory_space<vmem>>, vector<8x20xf32>,
    %46 = vector.extract_strided_slice %16 {offsets = [0, 0], sizes = [8, 20], strides = [1, 1]} : vector<8x128xf32> to vector<8x20xf32>
    %c0_30 = arith.constant 0 : index
    %c0_31 = arith.constant 0 : index
    %47 = vector.load %arg13[%c0_30, %c0_31] : memref<8x20xf32, #tpu.memory_space<vmem>>, vector<8x20xf32>
    tpu.vector_store %arg13[%c0_30, %c0_31], %46 {strides = array<i32>} : memref<8x20xf32, #tpu.memory_space<vmem>>, vector<8x20xf32>,
    return
  }
  func.func @transform_0(%arg0: i32) -> (i32, i32) {
    %c0_i32 = arith.constant 0 : i32
    %c0_i32_0 = arith.constant 0 : i32
    return %arg0, %c0_i32 : i32, i32
  }
  func.func @transform_1(%arg0: i32) -> (i32, i32) {
    %c0_i32 = arith.constant 0 : i32
    %c0_i32_0 = arith.constant 0 : i32
    return %arg0, %c0_i32 : i32, i32
  }
  func.func @transform_2(%arg0: i32) -> (i32, i32) {
    %c0_i32 = arith.constant 0 : i32
    %c0_i32_0 = arith.constant 0 : i32
    %c0_i32_1 = arith.constant 0 : i32
    return %c0_i32, %c0_i32_0 : i32, i32
  }
  func.func @transform_3(%arg0: i32) -> (i32, i32) {
    %c0_i32 = arith.constant 0 : i32
    %c0_i32_0 = arith.constant 0 : i32
    %c0_i32_1 = arith.constant 0 : i32
    return %c0_i32, %c0_i32_0 : i32, i32
  }
  func.func @transform_4(%arg0: i32) -> (i32, i32) {
    %c0_i32 = arith.constant 0 : i32
    %c0_i32_0 = arith.constant 0 : i32
    %c0_i32_1 = arith.constant 0 : i32
    return %c0_i32, %c0_i32_0 : i32, i32
  }
  func.func @transform_5(%arg0: i32) -> (i32, i32) {
    %c0_i32 = arith.constant 0 : i32
    %c0_i32_0 = arith.constant 0 : i32
    %c0_i32_1 = arith.constant 0 : i32
    return %c0_i32, %c0_i32_0 : i32, i32
  }
  func.func @transform_6(%arg0: i32) -> (i32, i32) {
    %c0_i32 = arith.constant 0 : i32
    %c0_i32_0 = arith.constant 0 : i32
    %c0_i32_1 = arith.constant 0 : i32
    return %c0_i32, %c0_i32_0 : i32, i32
  }
  func.func @transform_7(%arg0: i32) -> (i32, i32) {
    %c0_i32 = arith.constant 0 : i32
    %c0_i32_0 = arith.constant 0 : i32
    %c0_i32_1 = arith.constant 0 : i32
    return %c0_i32, %c0_i32_0 : i32, i32
  }
  func.func @transform_8(%arg0: i32) -> (i32, i32) {
    %c0_i32 = arith.constant 0 : i32
    %c0_i32_0 = arith.constant 0 : i32
    %c0_i32_1 = arith.constant 0 : i32
    return %c0_i32, %c0_i32_0 : i32, i32
  }
  func.func @transform_9(%arg0: i32) -> (i32, i32) {
    %c0_i32 = arith.constant 0 : i32
    %c0_i32_0 = arith.constant 0 : i32
    %c0_i32_1 = arith.constant 0 : i32
    return %c0_i32, %c0_i32_0 : i32, i32
  }
  func.func @transform_10(%arg0: i32) -> (i32, i32) {
    %c0_i32 = arith.constant 0 : i32
    %c0_i32_0 = arith.constant 0 : i32
    return %arg0, %c0_i32 : i32, i32
  }
  func.func @transform_11(%arg0: i32) -> (i32, i32) {
    %c0_i32 = arith.constant 0 : i32
    %c0_i32_0 = arith.constant 0 : i32
    return %arg0, %c0_i32 : i32, i32
  }
  func.func @transform_12(%arg0: i32) -> (i32, i32) {
    %c0_i32 = arith.constant 0 : i32
    %c0_i32_0 = arith.constant 0 : i32
    return %arg0, %c0_i32 : i32, i32
  }
}

</mosaic_0001>

<llo_original>
// kernel: tpu_custom_call.1
$region0: #{tpu_custom_call.1}
  #allocation0 [shape = 'u32[]', space=smem, size = 0x4, offset = 0x4, fixed_abs, tag = 'smem constant byte address 0x4 - core index']
  #allocation1 [shape = 'u32[144,128]{1,0:T(1,128)}', space=vmem, size = 0x12000, scoped, tag = 'internal scratch']
  %s0 = inlined_call_operand.vmem [shape: f32[8,784], index: 0, kind: input, shape index: {}]
  %s1 = inlined_call_operand.vmem [shape: f32[8,128], index: 1, kind: input, shape index: {}]
  %s2 = inlined_call_operand.vmem [shape: bf16[784,512], index: 2, kind: input, shape index: {}]
  %s3 = inlined_call_operand.vmem [shape: bf16[1,512], index: 3, kind: input, shape index: {}]
  %s4 = inlined_call_operand.vmem [shape: bf16[512,256], index: 4, kind: input, shape index: {}]
  %s5 = inlined_call_operand.vmem [shape: f32[1,256], index: 5, kind: input, shape index: {}]
  %s6 = inlined_call_operand.vmem [shape: bf16[128,512], index: 6, kind: input, shape index: {}]
  %s7 = inlined_call_operand.vmem [shape: bf16[1,512], index: 7, kind: input, shape index: {}]
  %s8 = inlined_call_operand.vmem [shape: bf16[512,784], index: 8, kind: input, shape index: {}]
  %s9 = inlined_call_operand.vmem [shape: bf16[1,784], index: 9, kind: input, shape index: {}]
  %s10 = inlined_call_operand.hbm [shape: bf16[8,784], index: 10, kind: output, shape index: {0}]
  %s11 = inlined_call_operand.hbm [shape: f32[8,20], index: 11, kind: output, shape index: {1}]
  %s12 = inlined_call_operand.hbm [shape: f32[8,20], index: 12, kind: output, shape index: {2}]
  %13 = xla_tuple %s10, %s11, %s12
  %s14 = sld [smem:[#allocation0]]
  $region66: #{tpu_custom_call.1} parent=0
    _
  %s16 = ssub.s32 1, %s14
  %s17 = scalar_select 0, %s16, %s14
  $region1: #{tpu_custom_call.1} parent=0
    #allocation2 [shape = 'u8[14336]{0}', space=vmem, size = 0x3800, scoped, tag = 'output window, operand 0, single buffered']
    #allocation3 [shape = 's32[1]{0}', space=sflag, size = 0x4, scoped, tag = 'scoped memory for tpu_custom_call.1']
    #allocation4 [shape = 'u8[4096]{0}', space=vmem, size = 0x1000, scoped, tag = 'output window, operand 1, single buffered']
    #allocation5 [shape = 's32[1]{0}', space=sflag, size = 0x4, scoped, tag = 'scoped memory for tpu_custom_call.1']
    #allocation6 [shape = 'u8[4096]{0}', space=vmem, size = 0x1000, scoped, tag = 'output window, operand 2, single buffered']
    %18 = vsyncpa [#allocation3], 0
    %19 = vsyncpa [#allocation5], 0
    // Predicated region
    $region2: #{tpu_custom_call.1} parent=1 // pred_check
      _
    $region3: #{tpu_custom_call.1} parent=1 // pred_check_branch
      %21 = sbr.rel (0) target = $region5
    $region4: #{tpu_custom_call.1} parent=1 // pred_region
      _
    $region5: #{tpu_custom_call.1} parent=1 // pred_fallthru
      _
    // Predicated region
    $region6: #{tpu_custom_call.1} parent=1 // pred_check
      _
    $region7: #{tpu_custom_call.1} parent=1 // pred_check_branch
      %23 = sbr.rel (0) target = $region9
    $region8: #{tpu_custom_call.1} parent=1 // pred_region
      _
    $region9: #{tpu_custom_call.1} parent=1 // pred_fallthru
      _
    // Predicated region
    $region10: #{tpu_custom_call.1} parent=1 // pred_check
      _
    $region11: #{tpu_custom_call.1} parent=1 // pred_check_branch
      %25 = sbr.rel (0) target = $region13
    $region12: #{tpu_custom_call.1} parent=1 // pred_region
      _
    $region13: #{tpu_custom_call.1} parent=1 // pred_fallthru
      _
    // Predicated region
    $region14: #{tpu_custom_call.1} parent=1 // pred_check
      _
    $region15: #{tpu_custom_call.1} parent=1 // pred_check_branch
      %27 = sbr.rel (0) target = $region17
    $region16: #{tpu_custom_call.1} parent=1 // pred_region
      _
    $region17: #{tpu_custom_call.1} parent=1 // pred_fallthru
      _
    // Predicated region
    $region18: #{tpu_custom_call.1} parent=1 // pred_check
      _
    $region19: #{tpu_custom_call.1} parent=1 // pred_check_branch
      %29 = sbr.rel (0) target = $region21
    $region20: #{tpu_custom_call.1} parent=1 // pred_region
      _
    $region21: #{tpu_custom_call.1} parent=1 // pred_fallthru
      _
    // Predicated region
    $region22: #{tpu_custom_call.1} parent=1 // pred_check
      _
    $region23: #{tpu_custom_call.1} parent=1 // pred_check_branch
      %31 = sbr.rel (0) target = $region25
    $region24: #{tpu_custom_call.1} parent=1 // pred_region
      _
    $region25: #{tpu_custom_call.1} parent=1 // pred_fallthru
      _
    // Predicated region
    $region26: #{tpu_custom_call.1} parent=1 // pred_check
      _
    $region27: #{tpu_custom_call.1} parent=1 // pred_check_branch
      %33 = sbr.rel (0) target = $region29
    $region28: #{tpu_custom_call.1} parent=1 // pred_region
      _
    $region29: #{tpu_custom_call.1} parent=1 // pred_fallthru
      _
    // Predicated region
    $region30: #{tpu_custom_call.1} parent=1 // pred_check
      _
    $region31: #{tpu_custom_call.1} parent=1 // pred_check_branch
      %35 = sbr.rel (0) target = $region33
    $region32: #{tpu_custom_call.1} parent=1 // pred_region
      _
    $region33: #{tpu_custom_call.1} parent=1 // pred_fallthru
      _
    // Predicated region
    $region34: #{tpu_custom_call.1} parent=1 // pred_check
      _
    $region35: #{tpu_custom_call.1} parent=1 // pred_check_branch
      %37 = sbr.rel (0) target = $region37
    $region36: #{tpu_custom_call.1} parent=1 // pred_region
      _
    $region37: #{tpu_custom_call.1} parent=1 // pred_fallthru
      _
    // Predicated region
    $region38: #{tpu_custom_call.1} parent=1 // pred_check
      _
    $region39: #{tpu_custom_call.1} parent=1 // pred_check_branch
      %39 = sbr.rel (0) target = $region41
    $region40: #{tpu_custom_call.1} parent=1 // pred_region
      _
    $region41: #{tpu_custom_call.1} parent=1 // pred_fallthru
      _
    %v42 = vld [vmem:[%s0] sm:$0xff]
    %v43 = vld [vmem:[%s0 + $0x8] sm:$0xff]
    %v44 = vld [vmem:[%s0 + $0x10] sm:$0xff]
    %v45 = vld [vmem:[%s0 + $0x18] sm:$0xff]
    %v46 = vld [vmem:[%s0 + $0x20] sm:$0xff]
    %v47 = vld [vmem:[%s0 + $0x28] sm:$0xff]
    %v48 = vld [vmem:[%s0 + $0x30] sm:$0xff]
    %v49 = vpack.c.bf16 %v42, %v42
    %v50 = vpack.c.bf16 %v43, %v43
    %v51 = vpack.c.bf16 %v44, %v44
    %v52 = vpack.c.bf16 %v45, %v45
    %v53 = vpack.c.bf16 %v46, %v46
    %v54 = vpack.c.bf16 %v47, %v47
    %v55 = vpack.c.bf16 %v48, %v48
    %v56 = vld [vmem:[%s2] sm:$0xff]
    %v57 = vld [vmem:[%s2 + $0x8] sm:$0xff]
    %v58 = vld [vmem:[%s2 + $0x10] sm:$0xff]
    %v59 = vld [vmem:[%s2 + $0x18] sm:$0xff]
    %v60 = vld [vmem:[%s2 + $0x20] sm:$0xff]
    %v61 = vld [vmem:[%s2 + $0x28] sm:$0xff]
    %v62 = vld [vmem:[%s2 + $0x30] sm:$0xff]
    %v63 = vld [vmem:[%s2 + $0x38] sm:$0xff]
    %v64 = vld [vmem:[%s2 + $0x40] sm:$0xff]
    %v65 = vld [vmem:[%s2 + $0x48] sm:$0xff]
    %v66 = vld [vmem:[%s2 + $0x50] sm:$0xff]
    %v67 = vld [vmem:[%s2 + $0x58] sm:$0xff]
    %v68 = vld [vmem:[%s2 + $0x60] sm:$0xff]
    %v69 = vld [vmem:[%s2 + $0x68] sm:$0xff]
    %v70 = vld [vmem:[%s2 + $0x70] sm:$0xff]
    %v71 = vld [vmem:[%s2 + $0x78] sm:$0xff]
    %v72 = vld [vmem:[%s2 + $0x80] sm:$0xff]
    %v73 = vld [vmem:[%s2 + $0x88] sm:$0xff]
    %v74 = vld [vmem:[%s2 + $0x90] sm:$0xff]
    %v75 = vld [vmem:[%s2 + $0x98] sm:$0xff]
    %v76 = vld [vmem:[%s2 + $0xa0] sm:$0xff]
    %v77 = vld [vmem:[%s2 + $0xa8] sm:$0xff]
    %v78 = vld [vmem:[%s2 + $0xb0] sm:$0xff]
    %v79 = vld [vmem:[%s2 + $0xb8] sm:$0xff]
    %v80 = vld [vmem:[%s2 + $0xc0] sm:$0xff]
    %v81 = vld [vmem:[%s2 + $0xc8] sm:$0xff]
    %v82 = vld [vmem:[%s2 + $0xd0] sm:$0xff]
    %v83 = vld [vmem:[%s2 + $0xd8] sm:$0xff]
    %v84 = vld [vmem:[%s2 + $0xe0] sm:$0xff]
    %v85 = vld [vmem:[%s2 + $0xe8] sm:$0xff]
    %v86 = vld [vmem:[%s2 + $0xf0] sm:$0xff]
    %v87 = vld [vmem:[%s2 + $0xf8] sm:$0xff]
    %v88 = vld [vmem:[%s2 + $0x100] sm:$0xff]
    %v89 = vld [vmem:[%s2 + $0x108] sm:$0xff]
    %v90 = vld [vmem:[%s2 + $0x110] sm:$0xff]
    %v91 = vld [vmem:[%s2 + $0x118] sm:$0xff]
    %v92 = vld [vmem:[%s2 + $0x120] sm:$0xff]
    %v93 = vld [vmem:[%s2 + $0x128] sm:$0xff]
    %v94 = vld [vmem:[%s2 + $0x130] sm:$0xff]
    %v95 = vld [vmem:[%s2 + $0x138] sm:$0xff]
    %v96 = vld [vmem:[%s2 + $0x140] sm:$0xff]
    %v97 = vld [vmem:[%s2 + $0x148] sm:$0xff]
    %v98 = vld [vmem:[%s2 + $0x150] sm:$0xff]
    %v99 = vld [vmem:[%s2 + $0x158] sm:$0xff]
    %v100 = vld [vmem:[%s2 + $0x160] sm:$0xff]
    %v101 = vld [vmem:[%s2 + $0x168] sm:$0xff]
    %v102 = vld [vmem:[%s2 + $0x170] sm:$0xff]
    %v103 = vld [vmem:[%s2 + $0x178] sm:$0xff]
    %v104 = vld [vmem:[%s2 + $0x180] sm:$0xff]
    %v105 = vld [vmem:[%s2 + $0x188] sm:$0xff]
    %v106 = vld [vmem:[%s2 + $0x190] sm:$0xff]
    %v107 = vld [vmem:[%s2 + $0x198] sm:$0xff]
    %v108 = vld [vmem:[%s2 + $0x1a0] sm:$0xff]
    %v109 = vld [vmem:[%s2 + $0x1a8] sm:$0xff]
    %v110 = vld [vmem:[%s2 + $0x1b0] sm:$0xff]
    %v111 = vld [vmem:[%s2 + $0x1b8] sm:$0xff]
    %v112 = vld [vmem:[%s2 + $0x1c0] sm:$0xff]
    %v113 = vld [vmem:[%s2 + $0x1c8] sm:$0xff]
    %v114 = vld [vmem:[%s2 + $0x1d0] sm:$0xff]
    %v115 = vld [vmem:[%s2 + $0x1d8] sm:$0xff]
    %v116 = vld [vmem:[%s2 + $0x1e0] sm:$0xff]
    %v117 = vld [vmem:[%s2 + $0x1e8] sm:$0xff]
    %v118 = vld [vmem:[%s2 + $0x1f0] sm:$0xff]
    %v119 = vld [vmem:[%s2 + $0x1f8] sm:$0xff]
    %v120 = vld [vmem:[%s2 + $0x200] sm:$0xff]
    %v121 = vld [vmem:[%s2 + $0x208] sm:$0xff]
    %v122 = vld [vmem:[%s2 + $0x210] sm:$0xff]
    %v123 = vld [vmem:[%s2 + $0x218] sm:$0xff]
    %v124 = vld [vmem:[%s2 + $0x220] sm:$0xff]
    %v125 = vld [vmem:[%s2 + $0x228] sm:$0xff]
    %v126 = vld [vmem:[%s2 + $0x230] sm:$0xff]
    %v127 = vld [vmem:[%s2 + $0x238] sm:$0xff]
    %v128 = vld [vmem:[%s2 + $0x240] sm:$0xff]
    %v129 = vld [vmem:[%s2 + $0x248] sm:$0xff]
    %v130 = vld [vmem:[%s2 + $0x250] sm:$0xff]
    %v131 = vld [vmem:[%s2 + $0x258] sm:$0xff]
    %v132 = vld [vmem:[%s2 + $0x260] sm:$0xff]
    %v133 = vld [vmem:[%s2 + $0x268] sm:$0xff]
    %v134 = vld [vmem:[%s2 + $0x270] sm:$0xff]
    %v135 = vld [vmem:[%s2 + $0x278] sm:$0xff]
    %v136 = vld [vmem:[%s2 + $0x280] sm:$0xff]
    %v137 = vld [vmem:[%s2 + $0x288] sm:$0xff]
    %v138 = vld [vmem:[%s2 + $0x290] sm:$0xff]
    %v139 = vld [vmem:[%s2 + $0x298] sm:$0xff]
    %v140 = vld [vmem:[%s2 + $0x2a0] sm:$0xff]
    %v141 = vld [vmem:[%s2 + $0x2a8] sm:$0xff]
    %v142 = vld [vmem:[%s2 + $0x2b0] sm:$0xff]
    %v143 = vld [vmem:[%s2 + $0x2b8] sm:$0xff]
    %v144 = vld [vmem:[%s2 + $0x2c0] sm:$0xff]
    %v145 = vld [vmem:[%s2 + $0x2c8] sm:$0xff]
    %v146 = vld [vmem:[%s2 + $0x2d0] sm:$0xff]
    %v147 = vld [vmem:[%s2 + $0x2d8] sm:$0xff]
    %v148 = vld [vmem:[%s2 + $0x2e0] sm:$0xff]
    %v149 = vld [vmem:[%s2 + $0x2e8] sm:$0xff]
    %v150 = vld [vmem:[%s2 + $0x2f0] sm:$0xff]
    %v151 = vld [vmem:[%s2 + $0x2f8] sm:$0xff]
    %v152 = vld [vmem:[%s2 + $0x300] sm:$0xff]
    %v153 = vld [vmem:[%s2 + $0x308] sm:$0xff]
    %v154 = vld [vmem:[%s2 + $0x310] sm:$0xff]
    %v155 = vld [vmem:[%s2 + $0x318] sm:$0xff]
    %v156 = vld [vmem:[%s2 + $0x320] sm:$0xff]
    %v157 = vld [vmem:[%s2 + $0x328] sm:$0xff]
    %v158 = vld [vmem:[%s2 + $0x330] sm:$0xff]
    %v159 = vld [vmem:[%s2 + $0x338] sm:$0xff]
    %v160 = vld [vmem:[%s2 + $0x340] sm:$0xff]
    %v161 = vld [vmem:[%s2 + $0x348] sm:$0xff]
    %v162 = vld [vmem:[%s2 + $0x350] sm:$0xff]
    %v163 = vld [vmem:[%s2 + $0x358] sm:$0xff]
    %v164 = vld [vmem:[%s2 + $0x360] sm:$0xff]
    %v165 = vld [vmem:[%s2 + $0x368] sm:$0xff]
    %v166 = vld [vmem:[%s2 + $0x370] sm:$0xff]
    %v167 = vld [vmem:[%s2 + $0x378] sm:$0xff]
    %v168 = vld [vmem:[%s2 + $0x380] sm:$0xff]
    %v169 = vld [vmem:[%s2 + $0x388] sm:$0xff]
    %v170 = vld [vmem:[%s2 + $0x390] sm:$0xff]
    %v171 = vld [vmem:[%s2 + $0x398] sm:$0xff]
    %v172 = vld [vmem:[%s2 + $0x3a0] sm:$0xff]
    %v173 = vld [vmem:[%s2 + $0x3a8] sm:$0xff]
    %v174 = vld [vmem:[%s2 + $0x3b0] sm:$0xff]
    %v175 = vld [vmem:[%s2 + $0x3b8] sm:$0xff]
    %v176 = vld [vmem:[%s2 + $0x3c0] sm:$0xff]
    %v177 = vld [vmem:[%s2 + $0x3c8] sm:$0xff]
    %v178 = vld [vmem:[%s2 + $0x3d0] sm:$0xff]
    %v179 = vld [vmem:[%s2 + $0x3d8] sm:$0xff]
    %v180 = vld [vmem:[%s2 + $0x3e0] sm:$0xff]
    %v181 = vld [vmem:[%s2 + $0x3e8] sm:$0xff]
    %v182 = vld [vmem:[%s2 + $0x3f0] sm:$0xff]
    %v183 = vld [vmem:[%s2 + $0x3f8] sm:$0xff]
    %v184 = vld [vmem:[%s2 + $0x400] sm:$0xff]
    %v185 = vld [vmem:[%s2 + $0x408] sm:$0xff]
    %v186 = vld [vmem:[%s2 + $0x410] sm:$0xff]
    %v187 = vld [vmem:[%s2 + $0x418] sm:$0xff]
    %v188 = vld [vmem:[%s2 + $0x420] sm:$0xff]
    %v189 = vld [vmem:[%s2 + $0x428] sm:$0xff]
    %v190 = vld [vmem:[%s2 + $0x430] sm:$0xff]
    %v191 = vld [vmem:[%s2 + $0x438] sm:$0xff]
    %v192 = vld [vmem:[%s2 + $0x440] sm:$0xff]
    %v193 = vld [vmem:[%s2 + $0x448] sm:$0xff]
    %v194 = vld [vmem:[%s2 + $0x450] sm:$0xff]
    %v195 = vld [vmem:[%s2 + $0x458] sm:$0xff]
    %v196 = vld [vmem:[%s2 + $0x460] sm:$0xff]
    %v197 = vld [vmem:[%s2 + $0x468] sm:$0xff]
    %v198 = vld [vmem:[%s2 + $0x470] sm:$0xff]
    %v199 = vld [vmem:[%s2 + $0x478] sm:$0xff]
    %v200 = vld [vmem:[%s2 + $0x480] sm:$0xff]
    %v201 = vld [vmem:[%s2 + $0x488] sm:$0xff]
    %v202 = vld [vmem:[%s2 + $0x490] sm:$0xff]
    %v203 = vld [vmem:[%s2 + $0x498] sm:$0xff]
    %v204 = vld [vmem:[%s2 + $0x4a0] sm:$0xff]
    %v205 = vld [vmem:[%s2 + $0x4a8] sm:$0xff]
    %v206 = vld [vmem:[%s2 + $0x4b0] sm:$0xff]
    %v207 = vld [vmem:[%s2 + $0x4b8] sm:$0xff]
    %v208 = vld [vmem:[%s2 + $0x4c0] sm:$0xff]
    %v209 = vld [vmem:[%s2 + $0x4c8] sm:$0xff]
    %v210 = vld [vmem:[%s2 + $0x4d0] sm:$0xff]
    %v211 = vld [vmem:[%s2 + $0x4d8] sm:$0xff]
    %v212 = vld [vmem:[%s2 + $0x4e0] sm:$0xff]
    %v213 = vld [vmem:[%s2 + $0x4e8] sm:$0xff]
    %v214 = vld [vmem:[%s2 + $0x4f0] sm:$0xff]
    %v215 = vld [vmem:[%s2 + $0x4f8] sm:$0xff]
    %v216 = vld [vmem:[%s2 + $0x500] sm:$0xff]
    %v217 = vld [vmem:[%s2 + $0x508] sm:$0xff]
    %v218 = vld [vmem:[%s2 + $0x510] sm:$0xff]
    %v219 = vld [vmem:[%s2 + $0x518] sm:$0xff]
    %v220 = vld [vmem:[%s2 + $0x520] sm:$0xff]
    %v221 = vld [vmem:[%s2 + $0x528] sm:$0xff]
    %v222 = vld [vmem:[%s2 + $0x530] sm:$0xff]
    %v223 = vld [vmem:[%s2 + $0x538] sm:$0xff]
    %v224 = vld [vmem:[%s2 + $0x540] sm:$0xff]
    %v225 = vld [vmem:[%s2 + $0x548] sm:$0xff]
    %v226 = vld [vmem:[%s2 + $0x550] sm:$0xff]
    %v227 = vld [vmem:[%s2 + $0x558] sm:$0xff]
    %v228 = vld [vmem:[%s2 + $0x560] sm:$0xff]
    %v229 = vld [vmem:[%s2 + $0x568] sm:$0xff]
    %v230 = vld [vmem:[%s2 + $0x570] sm:$0xff]
    %v231 = vld [vmem:[%s2 + $0x578] sm:$0xff]
    %v232 = vld [vmem:[%s2 + $0x580] sm:$0xff]
    %v233 = vld [vmem:[%s2 + $0x588] sm:$0xff]
    %v234 = vld [vmem:[%s2 + $0x590] sm:$0xff]
    %v235 = vld [vmem:[%s2 + $0x598] sm:$0xff]
    %v236 = vld [vmem:[%s2 + $0x5a0] sm:$0xff]
    %v237 = vld [vmem:[%s2 + $0x5a8] sm:$0xff]
    %v238 = vld [vmem:[%s2 + $0x5b0] sm:$0xff]
    %v239 = vld [vmem:[%s2 + $0x5b8] sm:$0xff]
    %v240 = vld [vmem:[%s2 + $0x5c0] sm:$0xff]
    %v241 = vld [vmem:[%s2 + $0x5c8] sm:$0xff]
    %v242 = vld [vmem:[%s2 + $0x5d0] sm:$0xff]
    %v243 = vld [vmem:[%s2 + $0x5d8] sm:$0xff]
    %v244 = vld [vmem:[%s2 + $0x5e0] sm:$0xff]
    %v245 = vld [vmem:[%s2 + $0x5e8] sm:$0xff]
    %v246 = vld [vmem:[%s2 + $0x5f0] sm:$0xff]
    %v247 = vld [vmem:[%s2 + $0x5f8] sm:$0xff]
    %v248 = vld [vmem:[%s2 + $0x600] sm:$0xff]
    %v249 = vld [vmem:[%s2 + $0x608] sm:$0xff]
    %v250 = vld [vmem:[%s2 + $0x610] sm:$0xff]
    %v251 = vld [vmem:[%s2 + $0x618] sm:$0xff]
    %v448 = vunpack.c.l.b16 %v56
    %v449 = vunpack.c.h.b16 %v56
    %v450 = vunpack.c.l.b16 %v57
    %v451 = vunpack.c.h.b16 %v57
    %v452 = vunpack.c.l.b16 %v58
    %v453 = vunpack.c.h.b16 %v58
    %v454 = vunpack.c.l.b16 %v59
    %v455 = vunpack.c.h.b16 %v59
    %v456 = vunpack.c.l.b16 %v60
    %v457 = vunpack.c.h.b16 %v60
    %v458 = vunpack.c.l.b16 %v61
    %v459 = vunpack.c.h.b16 %v61
    %v460 = vunpack.c.l.b16 %v62
    %v461 = vunpack.c.h.b16 %v62
    %v462 = vunpack.c.l.b16 %v63
    %v463 = vunpack.c.h.b16 %v63
    %v464 = vunpack.c.l.b16 %v64
    %v465 = vunpack.c.h.b16 %v64
    %v466 = vunpack.c.l.b16 %v65
    %v467 = vunpack.c.h.b16 %v65
    %v468 = vunpack.c.l.b16 %v66
    %v469 = vunpack.c.h.b16 %v66
    %v470 = vunpack.c.l.b16 %v67
    %v471 = vunpack.c.h.b16 %v67
    %v472 = vunpack.c.l.b16 %v68
    %v473 = vunpack.c.h.b16 %v68
    %v474 = vunpack.c.l.b16 %v69
    %v475 = vunpack.c.h.b16 %v69
    %v476 = vunpack.c.l.b16 %v70
    %v477 = vunpack.c.h.b16 %v70
    %v478 = vunpack.c.l.b16 %v71
    %v479 = vunpack.c.h.b16 %v71
    %v480 = vunpack.c.l.b16 %v72
    %v481 = vunpack.c.h.b16 %v72
    %v482 = vunpack.c.l.b16 %v73
    %v483 = vunpack.c.h.b16 %v73
    %v484 = vunpack.c.l.b16 %v74
    %v485 = vunpack.c.h.b16 %v74
    %v486 = vunpack.c.l.b16 %v75
    %v487 = vunpack.c.h.b16 %v75
    %v488 = vunpack.c.l.b16 %v76
    %v489 = vunpack.c.h.b16 %v76
    %v490 = vunpack.c.l.b16 %v77
    %v491 = vunpack.c.h.b16 %v77
    %v492 = vunpack.c.l.b16 %v78
    %v493 = vunpack.c.h.b16 %v78
    %v494 = vunpack.c.l.b16 %v79
    %v495 = vunpack.c.h.b16 %v79
    %v496 = vunpack.c.l.b16 %v80
    %v497 = vunpack.c.h.b16 %v80
    %v498 = vunpack.c.l.b16 %v81
    %v499 = vunpack.c.h.b16 %v81
    %v500 = vunpack.c.l.b16 %v82
    %v501 = vunpack.c.h.b16 %v82
    %v502 = vunpack.c.l.b16 %v83
    %v503 = vunpack.c.h.b16 %v83
    %v504 = vunpack.c.l.b16 %v84
    %v505 = vunpack.c.h.b16 %v84
    %v506 = vunpack.c.l.b16 %v85
    %v507 = vunpack.c.h.b16 %v85
    %v508 = vunpack.c.l.b16 %v86
    %v509 = vunpack.c.h.b16 %v86
    %v510 = vunpack.c.l.b16 %v87
    %v511 = vunpack.c.h.b16 %v87
    %v512 = vunpack.c.l.b16 %v88
    %v513 = vunpack.c.h.b16 %v88
    %v514 = vunpack.c.l.b16 %v89
    %v515 = vunpack.c.h.b16 %v89
    %v516 = vunpack.c.l.b16 %v90
    %v517 = vunpack.c.h.b16 %v90
    %v518 = vunpack.c.l.b16 %v91
    %v519 = vunpack.c.h.b16 %v91
    %v520 = vunpack.c.l.b16 %v92
    %v521 = vunpack.c.h.b16 %v92
    %v522 = vunpack.c.l.b16 %v93
    %v523 = vunpack.c.h.b16 %v93
    %v524 = vunpack.c.l.b16 %v94
    %v525 = vunpack.c.h.b16 %v94
    %v526 = vunpack.c.l.b16 %v95
    %v527 = vunpack.c.h.b16 %v95
    %v528 = vunpack.c.l.b16 %v96
    %v529 = vunpack.c.h.b16 %v96
    %v530 = vunpack.c.l.b16 %v97
    %v531 = vunpack.c.h.b16 %v97
    %v532 = vunpack.c.l.b16 %v98
    %v533 = vunpack.c.h.b16 %v98
    %v534 = vunpack.c.l.b16 %v99
    %v535 = vunpack.c.h.b16 %v99
    %v536 = vunpack.c.l.b16 %v100
    %v537 = vunpack.c.h.b16 %v100
    %v538 = vunpack.c.l.b16 %v101
    %v539 = vunpack.c.h.b16 %v101
    %v540 = vunpack.c.l.b16 %v102
    %v541 = vunpack.c.h.b16 %v102
    %v542 = vunpack.c.l.b16 %v103
    %v543 = vunpack.c.h.b16 %v103
    %v544 = vunpack.c.l.b16 %v104
    %v545 = vunpack.c.h.b16 %v104
    %v546 = vunpack.c.l.b16 %v105
    %v547 = vunpack.c.h.b16 %v105
    %v548 = vunpack.c.l.b16 %v106
    %v549 = vunpack.c.h.b16 %v106
    %v550 = vunpack.c.l.b16 %v107
    %v551 = vunpack.c.h.b16 %v107
    %v552 = vunpack.c.l.b16 %v108
    %v553 = vunpack.c.h.b16 %v108
    %v554 = vunpack.c.l.b16 %v109
    %v555 = vunpack.c.h.b16 %v109
    %v556 = vunpack.c.l.b16 %v110
    %v557 = vunpack.c.h.b16 %v110
    %v558 = vunpack.c.l.b16 %v111
    %v559 = vunpack.c.h.b16 %v111
    %v560 = vunpack.c.l.b16 %v112
    %v561 = vunpack.c.h.b16 %v112
    %v562 = vunpack.c.l.b16 %v113
    %v563 = vunpack.c.h.b16 %v113
    %v564 = vunpack.c.l.b16 %v114
    %v565 = vunpack.c.h.b16 %v114
    %v566 = vunpack.c.l.b16 %v115
    %v567 = vunpack.c.h.b16 %v115
    %v568 = vunpack.c.l.b16 %v116
    %v569 = vunpack.c.h.b16 %v116
    %v570 = vunpack.c.l.b16 %v117
    %v571 = vunpack.c.h.b16 %v117
    %v572 = vunpack.c.l.b16 %v118
    %v573 = vunpack.c.h.b16 %v118
    %v574 = vunpack.c.l.b16 %v119
    %v575 = vunpack.c.h.b16 %v119
    %v576 = vunpack.c.l.b16 %v120
    %v577 = vunpack.c.h.b16 %v120
    %v578 = vunpack.c.l.b16 %v121
    %v579 = vunpack.c.h.b16 %v121
    %v580 = vunpack.c.l.b16 %v122
    %v581 = vunpack.c.h.b16 %v122
    %v582 = vunpack.c.l.b16 %v123
    %v583 = vunpack.c.h.b16 %v123
    %v584 = vunpack.c.l.b16 %v124
    %v585 = vunpack.c.h.b16 %v124
    %v586 = vunpack.c.l.b16 %v125
    %v587 = vunpack.c.h.b16 %v125
    %v588 = vunpack.c.l.b16 %v126
    %v589 = vunpack.c.h.b16 %v126
    %v590 = vunpack.c.l.b16 %v127
    %v591 = vunpack.c.h.b16 %v127
    %v592 = vunpack.c.l.b16 %v128
    %v593 = vunpack.c.h.b16 %v128
    %v594 = vunpack.c.l.b16 %v129
    %v595 = vunpack.c.h.b16 %v129
    %v596 = vunpack.c.l.b16 %v130
    %v597 = vunpack.c.h.b16 %v130
    %v598 = vunpack.c.l.b16 %v131
    %v599 = vunpack.c.h.b16 %v131
    %v600 = vunpack.c.l.b16 %v132
    %v601 = vunpack.c.h.b16 %v132
    %v602 = vunpack.c.l.b16 %v133
    %v603 = vunpack.c.h.b16 %v133
    %v604 = vunpack.c.l.b16 %v134
    %v605 = vunpack.c.h.b16 %v134
    %v606 = vunpack.c.l.b16 %v135
    %v607 = vunpack.c.h.b16 %v135
    %v608 = vunpack.c.l.b16 %v136
    %v609 = vunpack.c.h.b16 %v136
    %v610 = vunpack.c.l.b16 %v137
    %v611 = vunpack.c.h.b16 %v137
    %v612 = vunpack.c.l.b16 %v138
    %v613 = vunpack.c.h.b16 %v138
    %v614 = vunpack.c.l.b16 %v139
    %v615 = vunpack.c.h.b16 %v139
    %v616 = vunpack.c.l.b16 %v140
    %v617 = vunpack.c.h.b16 %v140
    %v618 = vunpack.c.l.b16 %v141
    %v619 = vunpack.c.h.b16 %v141
    %v620 = vunpack.c.l.b16 %v142
    %v621 = vunpack.c.h.b16 %v142
    %v622 = vunpack.c.l.b16 %v143
    %v623 = vunpack.c.h.b16 %v143
    %v624 = vunpack.c.l.b16 %v144
    %v625 = vunpack.c.h.b16 %v144
    %v626 = vunpack.c.l.b16 %v145
    %v627 = vunpack.c.h.b16 %v145
    %v628 = vunpack.c.l.b16 %v146
    %v629 = vunpack.c.h.b16 %v146
    %v630 = vunpack.c.l.b16 %v147
    %v631 = vunpack.c.h.b16 %v147
    %v632 = vunpack.c.l.b16 %v148
    %v633 = vunpack.c.h.b16 %v148
    %v634 = vunpack.c.l.b16 %v149
    %v635 = vunpack.c.h.b16 %v149
    %v636 = vunpack.c.l.b16 %v150
    %v637 = vunpack.c.h.b16 %v150
    %v638 = vunpack.c.l.b16 %v151
    %v639 = vunpack.c.h.b16 %v151
    %v640 = vunpack.c.l.b16 %v152
    %v641 = vunpack.c.h.b16 %v152
    %v642 = vunpack.c.l.b16 %v153
    %v643 = vunpack.c.h.b16 %v153
    %v644 = vunpack.c.l.b16 %v154
    %v645 = vunpack.c.h.b16 %v154
    %v646 = vunpack.c.l.b16 %v155
    %v647 = vunpack.c.h.b16 %v155
    %v648 = vunpack.c.l.b16 %v156
    %v649 = vunpack.c.h.b16 %v156
    %v650 = vunpack.c.l.b16 %v157
    %v651 = vunpack.c.h.b16 %v157
    %v652 = vunpack.c.l.b16 %v158
    %v653 = vunpack.c.h.b16 %v158
    %v654 = vunpack.c.l.b16 %v159
    %v655 = vunpack.c.h.b16 %v159
    %v656 = vunpack.c.l.b16 %v160
    %v657 = vunpack.c.h.b16 %v160
    %v658 = vunpack.c.l.b16 %v161
    %v659 = vunpack.c.h.b16 %v161
    %v660 = vunpack.c.l.b16 %v162
    %v661 = vunpack.c.h.b16 %v162
    %v662 = vunpack.c.l.b16 %v163
    %v663 = vunpack.c.h.b16 %v163
    %v664 = vunpack.c.l.b16 %v164
    %v665 = vunpack.c.h.b16 %v164
    %v666 = vunpack.c.l.b16 %v165
    %v667 = vunpack.c.h.b16 %v165
    %v668 = vunpack.c.l.b16 %v166
    %v669 = vunpack.c.h.b16 %v166
    %v670 = vunpack.c.l.b16 %v167
    %v671 = vunpack.c.h.b16 %v167
    %v672 = vunpack.c.l.b16 %v168
    %v673 = vunpack.c.h.b16 %v168
    %v674 = vunpack.c.l.b16 %v169
    %v675 = vunpack.c.h.b16 %v169
    %v676 = vunpack.c.l.b16 %v170
    %v677 = vunpack.c.h.b16 %v170
    %v678 = vunpack.c.l.b16 %v171
    %v679 = vunpack.c.h.b16 %v171
    %v680 = vunpack.c.l.b16 %v172
    %v681 = vunpack.c.h.b16 %v172
    %v682 = vunpack.c.l.b16 %v173
    %v683 = vunpack.c.h.b16 %v173
    %v684 = vunpack.c.l.b16 %v174
    %v685 = vunpack.c.h.b16 %v174
    %v686 = vunpack.c.l.b16 %v175
    %v687 = vunpack.c.h.b16 %v175
    %v688 = vunpack.c.l.b16 %v176
    %v689 = vunpack.c.h.b16 %v176
    %v690 = vunpack.c.l.b16 %v177
    %v691 = vunpack.c.h.b16 %v177
    %v692 = vunpack.c.l.b16 %v178
    %v693 = vunpack.c.h.b16 %v178
    %v694 = vunpack.c.l.b16 %v179
    %v695 = vunpack.c.h.b16 %v179
    %v696 = vunpack.c.l.b16 %v180
    %v697 = vunpack.c.h.b16 %v180
    %v698 = vunpack.c.l.b16 %v181
    %v699 = vunpack.c.h.b16 %v181
    %v700 = vunpack.c.l.b16 %v182
    %v701 = vunpack.c.h.b16 %v182
    %v702 = vunpack.c.l.b16 %v183
    %v703 = vunpack.c.h.b16 %v183
    %v704 = vunpack.c.l.b16 %v184
    %v705 = vunpack.c.h.b16 %v184
    %v706 = vunpack.c.l.b16 %v185
    %v707 = vunpack.c.h.b16 %v185
    %v708 = vunpack.c.l.b16 %v186
    %v709 = vunpack.c.h.b16 %v186
    %v710 = vunpack.c.l.b16 %v187
    %v711 = vunpack.c.h.b16 %v187
    %v712 = vunpack.c.l.b16 %v188
    %v713 = vunpack.c.h.b16 %v188
    %v714 = vunpack.c.l.b16 %v189
    %v715 = vunpack.c.h.b16 %v189
    %v716 = vunpack.c.l.b16 %v190
    %v717 = vunpack.c.h.b16 %v190
    %v718 = vunpack.c.l.b16 %v191
    %v719 = vunpack.c.h.b16 %v191
    %v720 = vunpack.c.l.b16 %v192
    %v721 = vunpack.c.h.b16 %v192
    %v722 = vunpack.c.l.b16 %v193
    %v723 = vunpack.c.h.b16 %v193
    %v724 = vunpack.c.l.b16 %v194
    %v725 = vunpack.c.h.b16 %v194
    %v726 = vunpack.c.l.b16 %v195
    %v727 = vunpack.c.h.b16 %v195
    %v728 = vunpack.c.l.b16 %v196
    %v729 = vunpack.c.h.b16 %v196
    %v730 = vunpack.c.l.b16 %v197
    %v731 = vunpack.c.h.b16 %v197
    %v732 = vunpack.c.l.b16 %v198
    %v733 = vunpack.c.h.b16 %v198
    %v734 = vunpack.c.l.b16 %v199
    %v735 = vunpack.c.h.b16 %v199
    %v736 = vunpack.c.l.b16 %v200
    %v737 = vunpack.c.h.b16 %v200
    %v738 = vunpack.c.l.b16 %v201
    %v739 = vunpack.c.h.b16 %v201
    %v740 = vunpack.c.l.b16 %v202
    %v741 = vunpack.c.h.b16 %v202
    %v742 = vunpack.c.l.b16 %v203
    %v743 = vunpack.c.h.b16 %v203
    %v744 = vunpack.c.l.b16 %v204
    %v745 = vunpack.c.h.b16 %v204
    %v746 = vunpack.c.l.b16 %v205
    %v747 = vunpack.c.h.b16 %v205
    %v748 = vunpack.c.l.b16 %v206
    %v749 = vunpack.c.h.b16 %v206
    %v750 = vunpack.c.l.b16 %v207
    %v751 = vunpack.c.h.b16 %v207
    %v752 = vunpack.c.l.b16 %v208
    %v753 = vunpack.c.h.b16 %v208
    %v754 = vunpack.c.l.b16 %v209
    %v755 = vunpack.c.h.b16 %v209
    %v756 = vunpack.c.l.b16 %v210
    %v757 = vunpack.c.h.b16 %v210
    %v758 = vunpack.c.l.b16 %v211
    %v759 = vunpack.c.h.b16 %v211
    %v760 = vunpack.c.l.b16 %v212
    %v761 = vunpack.c.h.b16 %v212
    %v762 = vunpack.c.l.b16 %v213
    %v763 = vunpack.c.h.b16 %v213
    %v764 = vunpack.c.l.b16 %v214
    %v765 = vunpack.c.h.b16 %v214
    %v766 = vunpack.c.l.b16 %v215
    %v767 = vunpack.c.h.b16 %v215
    %v768 = vunpack.c.l.b16 %v216
    %v769 = vunpack.c.h.b16 %v216
    %v770 = vunpack.c.l.b16 %v217
    %v771 = vunpack.c.h.b16 %v217
    %v772 = vunpack.c.l.b16 %v218
    %v773 = vunpack.c.h.b16 %v218
    %v774 = vunpack.c.l.b16 %v219
    %v775 = vunpack.c.h.b16 %v219
    %v776 = vunpack.c.l.b16 %v220
    %v777 = vunpack.c.h.b16 %v220
    %v778 = vunpack.c.l.b16 %v221
    %v779 = vunpack.c.h.b16 %v221
    %v780 = vunpack.c.l.b16 %v222
    %v781 = vunpack.c.h.b16 %v222
    %v782 = vunpack.c.l.b16 %v223
    %v783 = vunpack.c.h.b16 %v223
    %v784 = vunpack.c.l.b16 %v224
    %v785 = vunpack.c.h.b16 %v224
    %v786 = vunpack.c.l.b16 %v225
    %v787 = vunpack.c.h.b16 %v225
    %v788 = vunpack.c.l.b16 %v226
    %v789 = vunpack.c.h.b16 %v226
    %v790 = vunpack.c.l.b16 %v227
    %v791 = vunpack.c.h.b16 %v227
    %v792 = vunpack.c.l.b16 %v228
    %v793 = vunpack.c.h.b16 %v228
    %v794 = vunpack.c.l.b16 %v229
    %v795 = vunpack.c.h.b16 %v229
    %v796 = vunpack.c.l.b16 %v230
    %v797 = vunpack.c.h.b16 %v230
    %v798 = vunpack.c.l.b16 %v231
    %v799 = vunpack.c.h.b16 %v231
    %v800 = vunpack.c.l.b16 %v232
    %v801 = vunpack.c.h.b16 %v232
    %v802 = vunpack.c.l.b16 %v233
    %v803 = vunpack.c.h.b16 %v233
    %v804 = vunpack.c.l.b16 %v234
    %v805 = vunpack.c.h.b16 %v234
    %v806 = vunpack.c.l.b16 %v235
    %v807 = vunpack.c.h.b16 %v235
    %v808 = vunpack.c.l.b16 %v236
    %v809 = vunpack.c.h.b16 %v236
    %v810 = vunpack.c.l.b16 %v237
    %v811 = vunpack.c.h.b16 %v237
    %v812 = vunpack.c.l.b16 %v238
    %v813 = vunpack.c.h.b16 %v238
    %v814 = vunpack.c.l.b16 %v239
    %v815 = vunpack.c.h.b16 %v239
    %v816 = vunpack.c.l.b16 %v240
    %v817 = vunpack.c.h.b16 %v240
    %v818 = vunpack.c.l.b16 %v241
    %v819 = vunpack.c.h.b16 %v241
    %v820 = vunpack.c.l.b16 %v242
    %v821 = vunpack.c.h.b16 %v242
    %v822 = vunpack.c.l.b16 %v243
    %v823 = vunpack.c.h.b16 %v243
    %v824 = vunpack.c.l.b16 %v244
    %v825 = vunpack.c.h.b16 %v244
    %v826 = vunpack.c.l.b16 %v245
    %v827 = vunpack.c.h.b16 %v245
    %v828 = vunpack.c.l.b16 %v246
    %v829 = vunpack.c.h.b16 %v246
    %v830 = vunpack.c.l.b16 %v247
    %v831 = vunpack.c.h.b16 %v247
    %v832 = vunpack.c.l.b16 %v248
    %v833 = vunpack.c.h.b16 %v248
    %v834 = vunpack.c.l.b16 %v249
    %v835 = vunpack.c.h.b16 %v249
    %v836 = vunpack.c.l.b16 %v250
    %v837 = vunpack.c.h.b16 %v250
    %v838 = vunpack.c.l.b16 %v251
    %v839 = vunpack.c.h.b16 %v251
    %v840 = vpack.c.b16 %v452, %v448
    %v841 = vpack.c.b16 %v453, %v449
    %v842 = vpack.c.b16 %v454, %v450
    %v843 = vpack.c.b16 %v455, %v451
    %v844 = vpack.c.b16 %v460, %v456
    %v845 = vpack.c.b16 %v461, %v457
    %v846 = vpack.c.b16 %v462, %v458
    %v847 = vpack.c.b16 %v463, %v459
    %v848 = vpack.c.b16 %v468, %v464
    %v849 = vpack.c.b16 %v469, %v465
    %v850 = vpack.c.b16 %v470, %v466
    %v851 = vpack.c.b16 %v471, %v467
    %v852 = vpack.c.b16 %v476, %v472
    %v853 = vpack.c.b16 %v477, %v473
    %v854 = vpack.c.b16 %v478, %v474
    %v855 = vpack.c.b16 %v479, %v475
    %v856 = vpack.c.b16 %v484, %v480
    %v857 = vpack.c.b16 %v485, %v481
    %v858 = vpack.c.b16 %v486, %v482
    %v859 = vpack.c.b16 %v487, %v483
    %v860 = vpack.c.b16 %v492, %v488
    %v861 = vpack.c.b16 %v493, %v489
    %v862 = vpack.c.b16 %v494, %v490
    %v863 = vpack.c.b16 %v495, %v491
    %v864 = vpack.c.b16 %v500, %v496
    %v865 = vpack.c.b16 %v501, %v497
    %v866 = vpack.c.b16 %v502, %v498
    %v867 = vpack.c.b16 %v503, %v499
    %v868 = vpack.c.b16 %v508, %v504
    %v869 = vpack.c.b16 %v509, %v505
    %v870 = vpack.c.b16 %v510, %v506
    %v871 = vpack.c.b16 %v511, %v507
    %v872 = vpack.c.b16 %v516, %v512
    %v873 = vpack.c.b16 %v517, %v513
    %v874 = vpack.c.b16 %v518, %v514
    %v875 = vpack.c.b16 %v519, %v515
    %v876 = vpack.c.b16 %v524, %v520
    %v877 = vpack.c.b16 %v525, %v521
    %v878 = vpack.c.b16 %v526, %v522
    %v879 = vpack.c.b16 %v527, %v523
    %v880 = vpack.c.b16 %v532, %v528
    %v881 = vpack.c.b16 %v533, %v529
    %v882 = vpack.c.b16 %v534, %v530
    %v883 = vpack.c.b16 %v535, %v531
    %v884 = vpack.c.b16 %v540, %v536
    %v885 = vpack.c.b16 %v541, %v537
    %v886 = vpack.c.b16 %v542, %v538
    %v887 = vpack.c.b16 %v543, %v539
    %v888 = vpack.c.b16 %v548, %v544
    %v889 = vpack.c.b16 %v549, %v545
    %v890 = vpack.c.b16 %v550, %v546
    %v891 = vpack.c.b16 %v551, %v547
    %v892 = vpack.c.b16 %v556, %v552
    %v893 = vpack.c.b16 %v557, %v553
    %v894 = vpack.c.b16 %v558, %v554
    %v895 = vpack.c.b16 %v559, %v555
    %v896 = vpack.c.b16 %v564, %v560
    %v897 = vpack.c.b16 %v565, %v561
    %v898 = vpack.c.b16 %v566, %v562
    %v899 = vpack.c.b16 %v567, %v563
    %v900 = vpack.c.b16 %v572, %v568
    %v901 = vpack.c.b16 %v573, %v569
    %v902 = vpack.c.b16 %v574, %v570
    %v903 = vpack.c.b16 %v575, %v571
    %v904 = vpack.c.b16 %v580, %v576
    %v905 = vpack.c.b16 %v581, %v577
    %v906 = vpack.c.b16 %v582, %v578
    %v907 = vpack.c.b16 %v583, %v579
    %v908 = vpack.c.b16 %v588, %v584
    %v909 = vpack.c.b16 %v589, %v585
    %v910 = vpack.c.b16 %v590, %v586
    %v911 = vpack.c.b16 %v591, %v587
    %v912 = vpack.c.b16 %v596, %v592
    %v913 = vpack.c.b16 %v597, %v593
    %v914 = vpack.c.b16 %v598, %v594
    %v915 = vpack.c.b16 %v599, %v595
    %v916 = vpack.c.b16 %v604, %v600
    %v917 = vpack.c.b16 %v605, %v601
    %v918 = vpack.c.b16 %v606, %v602
    %v919 = vpack.c.b16 %v607, %v603
    %v920 = vpack.c.b16 %v612, %v608
    %v921 = vpack.c.b16 %v613, %v609
    %v922 = vpack.c.b16 %v614, %v610
    %v923 = vpack.c.b16 %v615, %v611
    %v924 = vpack.c.b16 %v620, %v616
    %v925 = vpack.c.b16 %v621, %v617
    %v926 = vpack.c.b16 %v622, %v618
    %v927 = vpack.c.b16 %v623, %v619
    %v928 = vpack.c.b16 %v628, %v624
    %v929 = vpack.c.b16 %v629, %v625
    %v930 = vpack.c.b16 %v630, %v626
    %v931 = vpack.c.b16 %v631, %v627
    %v932 = vpack.c.b16 %v636, %v632
    %v933 = vpack.c.b16 %v637, %v633
    %v934 = vpack.c.b16 %v638, %v634
    %v935 = vpack.c.b16 %v639, %v635
    %v936 = vpack.c.b16 %v644, %v640
    %v937 = vpack.c.b16 %v645, %v641
    %v938 = vpack.c.b16 %v646, %v642
    %v939 = vpack.c.b16 %v647, %v643
    %v940 = vpack.c.b16 %v652, %v648
    %v941 = vpack.c.b16 %v653, %v649
    %v942 = vpack.c.b16 %v654, %v650
    %v943 = vpack.c.b16 %v655, %v651
    %v944 = vpack.c.b16 %v660, %v656
    %v945 = vpack.c.b16 %v661, %v657
    %v946 = vpack.c.b16 %v662, %v658
    %v947 = vpack.c.b16 %v663, %v659
    %v948 = vpack.c.b16 %v668, %v664
    %v949 = vpack.c.b16 %v669, %v665
    %v950 = vpack.c.b16 %v670, %v666
    %v951 = vpack.c.b16 %v671, %v667
    %v952 = vpack.c.b16 %v676, %v672
    %v953 = vpack.c.b16 %v677, %v673
    %v954 = vpack.c.b16 %v678, %v674
    %v955 = vpack.c.b16 %v679, %v675
    %v956 = vpack.c.b16 %v684, %v680
    %v957 = vpack.c.b16 %v685, %v681
    %v958 = vpack.c.b16 %v686, %v682
    %v959 = vpack.c.b16 %v687, %v683
    %v960 = vpack.c.b16 %v692, %v688
    %v961 = vpack.c.b16 %v693, %v689
    %v962 = vpack.c.b16 %v694, %v690
    %v963 = vpack.c.b16 %v695, %v691
    %v964 = vpack.c.b16 %v700, %v696
    %v965 = vpack.c.b16 %v701, %v697
    %v966 = vpack.c.b16 %v702, %v698
    %v967 = vpack.c.b16 %v703, %v699
    %v968 = vpack.c.b16 %v708, %v704
    %v969 = vpack.c.b16 %v709, %v705
    %v970 = vpack.c.b16 %v710, %v706
    %v971 = vpack.c.b16 %v711, %v707
    %v972 = vpack.c.b16 %v716, %v712
    %v973 = vpack.c.b16 %v717, %v713
    %v974 = vpack.c.b16 %v718, %v714
    %v975 = vpack.c.b16 %v719, %v715
    %v976 = vpack.c.b16 %v724, %v720
    %v977 = vpack.c.b16 %v725, %v721
    %v978 = vpack.c.b16 %v726, %v722
    %v979 = vpack.c.b16 %v727, %v723
    %v980 = vpack.c.b16 %v732, %v728
    %v981 = vpack.c.b16 %v733, %v729
    %v982 = vpack.c.b16 %v734, %v730
    %v983 = vpack.c.b16 %v735, %v731
    %v984 = vpack.c.b16 %v740, %v736
    %v985 = vpack.c.b16 %v741, %v737
    %v986 = vpack.c.b16 %v742, %v738
    %v987 = vpack.c.b16 %v743, %v739
    %v988 = vpack.c.b16 %v748, %v744
    %v989 = vpack.c.b16 %v749, %v745
    %v990 = vpack.c.b16 %v750, %v746
    %v991 = vpack.c.b16 %v751, %v747
    %v992 = vpack.c.b16 %v756, %v752
    %v993 = vpack.c.b16 %v757, %v753
    %v994 = vpack.c.b16 %v758, %v754
    %v995 = vpack.c.b16 %v759, %v755
    %v996 = vpack.c.b16 %v764, %v760
    %v997 = vpack.c.b16 %v765, %v761
    %v998 = vpack.c.b16 %v766, %v762
    %v999 = vpack.c.b16 %v767, %v763
    %v1000 = vpack.c.b16 %v772, %v768
    %v1001 = vpack.c.b16 %v773, %v769
    %v1002 = vpack.c.b16 %v774, %v770
    %v1003 = vpack.c.b16 %v775, %v771
    %v1004 = vpack.c.b16 %v780, %v776
    %v1005 = vpack.c.b16 %v781, %v777
    %v1006 = vpack.c.b16 %v782, %v778
    %v1007 = vpack.c.b16 %v783, %v779
    %v1008 = vpack.c.b16 %v788, %v784
    %v1009 = vpack.c.b16 %v789, %v785
    %v1010 = vpack.c.b16 %v790, %v786
    %v1011 = vpack.c.b16 %v791, %v787
    %v1012 = vpack.c.b16 %v796, %v792
    %v1013 = vpack.c.b16 %v797, %v793
    %v1014 = vpack.c.b16 %v798, %v794
    %v1015 = vpack.c.b16 %v799, %v795
    %v1016 = vpack.c.b16 %v804, %v800
    %v1017 = vpack.c.b16 %v805, %v801
    %v1018 = vpack.c.b16 %v806, %v802
    %v1019 = vpack.c.b16 %v807, %v803
    %v1020 = vpack.c.b16 %v812, %v808
    %v1021 = vpack.c.b16 %v813, %v809
    %v1022 = vpack.c.b16 %v814, %v810
    %v1023 = vpack.c.b16 %v815, %v811
    %v1024 = vpack.c.b16 %v820, %v816
    %v1025 = vpack.c.b16 %v821, %v817
    %v1026 = vpack.c.b16 %v822, %v818
    %v1027 = vpack.c.b16 %v823, %v819
    %v1028 = vpack.c.b16 %v828, %v824
    %v1029 = vpack.c.b16 %v829, %v825
    %v1030 = vpack.c.b16 %v830, %v826
    %v1031 = vpack.c.b16 %v831, %v827
    %v1032 = vpack.c.b16 %v836, %v832
    %v1033 = vpack.c.b16 %v837, %v833
    %v1034 = vpack.c.b16 %v838, %v834
    %v1035 = vpack.c.b16 %v839, %v835
    %vm1232 = vcmask 130048
    %v1234 = vsel %vm1232, %v55, 0
    %1236 = vmatprep.subr.bf16.mxu0 %v841
    %1237 = vmatpush1.bf16.msra.mxu0 %v840
    %1238 = vmatprep.subr.bf16.mxu0 %v845
    %1239 = vmatpush1.bf16.msra.mxu0 %v844
    %1240 = vmatprep.subr.bf16.mxu0 %v849
    %1241 = vmatpush1.bf16.msra.mxu0 %v848
    %1242 = vmatprep.subr.bf16.mxu0 %v853
    %1243 = vmatpush1.bf16.msra.mxu0 %v852
    %1244 = vmatprep.subr.bf16.mxu0 %v857
    %1245 = vmatpush1.bf16.msra.mxu0 %v856
    %1246 = vmatprep.subr.bf16.mxu0 %v861
    %1247 = vmatpush1.bf16.msra.mxu0 %v860
    %1248 = vmatprep.subr.bf16.mxu0 %v865
    %1249 = vmatpush1.bf16.msra.mxu0 %v864
    %1250 = vmatprep.subr.bf16.mxu0 %v869
    %1251 = vmatpush1.bf16.msra.mxu0 %v868
    %1252 = vmatprep.subr.bf16.mxu0 %v873
    %1253 = vmatpush1.bf16.msra.mxu0 %v872
    %1254 = vmatprep.subr.bf16.mxu0 %v877
    %1255 = vmatpush1.bf16.msra.mxu0 %v876
    %1256 = vmatprep.subr.bf16.mxu0 %v881
    %1257 = vmatpush1.bf16.msra.mxu0 %v880
    %1258 = vmatprep.subr.bf16.mxu0 %v885
    %1259 = vmatpush1.bf16.msra.mxu0 %v884
    %1260 = vmatprep.subr.bf16.mxu0 %v889
    %1261 = vmatpush1.bf16.msra.mxu0 %v888
    %1262 = vmatprep.subr.bf16.mxu0 %v893
    %1263 = vmatpush1.bf16.msra.mxu0 %v892
    %1264 = vmatprep.subr.bf16.mxu0 %v897
    %1265 = vmatpush1.bf16.msra.mxu0 %v896
    %1266 = vmatprep.subr.bf16.mxu0 %v901
    %1267 = vmatpush1.bf16.msra.mxu0 %v900
    %1268 = vmatprep.mubr.bf16.mxu0 %v50
    %1269 = vmatmul.mubr.bf16.gmra.mrb[0].mxu0 %v49
    %v1270 = vpop.f32.mrb[0].mxu0
    %v1271 = vadd.f32 0.0, %v1270
    %v1272 = vpop.f32.mrb[0].mxu0
    %v1273 = vadd.f32 0.0, %v1272
    %v1274 = vpop.f32.mrb[0].mxu0
    %v1275 = vpop.f32.mrb[0].mxu0
    %1276 = vdwg.mxu0
    %1277 = vmatprep.subr.bf16.mxu0 %v905
    %1278 = vmatpush1.bf16.msra.mxu0 %v904
    %1279 = vmatprep.subr.bf16.mxu0 %v909
    %1280 = vmatpush1.bf16.msra.mxu0 %v908
    %1281 = vmatprep.subr.bf16.mxu0 %v913
    %1282 = vmatpush1.bf16.msra.mxu0 %v912
    %1283 = vmatprep.subr.bf16.mxu0 %v917
    %1284 = vmatpush1.bf16.msra.mxu0 %v916
    %1285 = vmatprep.subr.bf16.mxu0 %v921
    %1286 = vmatpush1.bf16.msra.mxu0 %v920
    %1287 = vmatprep.subr.bf16.mxu0 %v925
    %1288 = vmatpush1.bf16.msra.mxu0 %v924
    %1289 = vmatprep.subr.bf16.mxu0 %v929
    %1290 = vmatpush1.bf16.msra.mxu0 %v928
    %1291 = vmatprep.subr.bf16.mxu0 %v933
    %1292 = vmatpush1.bf16.msra.mxu0 %v932
    %1293 = vmatprep.subr.bf16.mxu0 %v937
    %1294 = vmatpush1.bf16.msra.mxu0 %v936
    %1295 = vmatprep.subr.bf16.mxu0 %v941
    %1296 = vmatpush1.bf16.msra.mxu0 %v940
    %1297 = vmatprep.subr.bf16.mxu0 %v945
    %1298 = vmatpush1.bf16.msra.mxu0 %v944
    %1299 = vmatprep.subr.bf16.mxu0 %v949
    %1300 = vmatpush1.bf16.msra.mxu0 %v948
    %1301 = vmatprep.subr.bf16.mxu0 %v953
    %1302 = vmatpush1.bf16.msra.mxu0 %v952
    %1303 = vmatprep.subr.bf16.mxu0 %v957
    %1304 = vmatpush1.bf16.msra.mxu0 %v956
    %1305 = vmatprep.subr.bf16.mxu0 %v961
    %1306 = vmatpush1.bf16.msra.mxu0 %v960
    %1307 = vmatprep.subr.bf16.mxu0 %v965
    %1308 = vmatpush1.bf16.msra.mxu0 %v964
    %1309 = vmatprep.mubr.bf16.mxu0 %v52
    %1310 = vmatmul.mubr.bf16.gmra.mrb[0].mxu0 %v51
    %v1311 = vpop.f32.mrb[0].mxu0
    %v1312 = vadd.f32 %v1271, %v1311
    %v1313 = vpop.f32.mrb[0].mxu0
    %v1314 = vadd.f32 %v1273, %v1313
    %v1315 = vpop.f32.mrb[0].mxu0
    %v1316 = vpop.f32.mrb[0].mxu0
    %1317 = vdwg.mxu0
    %1318 = vmatprep.subr.bf16.mxu0 %v969
    %1319 = vmatpush1.bf16.msra.mxu0 %v968
    %1320 = vmatprep.subr.bf16.mxu0 %v973
    %1321 = vmatpush1.bf16.msra.mxu0 %v972
    %1322 = vmatprep.subr.bf16.mxu0 %v977
    %1323 = vmatpush1.bf16.msra.mxu0 %v976
    %1324 = vmatprep.subr.bf16.mxu0 %v981
    %1325 = vmatpush1.bf16.msra.mxu0 %v980
    %1326 = vmatprep.subr.bf16.mxu0 %v985
    %1327 = vmatpush1.bf16.msra.mxu0 %v984
    %1328 = vmatprep.subr.bf16.mxu0 %v989
    %1329 = vmatpush1.bf16.msra.mxu0 %v988
    %1330 = vmatprep.subr.bf16.mxu0 %v993
    %1331 = vmatpush1.bf16.msra.mxu0 %v992
    %1332 = vmatprep.subr.bf16.mxu0 %v997
    %1333 = vmatpush1.bf16.msra.mxu0 %v996
    %1334 = vmatprep.subr.bf16.mxu0 %v1001
    %1335 = vmatpush1.bf16.msra.mxu0 %v1000
    %1336 = vmatprep.subr.bf16.mxu0 %v1005
    %1337 = vmatpush1.bf16.msra.mxu0 %v1004
    %1338 = vmatprep.subr.bf16.mxu0 %v1009
    %1339 = vmatpush1.bf16.msra.mxu0 %v1008
    %1340 = vmatprep.subr.bf16.mxu0 %v1013
    %1341 = vmatpush1.bf16.msra.mxu0 %v1012
    %1342 = vmatprep.subr.bf16.mxu0 %v1017
    %1343 = vmatpush1.bf16.msra.mxu0 %v1016
    %1344 = vmatprep.subr.bf16.mxu0 %v1021
    %1345 = vmatpush1.bf16.msra.mxu0 %v1020
    %1346 = vmatprep.subr.bf16.mxu0 %v1025
    %1347 = vmatpush1.bf16.msra.mxu0 %v1024
    %1348 = vmatprep.subr.bf16.mxu0 %v1029
    %1349 = vmatpush1.bf16.msra.mxu0 %v1028
    %1350 = vmatprep.mubr.bf16.mxu0 %v54
    %1351 = vmatmul.mubr.bf16.gmra.mrb[0].mxu0 %v53
    %v1352 = vpop.f32.mrb[0].mxu0
    %v1353 = vadd.f32 %v1312, %v1352
    %v1354 = vpop.f32.mrb[0].mxu0
    %v1355 = vadd.f32 %v1314, %v1354
    %v1356 = vpop.f32.mrb[0].mxu0
    %v1357 = vpop.f32.mrb[0].mxu0
    %1358 = vdwg.mxu0
    %1359 = vmatprep.subr.bf16.mxu0 %v1033
    %1360 = vmatpush1.bf16.msra.mxu0 %v1032
    %1361 = vmatprep.subr.bf16.mxu0 0
    %1362 = vmatpush1.bf16.msra.mxu0 0
    %1363 = vmatprep.subr.bf16.mxu0 0
    %1364 = vmatpush1.bf16.msra.mxu0 0
    %1365 = vmatprep.subr.bf16.mxu0 0
    %1366 = vmatpush1.bf16.msra.mxu0 0
    %1367 = vmatprep.subr.bf16.mxu0 0
    %1368 = vmatpush1.bf16.msra.mxu0 0
    %1369 = vmatprep.subr.bf16.mxu0 0
    %1370 = vmatpush1.bf16.msra.mxu0 0
    %1371 = vmatprep.subr.bf16.mxu0 0
    %1372 = vmatpush1.bf16.msra.mxu0 0
    %1373 = vmatprep.subr.bf16.mxu0 0
    %1374 = vmatpush1.bf16.msra.mxu0 0
    %1375 = vmatprep.subr.bf16.mxu0 0
    %1376 = vmatpush1.bf16.msra.mxu0 0
    %1377 = vmatprep.subr.bf16.mxu0 0
    %1378 = vmatpush1.bf16.msra.mxu0 0
    %1379 = vmatprep.subr.bf16.mxu0 0
    %1380 = vmatpush1.bf16.msra.mxu0 0
    %1381 = vmatprep.subr.bf16.mxu0 0
    %1382 = vmatpush1.bf16.msra.mxu0 0
    %1383 = vmatprep.subr.bf16.mxu0 0
    %1384 = vmatpush1.bf16.msra.mxu0 0
    %1385 = vmatprep.subr.bf16.mxu0 0
    %1386 = vmatpush1.bf16.msra.mxu0 0
    %1387 = vmatprep.subr.bf16.mxu0 0
    %1388 = vmatpush1.bf16.msra.mxu0 0
    %1389 = vmatprep.subr.bf16.mxu0 0
    %1390 = vmatpush1.bf16.msra.mxu0 0
    %1391 = vmatprep.mubr.bf16.mxu0 0
    %1392 = vmatmul.mubr.bf16.gmra.mrb[0].mxu0 %v1234
    %v1393 = vpop.f32.mrb[0].mxu0
    %v1394 = vadd.f32 %v1353, %v1393
    %v1395 = vpop.f32.mrb[0].mxu0
    %v1396 = vadd.f32 %v1355, %v1395
    %v1397 = vpop.f32.mrb[0].mxu0
    %v1398 = vpop.f32.mrb[0].mxu0
    %1399 = vdwg.mxu0
    %1400 = vmatprep.subr.bf16.mxu0 %v843
    %1401 = vmatpush1.bf16.msra.mxu0 %v842
    %1402 = vmatprep.subr.bf16.mxu0 %v847
    %1403 = vmatpush1.bf16.msra.mxu0 %v846
    %1404 = vmatprep.subr.bf16.mxu0 %v851
    %1405 = vmatpush1.bf16.msra.mxu0 %v850
    %1406 = vmatprep.subr.bf16.mxu0 %v855
    %1407 = vmatpush1.bf16.msra.mxu0 %v854
    %1408 = vmatprep.subr.bf16.mxu0 %v859
    %1409 = vmatpush1.bf16.msra.mxu0 %v858
    %1410 = vmatprep.subr.bf16.mxu0 %v863
    %1411 = vmatpush1.bf16.msra.mxu0 %v862
    %1412 = vmatprep.subr.bf16.mxu0 %v867
    %1413 = vmatpush1.bf16.msra.mxu0 %v866
    %1414 = vmatprep.subr.bf16.mxu0 %v871
    %1415 = vmatpush1.bf16.msra.mxu0 %v870
    %1416 = vmatprep.subr.bf16.mxu0 %v875
    %1417 = vmatpush1.bf16.msra.mxu0 %v874
    %1418 = vmatprep.subr.bf16.mxu0 %v879
    %1419 = vmatpush1.bf16.msra.mxu0 %v878
    %1420 = vmatprep.subr.bf16.mxu0 %v883
    %1421 = vmatpush1.bf16.msra.mxu0 %v882
    %1422 = vmatprep.subr.bf16.mxu0 %v887
    %1423 = vmatpush1.bf16.msra.mxu0 %v886
    %1424 = vmatprep.subr.bf16.mxu0 %v891
    %1425 = vmatpush1.bf16.msra.mxu0 %v890
    %1426 = vmatprep.subr.bf16.mxu0 %v895
    %1427 = vmatpush1.bf16.msra.mxu0 %v894
    %1428 = vmatprep.subr.bf16.mxu0 %v899
    %1429 = vmatpush1.bf16.msra.mxu0 %v898
    %1430 = vmatprep.subr.bf16.mxu0 %v903
    %1431 = vmatpush1.bf16.msra.mxu0 %v902
    %1432 = vmatprep.mubr.bf16.mxu0 %v50
    %1433 = vmatmul.mubr.bf16.gmra.mrb[0].mxu0 %v49
    %v1434 = vpop.f32.mrb[0].mxu0
    %v1435 = vadd.f32 0.0, %v1434
    %v1436 = vpop.f32.mrb[0].mxu0
    %v1437 = vadd.f32 0.0, %v1436
    %v1438 = vpop.f32.mrb[0].mxu0
    %v1439 = vpop.f32.mrb[0].mxu0
    %1440 = vdwg.mxu0
    %1441 = vmatprep.subr.bf16.mxu0 %v907
    %1442 = vmatpush1.bf16.msra.mxu0 %v906
    %1443 = vmatprep.subr.bf16.mxu0 %v911
    %1444 = vmatpush1.bf16.msra.mxu0 %v910
    %1445 = vmatprep.subr.bf16.mxu0 %v915
    %1446 = vmatpush1.bf16.msra.mxu0 %v914
    %1447 = vmatprep.subr.bf16.mxu0 %v919
    %1448 = vmatpush1.bf16.msra.mxu0 %v918
    %1449 = vmatprep.subr.bf16.mxu0 %v923
    %1450 = vmatpush1.bf16.msra.mxu0 %v922
    %1451 = vmatprep.subr.bf16.mxu0 %v927
    %1452 = vmatpush1.bf16.msra.mxu0 %v926
    %1453 = vmatprep.subr.bf16.mxu0 %v931
    %1454 = vmatpush1.bf16.msra.mxu0 %v930
    %1455 = vmatprep.subr.bf16.mxu0 %v935
    %1456 = vmatpush1.bf16.msra.mxu0 %v934
    %1457 = vmatprep.subr.bf16.mxu0 %v939
    %1458 = vmatpush1.bf16.msra.mxu0 %v938
    %1459 = vmatprep.subr.bf16.mxu0 %v943
    %1460 = vmatpush1.bf16.msra.mxu0 %v942
    %1461 = vmatprep.subr.bf16.mxu0 %v947
    %1462 = vmatpush1.bf16.msra.mxu0 %v946
    %1463 = vmatprep.subr.bf16.mxu0 %v951
    %1464 = vmatpush1.bf16.msra.mxu0 %v950
    %1465 = vmatprep.subr.bf16.mxu0 %v955
    %1466 = vmatpush1.bf16.msra.mxu0 %v954
    %1467 = vmatprep.subr.bf16.mxu0 %v959
    %1468 = vmatpush1.bf16.msra.mxu0 %v958
    %1469 = vmatprep.subr.bf16.mxu0 %v963
    %1470 = vmatpush1.bf16.msra.mxu0 %v962
    %1471 = vmatprep.subr.bf16.mxu0 %v967
    %1472 = vmatpush1.bf16.msra.mxu0 %v966
    %1473 = vmatprep.mubr.bf16.mxu0 %v52
    %1474 = vmatmul.mubr.bf16.gmra.mrb[0].mxu0 %v51
    %v1475 = vpop.f32.mrb[0].mxu0
    %v1476 = vadd.f32 %v1435, %v1475
    %v1477 = vpop.f32.mrb[0].mxu0
    %v1478 = vadd.f32 %v1437, %v1477
    %v1479 = vpop.f32.mrb[0].mxu0
    %v1480 = vpop.f32.mrb[0].mxu0
    %1481 = vdwg.mxu0
    %1482 = vmatprep.subr.bf16.mxu0 %v971
    %1483 = vmatpush1.bf16.msra.mxu0 %v970
    %1484 = vmatprep.subr.bf16.mxu0 %v975
    %1485 = vmatpush1.bf16.msra.mxu0 %v974
    %1486 = vmatprep.subr.bf16.mxu0 %v979
    %1487 = vmatpush1.bf16.msra.mxu0 %v978
    %1488 = vmatprep.subr.bf16.mxu0 %v983
    %1489 = vmatpush1.bf16.msra.mxu0 %v982
    %1490 = vmatprep.subr.bf16.mxu0 %v987
    %1491 = vmatpush1.bf16.msra.mxu0 %v986
    %1492 = vmatprep.subr.bf16.mxu0 %v991
    %1493 = vmatpush1.bf16.msra.mxu0 %v990
    %1494 = vmatprep.subr.bf16.mxu0 %v995
    %1495 = vmatpush1.bf16.msra.mxu0 %v994
    %1496 = vmatprep.subr.bf16.mxu0 %v999
    %1497 = vmatpush1.bf16.msra.mxu0 %v998
    %1498 = vmatprep.subr.bf16.mxu0 %v1003
    %1499 = vmatpush1.bf16.msra.mxu0 %v1002
    %1500 = vmatprep.subr.bf16.mxu0 %v1007
    %1501 = vmatpush1.bf16.msra.mxu0 %v1006
    %1502 = vmatprep.subr.bf16.mxu0 %v1011
    %1503 = vmatpush1.bf16.msra.mxu0 %v1010
    %1504 = vmatprep.subr.bf16.mxu0 %v1015
    %1505 = vmatpush1.bf16.msra.mxu0 %v1014
    %1506 = vmatprep.subr.bf16.mxu0 %v1019
    %1507 = vmatpush1.bf16.msra.mxu0 %v1018
    %1508 = vmatprep.subr.bf16.mxu0 %v1023
    %1509 = vmatpush1.bf16.msra.mxu0 %v1022
    %1510 = vmatprep.subr.bf16.mxu0 %v1027
    %1511 = vmatpush1.bf16.msra.mxu0 %v1026
    %1512 = vmatprep.subr.bf16.mxu0 %v1031
    %1513 = vmatpush1.bf16.msra.mxu0 %v1030
    %1514 = vmatprep.mubr.bf16.mxu0 %v54
    %1515 = vmatmul.mubr.bf16.gmra.mrb[0].mxu0 %v53
    %v1516 = vpop.f32.mrb[0].mxu0
    %v1517 = vadd.f32 %v1476, %v1516
    %v1518 = vpop.f32.mrb[0].mxu0
    %v1519 = vadd.f32 %v1478, %v1518
    %v1520 = vpop.f32.mrb[0].mxu0
    %v1521 = vpop.f32.mrb[0].mxu0
    %1522 = vdwg.mxu0
    %1523 = vmatprep.subr.bf16.mxu0 %v1035
    %1524 = vmatpush1.bf16.msra.mxu0 %v1034
    %1525 = vmatprep.subr.bf16.mxu0 0
    %1526 = vmatpush1.bf16.msra.mxu0 0
    %1527 = vmatprep.subr.bf16.mxu0 0
    %1528 = vmatpush1.bf16.msra.mxu0 0
    %1529 = vmatprep.subr.bf16.mxu0 0
    %1530 = vmatpush1.bf16.msra.mxu0 0
    %1531 = vmatprep.subr.bf16.mxu0 0
    %1532 = vmatpush1.bf16.msra.mxu0 0
    %1533 = vmatprep.subr.bf16.mxu0 0
    %1534 = vmatpush1.bf16.msra.mxu0 0
    %1535 = vmatprep.subr.bf16.mxu0 0
    %1536 = vmatpush1.bf16.msra.mxu0 0
    %1537 = vmatprep.subr.bf16.mxu0 0
    %1538 = vmatpush1.bf16.msra.mxu0 0
    %1539 = vmatprep.subr.bf16.mxu0 0
    %1540 = vmatpush1.bf16.msra.mxu0 0
    %1541 = vmatprep.subr.bf16.mxu0 0
    %1542 = vmatpush1.bf16.msra.mxu0 0
    %1543 = vmatprep.subr.bf16.mxu0 0
    %1544 = vmatpush1.bf16.msra.mxu0 0
    %1545 = vmatprep.subr.bf16.mxu0 0
    %1546 = vmatpush1.bf16.msra.mxu0 0
    %1547 = vmatprep.subr.bf16.mxu0 0
    %1548 = vmatpush1.bf16.msra.mxu0 0
    %1549 = vmatprep.subr.bf16.mxu0 0
    %1550 = vmatpush1.bf16.msra.mxu0 0
    %1551 = vmatprep.subr.bf16.mxu0 0
    %1552 = vmatpush1.bf16.msra.mxu0 0
    %1553 = vmatprep.subr.bf16.mxu0 0
    %1554 = vmatpush1.bf16.msra.mxu0 0
    %1555 = vmatprep.mubr.bf16.mxu0 0
    %1556 = vmatmul.mubr.bf16.gmra.mrb[0].mxu0 %v1234
    %v1557 = vpop.f32.mrb[0].mxu0
    %v1558 = vadd.f32 %v1517, %v1557
    %v1559 = vpop.f32.mrb[0].mxu0
    %v1560 = vadd.f32 %v1519, %v1559
    %v1561 = vpop.f32.mrb[0].mxu0
    %v1562 = vpop.f32.mrb[0].mxu0
    %1563 = vdwg.mxu0
    %v1564 = vpack.c.bf16 %v1394, %v1394
    %v1565 = vpack.c.bf16 %v1396, %v1396
    %v1566 = vpack.c.bf16 %v1558, %v1558
    %v1567 = vpack.c.bf16 %v1560, %v1560
    %v1568 = vld [vmem:[%s3] sm:$0xf]
    %v1571 = vunpack.c.l.s4 1966171168
    %v1572 = vunpack.c.0.s8 %v1571
    %v1573 = vlaneseq
    %v1574 = vshrl.u32 %v1573, 7
    %v1575 = vsub.s32 %v1572, %v1574
    %v1576 = vrot.slane %v1568, %v1575
    %v1577 = vcombine.high %v1576, %v1576
    %v1579 = vunpack.c.l.s4 1966171168
    %v1580 = vunpack.c.0.s8 %v1579
    %v1581 = vlaneseq
    %v1582 = vshrl.u32 %v1581, 7
    %v1583 = vsub.s32 %v1580, %v1582
    %v1584 = vrot.slane %v1576, %v1583
    %v1586 = vunpack.c.l.s4 1966171168
    %v1587 = vunpack.c.0.s8 %v1586
    %v1588 = vlaneseq
    %v1589 = vshrl.u32 %v1588, 7
    %v1590 = vsub.s32 %v1587, %v1589
    %v1591 = vrot.slane %v1577, %v1590
    %v1592 = vcombine.high %v1584, %v1584
    %v1593 = vcombine.high %v1591, %v1591
    %v1595 = vpack.i.b16 %v1584, %v1584
    %v1597 = vlaneseq
    %v1598 = vshrl.u32 %v1597, 7
    %v1599 = vsub.s32 0, %v1598
    %v1600 = vrot.slane %v1595, %v1599
    %v1602 = vpack.i.b16 %v1591, %v1591
    %v1604 = vlaneseq
    %v1605 = vshrl.u32 %v1604, 7
    %v1606 = vsub.s32 0, %v1605
    %v1607 = vrot.slane %v1602, %v1606
    %v1609 = vpack.i.b16 %v1592, %v1592
    %v1611 = vlaneseq
    %v1612 = vshrl.u32 %v1611, 7
    %v1613 = vsub.s32 0, %v1612
    %v1614 = vrot.slane %v1609, %v1613
    %v1616 = vpack.i.b16 %v1593, %v1593
    %v1618 = vlaneseq
    %v1619 = vshrl.u32 %v1618, 7
    %v1620 = vsub.s32 0, %v1619
    %v1621 = vrot.slane %v1616, %v1620
    %v1622 = vadd.bf16 %v1564, %v1600
    %v1623 = vadd.bf16 %v1565, %v1607
    %v1624 = vadd.bf16 %v1566, %v1614
    %v1625 = vadd.bf16 %v1567, %v1621
    %v1626 = vmax.bf16 %v1622, 0
    %v1627 = vmax.bf16 %v1623, 0
    %v1628 = vmax.bf16 %v1624, 0
    %v1629 = vmax.bf16 %v1625, 0
    %v1630 = vld [vmem:[%s4] sm:$0xff]
    %v1631 = vld [vmem:[%s4 + $0x8] sm:$0xff]
    %v1632 = vld [vmem:[%s4 + $0x10] sm:$0xff]
    %v1633 = vld [vmem:[%s4 + $0x18] sm:$0xff]
    %v1634 = vld [vmem:[%s4 + $0x20] sm:$0xff]
    %v1635 = vld [vmem:[%s4 + $0x28] sm:$0xff]
    %v1636 = vld [vmem:[%s4 + $0x30] sm:$0xff]
    %v1637 = vld [vmem:[%s4 + $0x38] sm:$0xff]
    %v1638 = vld [vmem:[%s4 + $0x40] sm:$0xff]
    %v1639 = vld [vmem:[%s4 + $0x48] sm:$0xff]
    %v1640 = vld [vmem:[%s4 + $0x50] sm:$0xff]
    %v1641 = vld [vmem:[%s4 + $0x58] sm:$0xff]
    %v1642 = vld [vmem:[%s4 + $0x60] sm:$0xff]
    %v1643 = vld [vmem:[%s4 + $0x68] sm:$0xff]
    %v1644 = vld [vmem:[%s4 + $0x70] sm:$0xff]
    %v1645 = vld [vmem:[%s4 + $0x78] sm:$0xff]
    %v1646 = vld [vmem:[%s4 + $0x80] sm:$0xff]
    %v1647 = vld [vmem:[%s4 + $0x88] sm:$0xff]
    %v1648 = vld [vmem:[%s4 + $0x90] sm:$0xff]
    %v1649 = vld [vmem:[%s4 + $0x98] sm:$0xff]
    %v1650 = vld [vmem:[%s4 + $0xa0] sm:$0xff]
    %v1651 = vld [vmem:[%s4 + $0xa8] sm:$0xff]
    %v1652 = vld [vmem:[%s4 + $0xb0] sm:$0xff]
    %v1653 = vld [vmem:[%s4 + $0xb8] sm:$0xff]
    %v1654 = vld [vmem:[%s4 + $0xc0] sm:$0xff]
    %v1655 = vld [vmem:[%s4 + $0xc8] sm:$0xff]
    %v1656 = vld [vmem:[%s4 + $0xd0] sm:$0xff]
    %v1657 = vld [vmem:[%s4 + $0xd8] sm:$0xff]
    %v1658 = vld [vmem:[%s4 + $0xe0] sm:$0xff]
    %v1659 = vld [vmem:[%s4 + $0xe8] sm:$0xff]
    %v1660 = vld [vmem:[%s4 + $0xf0] sm:$0xff]
    %v1661 = vld [vmem:[%s4 + $0xf8] sm:$0xff]
    %v1662 = vld [vmem:[%s4 + $0x100] sm:$0xff]
    %v1663 = vld [vmem:[%s4 + $0x108] sm:$0xff]
    %v1664 = vld [vmem:[%s4 + $0x110] sm:$0xff]
    %v1665 = vld [vmem:[%s4 + $0x118] sm:$0xff]
    %v1666 = vld [vmem:[%s4 + $0x120] sm:$0xff]
    %v1667 = vld [vmem:[%s4 + $0x128] sm:$0xff]
    %v1668 = vld [vmem:[%s4 + $0x130] sm:$0xff]
    %v1669 = vld [vmem:[%s4 + $0x138] sm:$0xff]
    %v1670 = vld [vmem:[%s4 + $0x140] sm:$0xff]
    %v1671 = vld [vmem:[%s4 + $0x148] sm:$0xff]
    %v1672 = vld [vmem:[%s4 + $0x150] sm:$0xff]
    %v1673 = vld [vmem:[%s4 + $0x158] sm:$0xff]
    %v1674 = vld [vmem:[%s4 + $0x160] sm:$0xff]
    %v1675 = vld [vmem:[%s4 + $0x168] sm:$0xff]
    %v1676 = vld [vmem:[%s4 + $0x170] sm:$0xff]
    %v1677 = vld [vmem:[%s4 + $0x178] sm:$0xff]
    %v1678 = vld [vmem:[%s4 + $0x180] sm:$0xff]
    %v1679 = vld [vmem:[%s4 + $0x188] sm:$0xff]
    %v1680 = vld [vmem:[%s4 + $0x190] sm:$0xff]
    %v1681 = vld [vmem:[%s4 + $0x198] sm:$0xff]
    %v1682 = vld [vmem:[%s4 + $0x1a0] sm:$0xff]
    %v1683 = vld [vmem:[%s4 + $0x1a8] sm:$0xff]
    %v1684 = vld [vmem:[%s4 + $0x1b0] sm:$0xff]
    %v1685 = vld [vmem:[%s4 + $0x1b8] sm:$0xff]
    %v1686 = vld [vmem:[%s4 + $0x1c0] sm:$0xff]
    %v1687 = vld [vmem:[%s4 + $0x1c8] sm:$0xff]
    %v1688 = vld [vmem:[%s4 + $0x1d0] sm:$0xff]
    %v1689 = vld [vmem:[%s4 + $0x1d8] sm:$0xff]
    %v1690 = vld [vmem:[%s4 + $0x1e0] sm:$0xff]
    %v1691 = vld [vmem:[%s4 + $0x1e8] sm:$0xff]
    %v1692 = vld [vmem:[%s4 + $0x1f0] sm:$0xff]
    %v1693 = vld [vmem:[%s4 + $0x1f8] sm:$0xff]
    %v1694 = vld [vmem:[%s5] sm:$0x3]
    %v1696 = vlaneseq
    %v1697 = vshrl.u32 %v1696, 7
    %v1698 = vsub.s32 0, %v1697
    %v1699 = vrot.slane %v1694, %v1698
    %v1700 = vlaneseq
    %v1701 = vshrl.u32 %v1700, 7
    %v1702 = vsub.s32 1, %v1701
    %v1703 = vrot.slane %v1694, %v1702
    %v1770 = vunpack.c.l.b16 %v1630
    %v1771 = vunpack.c.h.b16 %v1630
    %v1772 = vunpack.c.l.b16 %v1631
    %v1773 = vunpack.c.h.b16 %v1631
    %v1774 = vunpack.c.l.b16 %v1632
    %v1775 = vunpack.c.h.b16 %v1632
    %v1776 = vunpack.c.l.b16 %v1633
    %v1777 = vunpack.c.h.b16 %v1633
    %v1778 = vunpack.c.l.b16 %v1634
    %v1779 = vunpack.c.h.b16 %v1634
    %v1780 = vunpack.c.l.b16 %v1635
    %v1781 = vunpack.c.h.b16 %v1635
    %v1782 = vunpack.c.l.b16 %v1636
    %v1783 = vunpack.c.h.b16 %v1636
    %v1784 = vunpack.c.l.b16 %v1637
    %v1785 = vunpack.c.h.b16 %v1637
    %v1786 = vunpack.c.l.b16 %v1638
    %v1787 = vunpack.c.h.b16 %v1638
    %v1788 = vunpack.c.l.b16 %v1639
    %v1789 = vunpack.c.h.b16 %v1639
    %v1790 = vunpack.c.l.b16 %v1640
    %v1791 = vunpack.c.h.b16 %v1640
    %v1792 = vunpack.c.l.b16 %v1641
    %v1793 = vunpack.c.h.b16 %v1641
    %v1794 = vunpack.c.l.b16 %v1642
    %v1795 = vunpack.c.h.b16 %v1642
    %v1796 = vunpack.c.l.b16 %v1643
    %v1797 = vunpack.c.h.b16 %v1643
    %v1798 = vunpack.c.l.b16 %v1644
    %v1799 = vunpack.c.h.b16 %v1644
    %v1800 = vunpack.c.l.b16 %v1645
    %v1801 = vunpack.c.h.b16 %v1645
    %v1802 = vunpack.c.l.b16 %v1646
    %v1803 = vunpack.c.h.b16 %v1646
    %v1804 = vunpack.c.l.b16 %v1647
    %v1805 = vunpack.c.h.b16 %v1647
    %v1806 = vunpack.c.l.b16 %v1648
    %v1807 = vunpack.c.h.b16 %v1648
    %v1808 = vunpack.c.l.b16 %v1649
    %v1809 = vunpack.c.h.b16 %v1649
    %v1810 = vunpack.c.l.b16 %v1650
    %v1811 = vunpack.c.h.b16 %v1650
    %v1812 = vunpack.c.l.b16 %v1651
    %v1813 = vunpack.c.h.b16 %v1651
    %v1814 = vunpack.c.l.b16 %v1652
    %v1815 = vunpack.c.h.b16 %v1652
    %v1816 = vunpack.c.l.b16 %v1653
    %v1817 = vunpack.c.h.b16 %v1653
    %v1818 = vunpack.c.l.b16 %v1654
    %v1819 = vunpack.c.h.b16 %v1654
    %v1820 = vunpack.c.l.b16 %v1655
    %v1821 = vunpack.c.h.b16 %v1655
    %v1822 = vunpack.c.l.b16 %v1656
    %v1823 = vunpack.c.h.b16 %v1656
    %v1824 = vunpack.c.l.b16 %v1657
    %v1825 = vunpack.c.h.b16 %v1657
    %v1826 = vunpack.c.l.b16 %v1658
    %v1827 = vunpack.c.h.b16 %v1658
    %v1828 = vunpack.c.l.b16 %v1659
    %v1829 = vunpack.c.h.b16 %v1659
    %v1830 = vunpack.c.l.b16 %v1660
    %v1831 = vunpack.c.h.b16 %v1660
    %v1832 = vunpack.c.l.b16 %v1661
    %v1833 = vunpack.c.h.b16 %v1661
    %v1834 = vunpack.c.l.b16 %v1662
    %v1835 = vunpack.c.h.b16 %v1662
    %v1836 = vunpack.c.l.b16 %v1663
    %v1837 = vunpack.c.h.b16 %v1663
    %v1838 = vunpack.c.l.b16 %v1664
    %v1839 = vunpack.c.h.b16 %v1664
    %v1840 = vunpack.c.l.b16 %v1665
    %v1841 = vunpack.c.h.b16 %v1665
    %v1842 = vunpack.c.l.b16 %v1666
    %v1843 = vunpack.c.h.b16 %v1666
    %v1844 = vunpack.c.l.b16 %v1667
    %v1845 = vunpack.c.h.b16 %v1667
    %v1846 = vunpack.c.l.b16 %v1668
    %v1847 = vunpack.c.h.b16 %v1668
    %v1848 = vunpack.c.l.b16 %v1669
    %v1849 = vunpack.c.h.b16 %v1669
    %v1850 = vunpack.c.l.b16 %v1670
    %v1851 = vunpack.c.h.b16 %v1670
    %v1852 = vunpack.c.l.b16 %v1671
    %v1853 = vunpack.c.h.b16 %v1671
    %v1854 = vunpack.c.l.b16 %v1672
    %v1855 = vunpack.c.h.b16 %v1672
    %v1856 = vunpack.c.l.b16 %v1673
    %v1857 = vunpack.c.h.b16 %v1673
    %v1858 = vunpack.c.l.b16 %v1674
    %v1859 = vunpack.c.h.b16 %v1674
    %v1860 = vunpack.c.l.b16 %v1675
    %v1861 = vunpack.c.h.b16 %v1675
    %v1862 = vunpack.c.l.b16 %v1676
    %v1863 = vunpack.c.h.b16 %v1676
    %v1864 = vunpack.c.l.b16 %v1677
    %v1865 = vunpack.c.h.b16 %v1677
    %v1866 = vunpack.c.l.b16 %v1678
    %v1867 = vunpack.c.h.b16 %v1678
    %v1868 = vunpack.c.l.b16 %v1679
    %v1869 = vunpack.c.h.b16 %v1679
    %v1870 = vunpack.c.l.b16 %v1680
    %v1871 = vunpack.c.h.b16 %v1680
    %v1872 = vunpack.c.l.b16 %v1681
    %v1873 = vunpack.c.h.b16 %v1681
    %v1874 = vunpack.c.l.b16 %v1682
    %v1875 = vunpack.c.h.b16 %v1682
    %v1876 = vunpack.c.l.b16 %v1683
    %v1877 = vunpack.c.h.b16 %v1683
    %v1878 = vunpack.c.l.b16 %v1684
    %v1879 = vunpack.c.h.b16 %v1684
    %v1880 = vunpack.c.l.b16 %v1685
    %v1881 = vunpack.c.h.b16 %v1685
    %v1882 = vunpack.c.l.b16 %v1686
    %v1883 = vunpack.c.h.b16 %v1686
    %v1884 = vunpack.c.l.b16 %v1687
    %v1885 = vunpack.c.h.b16 %v1687
    %v1886 = vunpack.c.l.b16 %v1688
    %v1887 = vunpack.c.h.b16 %v1688
    %v1888 = vunpack.c.l.b16 %v1689
    %v1889 = vunpack.c.h.b16 %v1689
    %v1890 = vunpack.c.l.b16 %v1690
    %v1891 = vunpack.c.h.b16 %v1690
    %v1892 = vunpack.c.l.b16 %v1691
    %v1893 = vunpack.c.h.b16 %v1691
    %v1894 = vunpack.c.l.b16 %v1692
    %v1895 = vunpack.c.h.b16 %v1692
    %v1896 = vunpack.c.l.b16 %v1693
    %v1897 = vunpack.c.h.b16 %v1693
    %v1898 = vpack.c.b16 %v1772, %v1770
    %v1899 = vpack.c.b16 %v1773, %v1771
    %v1900 = vpack.c.b16 %v1776, %v1774
    %v1901 = vpack.c.b16 %v1777, %v1775
    %v1902 = vpack.c.b16 %v1780, %v1778
    %v1903 = vpack.c.b16 %v1781, %v1779
    %v1904 = vpack.c.b16 %v1784, %v1782
    %v1905 = vpack.c.b16 %v1785, %v1783
    %v1906 = vpack.c.b16 %v1788, %v1786
    %v1907 = vpack.c.b16 %v1789, %v1787
    %v1908 = vpack.c.b16 %v1792, %v1790
    %v1909 = vpack.c.b16 %v1793, %v1791
    %v1910 = vpack.c.b16 %v1796, %v1794
    %v1911 = vpack.c.b16 %v1797, %v1795
    %v1912 = vpack.c.b16 %v1800, %v1798
    %v1913 = vpack.c.b16 %v1801, %v1799
    %v1914 = vpack.c.b16 %v1804, %v1802
    %v1915 = vpack.c.b16 %v1805, %v1803
    %v1916 = vpack.c.b16 %v1808, %v1806
    %v1917 = vpack.c.b16 %v1809, %v1807
    %v1918 = vpack.c.b16 %v1812, %v1810
    %v1919 = vpack.c.b16 %v1813, %v1811
    %v1920 = vpack.c.b16 %v1816, %v1814
    %v1921 = vpack.c.b16 %v1817, %v1815
    %v1922 = vpack.c.b16 %v1820, %v1818
    %v1923 = vpack.c.b16 %v1821, %v1819
    %v1924 = vpack.c.b16 %v1824, %v1822
    %v1925 = vpack.c.b16 %v1825, %v1823
    %v1926 = vpack.c.b16 %v1828, %v1826
    %v1927 = vpack.c.b16 %v1829, %v1827
    %v1928 = vpack.c.b16 %v1832, %v1830
    %v1929 = vpack.c.b16 %v1833, %v1831
    %v1930 = vpack.c.b16 %v1836, %v1834
    %v1931 = vpack.c.b16 %v1837, %v1835
    %v1932 = vpack.c.b16 %v1840, %v1838
    %v1933 = vpack.c.b16 %v1841, %v1839
    %v1934 = vpack.c.b16 %v1844, %v1842
    %v1935 = vpack.c.b16 %v1845, %v1843
    %v1936 = vpack.c.b16 %v1848, %v1846
    %v1937 = vpack.c.b16 %v1849, %v1847
    %v1938 = vpack.c.b16 %v1852, %v1850
    %v1939 = vpack.c.b16 %v1853, %v1851
    %v1940 = vpack.c.b16 %v1856, %v1854
    %v1941 = vpack.c.b16 %v1857, %v1855
    %v1942 = vpack.c.b16 %v1860, %v1858
    %v1943 = vpack.c.b16 %v1861, %v1859
    %v1944 = vpack.c.b16 %v1864, %v1862
    %v1945 = vpack.c.b16 %v1865, %v1863
    %v1946 = vpack.c.b16 %v1868, %v1866
    %v1947 = vpack.c.b16 %v1869, %v1867
    %v1948 = vpack.c.b16 %v1872, %v1870
    %v1949 = vpack.c.b16 %v1873, %v1871
    %v1950 = vpack.c.b16 %v1876, %v1874
    %v1951 = vpack.c.b16 %v1877, %v1875
    %v1952 = vpack.c.b16 %v1880, %v1878
    %v1953 = vpack.c.b16 %v1881, %v1879
    %v1954 = vpack.c.b16 %v1884, %v1882
    %v1955 = vpack.c.b16 %v1885, %v1883
    %v1956 = vpack.c.b16 %v1888, %v1886
    %v1957 = vpack.c.b16 %v1889, %v1887
    %v1958 = vpack.c.b16 %v1892, %v1890
    %v1959 = vpack.c.b16 %v1893, %v1891
    %v1960 = vpack.c.b16 %v1896, %v1894
    %v1961 = vpack.c.b16 %v1897, %v1895
    %2026 = vmatprep.subr.bf16.mxu0 %v1899
    %2027 = vmatpush1.bf16.msra.mxu0 %v1898
    %2028 = vmatprep.subr.bf16.mxu0 %v1901
    %2029 = vmatpush1.bf16.msra.mxu0 %v1900
    %2030 = vmatprep.subr.bf16.mxu0 %v1903
    %2031 = vmatpush1.bf16.msra.mxu0 %v1902
    %2032 = vmatprep.subr.bf16.mxu0 %v1905
    %2033 = vmatpush1.bf16.msra.mxu0 %v1904
    %2034 = vmatprep.subr.bf16.mxu0 %v1907
    %2035 = vmatpush1.bf16.msra.mxu0 %v1906
    %2036 = vmatprep.subr.bf16.mxu0 %v1909
    %2037 = vmatpush1.bf16.msra.mxu0 %v1908
    %2038 = vmatprep.subr.bf16.mxu0 %v1911
    %2039 = vmatpush1.bf16.msra.mxu0 %v1910
    %2040 = vmatprep.subr.bf16.mxu0 %v1913
    %2041 = vmatpush1.bf16.msra.mxu0 %v1912
    %2042 = vmatprep.subr.bf16.mxu0 %v1915
    %2043 = vmatpush1.bf16.msra.mxu0 %v1914
    %2044 = vmatprep.subr.bf16.mxu0 %v1917
    %2045 = vmatpush1.bf16.msra.mxu0 %v1916
    %2046 = vmatprep.subr.bf16.mxu0 %v1919
    %2047 = vmatpush1.bf16.msra.mxu0 %v1918
    %2048 = vmatprep.subr.bf16.mxu0 %v1921
    %2049 = vmatpush1.bf16.msra.mxu0 %v1920
    %2050 = vmatprep.subr.bf16.mxu0 %v1923
    %2051 = vmatpush1.bf16.msra.mxu0 %v1922
    %2052 = vmatprep.subr.bf16.mxu0 %v1925
    %2053 = vmatpush1.bf16.msra.mxu0 %v1924
    %2054 = vmatprep.subr.bf16.mxu0 %v1927
    %2055 = vmatpush1.bf16.msra.mxu0 %v1926
    %2056 = vmatprep.subr.bf16.mxu0 %v1929
    %2057 = vmatpush1.bf16.msra.mxu0 %v1928
    %2058 = vmatprep.mubr.bf16.mxu0 %v1627
    %2059 = vmatmul.mubr.bf16.gmra.mrb[0].mxu0 %v1626
    %v2060 = vpop.f32.mrb[0].mxu0
    %v2061 = vadd.f32 %v1699, %v2060
    %v2062 = vpop.f32.mrb[0].mxu0
    %v2063 = vadd.f32 %v1703, %v2062
    %v2064 = vpop.f32.mrb[0].mxu0
    %v2065 = vpop.f32.mrb[0].mxu0
    %2066 = vdwg.mxu0
    %2067 = vmatprep.subr.bf16.mxu0 %v1931
    %2068 = vmatpush1.bf16.msra.mxu0 %v1930
    %2069 = vmatprep.subr.bf16.mxu0 %v1933
    %2070 = vmatpush1.bf16.msra.mxu0 %v1932
    %2071 = vmatprep.subr.bf16.mxu0 %v1935
    %2072 = vmatpush1.bf16.msra.mxu0 %v1934
    %2073 = vmatprep.subr.bf16.mxu0 %v1937
    %2074 = vmatpush1.bf16.msra.mxu0 %v1936
    %2075 = vmatprep.subr.bf16.mxu0 %v1939
    %2076 = vmatpush1.bf16.msra.mxu0 %v1938
    %2077 = vmatprep.subr.bf16.mxu0 %v1941
    %2078 = vmatpush1.bf16.msra.mxu0 %v1940
    %2079 = vmatprep.subr.bf16.mxu0 %v1943
    %2080 = vmatpush1.bf16.msra.mxu0 %v1942
    %2081 = vmatprep.subr.bf16.mxu0 %v1945
    %2082 = vmatpush1.bf16.msra.mxu0 %v1944
    %2083 = vmatprep.subr.bf16.mxu0 %v1947
    %2084 = vmatpush1.bf16.msra.mxu0 %v1946
    %2085 = vmatprep.subr.bf16.mxu0 %v1949
    %2086 = vmatpush1.bf16.msra.mxu0 %v1948
    %2087 = vmatprep.subr.bf16.mxu0 %v1951
    %2088 = vmatpush1.bf16.msra.mxu0 %v1950
    %2089 = vmatprep.subr.bf16.mxu0 %v1953
    %2090 = vmatpush1.bf16.msra.mxu0 %v1952
    %2091 = vmatprep.subr.bf16.mxu0 %v1955
    %2092 = vmatpush1.bf16.msra.mxu0 %v1954
    %2093 = vmatprep.subr.bf16.mxu0 %v1957
    %2094 = vmatpush1.bf16.msra.mxu0 %v1956
    %2095 = vmatprep.subr.bf16.mxu0 %v1959
    %2096 = vmatpush1.bf16.msra.mxu0 %v1958
    %2097 = vmatprep.subr.bf16.mxu0 %v1961
    %2098 = vmatpush1.bf16.msra.mxu0 %v1960
    %2099 = vmatprep.mubr.bf16.mxu0 %v1629
    %2100 = vmatmul.mubr.bf16.gmra.mrb[0].mxu0 %v1628
    %v2101 = vpop.f32.mrb[0].mxu0
    %v2102 = vadd.f32 %v2061, %v2101
    %v2103 = vpop.f32.mrb[0].mxu0
    %v2104 = vadd.f32 %v2063, %v2103
    %v2105 = vpop.f32.mrb[0].mxu0
    %v2106 = vpop.f32.mrb[0].mxu0
    %2107 = vdwg.mxu0
    %v2108 = vld [vmem:[%s1] sm:$0xff]
    %v2109 = vmul.f32 %v2104, 0.5
    %v2110 = vmul.f32 %v2109, 1.442695
    %v2111 = vpow.pop %v2110
    %v2112 = vmul.f32 %v2108, %v2111
    %v2113 = vadd.f32 %v2112, %v2102
    %v2114 = vpack.c.bf16 %v2113, %v2113
    %v2115 = vld [vmem:[%s6] sm:$0xff]
    %v2116 = vld [vmem:[%s6 + $0x8] sm:$0xff]
    %v2117 = vld [vmem:[%s6 + $0x10] sm:$0xff]
    %v2118 = vld [vmem:[%s6 + $0x18] sm:$0xff]
    %v2119 = vld [vmem:[%s6 + $0x20] sm:$0xff]
    %v2120 = vld [vmem:[%s6 + $0x28] sm:$0xff]
    %v2121 = vld [vmem:[%s6 + $0x30] sm:$0xff]
    %v2122 = vld [vmem:[%s6 + $0x38] sm:$0xff]
    %v2123 = vld [vmem:[%s6 + $0x40] sm:$0xff]
    %v2124 = vld [vmem:[%s6 + $0x48] sm:$0xff]
    %v2125 = vld [vmem:[%s6 + $0x50] sm:$0xff]
    %v2126 = vld [vmem:[%s6 + $0x58] sm:$0xff]
    %v2127 = vld [vmem:[%s6 + $0x60] sm:$0xff]
    %v2128 = vld [vmem:[%s6 + $0x68] sm:$0xff]
    %v2129 = vld [vmem:[%s6 + $0x70] sm:$0xff]
    %v2130 = vld [vmem:[%s6 + $0x78] sm:$0xff]
    %v2131 = vld [vmem:[%s6 + $0x80] sm:$0xff]
    %v2132 = vld [vmem:[%s6 + $0x88] sm:$0xff]
    %v2133 = vld [vmem:[%s6 + $0x90] sm:$0xff]
    %v2134 = vld [vmem:[%s6 + $0x98] sm:$0xff]
    %v2135 = vld [vmem:[%s6 + $0xa0] sm:$0xff]
    %v2136 = vld [vmem:[%s6 + $0xa8] sm:$0xff]
    %v2137 = vld [vmem:[%s6 + $0xb0] sm:$0xff]
    %v2138 = vld [vmem:[%s6 + $0xb8] sm:$0xff]
    %v2139 = vld [vmem:[%s6 + $0xc0] sm:$0xff]
    %v2140 = vld [vmem:[%s6 + $0xc8] sm:$0xff]
    %v2141 = vld [vmem:[%s6 + $0xd0] sm:$0xff]
    %v2142 = vld [vmem:[%s6 + $0xd8] sm:$0xff]
    %v2143 = vld [vmem:[%s6 + $0xe0] sm:$0xff]
    %v2144 = vld [vmem:[%s6 + $0xe8] sm:$0xff]
    %v2145 = vld [vmem:[%s6 + $0xf0] sm:$0xff]
    %v2146 = vld [vmem:[%s6 + $0xf8] sm:$0xff]
    %v2179 = vunpack.c.l.b16 %v2115
    %v2180 = vunpack.c.h.b16 %v2115
    %v2181 = vunpack.c.l.b16 %v2116
    %v2182 = vunpack.c.h.b16 %v2116
    %v2183 = vunpack.c.l.b16 %v2117
    %v2184 = vunpack.c.h.b16 %v2117
    %v2185 = vunpack.c.l.b16 %v2118
    %v2186 = vunpack.c.h.b16 %v2118
    %v2187 = vunpack.c.l.b16 %v2119
    %v2188 = vunpack.c.h.b16 %v2119
    %v2189 = vunpack.c.l.b16 %v2120
    %v2190 = vunpack.c.h.b16 %v2120
    %v2191 = vunpack.c.l.b16 %v2121
    %v2192 = vunpack.c.h.b16 %v2121
    %v2193 = vunpack.c.l.b16 %v2122
    %v2194 = vunpack.c.h.b16 %v2122
    %v2195 = vunpack.c.l.b16 %v2123
    %v2196 = vunpack.c.h.b16 %v2123
    %v2197 = vunpack.c.l.b16 %v2124
    %v2198 = vunpack.c.h.b16 %v2124
    %v2199 = vunpack.c.l.b16 %v2125
    %v2200 = vunpack.c.h.b16 %v2125
    %v2201 = vunpack.c.l.b16 %v2126
    %v2202 = vunpack.c.h.b16 %v2126
    %v2203 = vunpack.c.l.b16 %v2127
    %v2204 = vunpack.c.h.b16 %v2127
    %v2205 = vunpack.c.l.b16 %v2128
    %v2206 = vunpack.c.h.b16 %v2128
    %v2207 = vunpack.c.l.b16 %v2129
    %v2208 = vunpack.c.h.b16 %v2129
    %v2209 = vunpack.c.l.b16 %v2130
    %v2210 = vunpack.c.h.b16 %v2130
    %v2211 = vunpack.c.l.b16 %v2131
    %v2212 = vunpack.c.h.b16 %v2131
    %v2213 = vunpack.c.l.b16 %v2132
    %v2214 = vunpack.c.h.b16 %v2132
    %v2215 = vunpack.c.l.b16 %v2133
    %v2216 = vunpack.c.h.b16 %v2133
    %v2217 = vunpack.c.l.b16 %v2134
    %v2218 = vunpack.c.h.b16 %v2134
    %v2219 = vunpack.c.l.b16 %v2135
    %v2220 = vunpack.c.h.b16 %v2135
    %v2221 = vunpack.c.l.b16 %v2136
    %v2222 = vunpack.c.h.b16 %v2136
    %v2223 = vunpack.c.l.b16 %v2137
    %v2224 = vunpack.c.h.b16 %v2137
    %v2225 = vunpack.c.l.b16 %v2138
    %v2226 = vunpack.c.h.b16 %v2138
    %v2227 = vunpack.c.l.b16 %v2139
    %v2228 = vunpack.c.h.b16 %v2139
    %v2229 = vunpack.c.l.b16 %v2140
    %v2230 = vunpack.c.h.b16 %v2140
    %v2231 = vunpack.c.l.b16 %v2141
    %v2232 = vunpack.c.h.b16 %v2141
    %v2233 = vunpack.c.l.b16 %v2142
    %v2234 = vunpack.c.h.b16 %v2142
    %v2235 = vunpack.c.l.b16 %v2143
    %v2236 = vunpack.c.h.b16 %v2143
    %v2237 = vunpack.c.l.b16 %v2144
    %v2238 = vunpack.c.h.b16 %v2144
    %v2239 = vunpack.c.l.b16 %v2145
    %v2240 = vunpack.c.h.b16 %v2145
    %v2241 = vunpack.c.l.b16 %v2146
    %v2242 = vunpack.c.h.b16 %v2146
    %v2243 = vpack.c.b16 %v2183, %v2179
    %v2244 = vpack.c.b16 %v2184, %v2180
    %v2245 = vpack.c.b16 %v2185, %v2181
    %v2246 = vpack.c.b16 %v2186, %v2182
    %v2247 = vpack.c.b16 %v2191, %v2187
    %v2248 = vpack.c.b16 %v2192, %v2188
    %v2249 = vpack.c.b16 %v2193, %v2189
    %v2250 = vpack.c.b16 %v2194, %v2190
    %v2251 = vpack.c.b16 %v2199, %v2195
    %v2252 = vpack.c.b16 %v2200, %v2196
    %v2253 = vpack.c.b16 %v2201, %v2197
    %v2254 = vpack.c.b16 %v2202, %v2198
    %v2255 = vpack.c.b16 %v2207, %v2203
    %v2256 = vpack.c.b16 %v2208, %v2204
    %v2257 = vpack.c.b16 %v2209, %v2205
    %v2258 = vpack.c.b16 %v2210, %v2206
    %v2259 = vpack.c.b16 %v2215, %v2211
    %v2260 = vpack.c.b16 %v2216, %v2212
    %v2261 = vpack.c.b16 %v2217, %v2213
    %v2262 = vpack.c.b16 %v2218, %v2214
    %v2263 = vpack.c.b16 %v2223, %v2219
    %v2264 = vpack.c.b16 %v2224, %v2220
    %v2265 = vpack.c.b16 %v2225, %v2221
    %v2266 = vpack.c.b16 %v2226, %v2222
    %v2267 = vpack.c.b16 %v2231, %v2227
    %v2268 = vpack.c.b16 %v2232, %v2228
    %v2269 = vpack.c.b16 %v2233, %v2229
    %v2270 = vpack.c.b16 %v2234, %v2230
    %v2271 = vpack.c.b16 %v2239, %v2235
    %v2272 = vpack.c.b16 %v2240, %v2236
    %v2273 = vpack.c.b16 %v2241, %v2237
    %v2274 = vpack.c.b16 %v2242, %v2238
    %2307 = vmatprep.subr.bf16.mxu0 %v2244
    %2308 = vmatpush1.bf16.msra.mxu0 %v2243
    %2309 = vmatprep.subr.bf16.mxu0 %v2248
    %2310 = vmatpush1.bf16.msra.mxu0 %v2247
    %2311 = vmatprep.subr.bf16.mxu0 %v2252
    %2312 = vmatpush1.bf16.msra.mxu0 %v2251
    %2313 = vmatprep.subr.bf16.mxu0 %v2256
    %2314 = vmatpush1.bf16.msra.mxu0 %v2255
    %2315 = vmatprep.subr.bf16.mxu0 %v2260
    %2316 = vmatpush1.bf16.msra.mxu0 %v2259
    %2317 = vmatprep.subr.bf16.mxu0 %v2264
    %2318 = vmatpush1.bf16.msra.mxu0 %v2263
    %2319 = vmatprep.subr.bf16.mxu0 %v2268
    %2320 = vmatpush1.bf16.msra.mxu0 %v2267
    %2321 = vmatprep.subr.bf16.mxu0 %v2272
    %2322 = vmatpush1.bf16.msra.mxu0 %v2271
    %2323 = vmatprep.subr.bf16.mxu0 0
    %2324 = vmatpush1.bf16.msra.mxu0 0
    %2325 = vmatprep.subr.bf16.mxu0 0
    %2326 = vmatpush1.bf16.msra.mxu0 0
    %2327 = vmatprep.subr.bf16.mxu0 0
    %2328 = vmatpush1.bf16.msra.mxu0 0
    %2329 = vmatprep.subr.bf16.mxu0 0
    %2330 = vmatpush1.bf16.msra.mxu0 0
    %2331 = vmatprep.subr.bf16.mxu0 0
    %2332 = vmatpush1.bf16.msra.mxu0 0
    %2333 = vmatprep.subr.bf16.mxu0 0
    %2334 = vmatpush1.bf16.msra.mxu0 0
    %2335 = vmatprep.subr.bf16.mxu0 0
    %2336 = vmatpush1.bf16.msra.mxu0 0
    %2337 = vmatprep.subr.bf16.mxu0 0
    %2338 = vmatpush1.bf16.msra.mxu0 0
    %2339 = vmatprep.mubr.bf16.mxu0 0
    %2340 = vmatmul.mubr.bf16.gmra.mrb[0].mxu0 %v2114
    %v2341 = vpop.f32.mrb[0].mxu0
    %v2342 = vadd.f32 0.0, %v2341
    %v2343 = vpop.f32.mrb[0].mxu0
    %v2344 = vadd.f32 0.0, %v2343
    %v2345 = vpop.f32.mrb[0].mxu0
    %v2346 = vpop.f32.mrb[0].mxu0
    %2347 = vdwg.mxu0
    %2348 = vmatprep.subr.bf16.mxu0 %v2246
    %2349 = vmatpush1.bf16.msra.mxu0 %v2245
    %2350 = vmatprep.subr.bf16.mxu0 %v2250
    %2351 = vmatpush1.bf16.msra.mxu0 %v2249
    %2352 = vmatprep.subr.bf16.mxu0 %v2254
    %2353 = vmatpush1.bf16.msra.mxu0 %v2253
    %2354 = vmatprep.subr.bf16.mxu0 %v2258
    %2355 = vmatpush1.bf16.msra.mxu0 %v2257
    %2356 = vmatprep.subr.bf16.mxu0 %v2262
    %2357 = vmatpush1.bf16.msra.mxu0 %v2261
    %2358 = vmatprep.subr.bf16.mxu0 %v2266
    %2359 = vmatpush1.bf16.msra.mxu0 %v2265
    %2360 = vmatprep.subr.bf16.mxu0 %v2270
    %2361 = vmatpush1.bf16.msra.mxu0 %v2269
    %2362 = vmatprep.subr.bf16.mxu0 %v2274
    %2363 = vmatpush1.bf16.msra.mxu0 %v2273
    %2364 = vmatprep.subr.bf16.mxu0 0
    %2365 = vmatpush1.bf16.msra.mxu0 0
    %2366 = vmatprep.subr.bf16.mxu0 0
    %2367 = vmatpush1.bf16.msra.mxu0 0
    %2368 = vmatprep.subr.bf16.mxu0 0
    %2369 = vmatpush1.bf16.msra.mxu0 0
    %2370 = vmatprep.subr.bf16.mxu0 0
    %2371 = vmatpush1.bf16.msra.mxu0 0
    %2372 = vmatprep.subr.bf16.mxu0 0
    %2373 = vmatpush1.bf16.msra.mxu0 0
    %2374 = vmatprep.subr.bf16.mxu0 0
    %2375 = vmatpush1.bf16.msra.mxu0 0
    %2376 = vmatprep.subr.bf16.mxu0 0
    %2377 = vmatpush1.bf16.msra.mxu0 0
    %2378 = vmatprep.subr.bf16.mxu0 0
    %2379 = vmatpush1.bf16.msra.mxu0 0
    %2380 = vmatprep.mubr.bf16.mxu0 0
    %2381 = vmatmul.mubr.bf16.gmra.mrb[0].mxu0 %v2114
    %v2382 = vpop.f32.mrb[0].mxu0
    %v2383 = vadd.f32 0.0, %v2382
    %v2384 = vpop.f32.mrb[0].mxu0
    %v2385 = vadd.f32 0.0, %v2384
    %v2386 = vpop.f32.mrb[0].mxu0
    %v2387 = vpop.f32.mrb[0].mxu0
    %2388 = vdwg.mxu0
    %v2389 = vpack.c.bf16 %v2342, %v2342
    %v2390 = vpack.c.bf16 %v2344, %v2344
    %v2391 = vpack.c.bf16 %v2383, %v2383
    %v2392 = vpack.c.bf16 %v2385, %v2385
    %v2393 = vld [vmem:[%s7] sm:$0xf]
    %v2396 = vunpack.c.l.s4 1966171168
    %v2397 = vunpack.c.0.s8 %v2396
    %v2398 = vlaneseq
    %v2399 = vshrl.u32 %v2398, 7
    %v2400 = vsub.s32 %v2397, %v2399
    %v2401 = vrot.slane %v2393, %v2400
    %v2402 = vcombine.high %v2401, %v2401
    %v2404 = vunpack.c.l.s4 1966171168
    %v2405 = vunpack.c.0.s8 %v2404
    %v2406 = vlaneseq
    %v2407 = vshrl.u32 %v2406, 7
    %v2408 = vsub.s32 %v2405, %v2407
    %v2409 = vrot.slane %v2401, %v2408
    %v2411 = vunpack.c.l.s4 1966171168
    %v2412 = vunpack.c.0.s8 %v2411
    %v2413 = vlaneseq
    %v2414 = vshrl.u32 %v2413, 7
    %v2415 = vsub.s32 %v2412, %v2414
    %v2416 = vrot.slane %v2402, %v2415
    %v2417 = vcombine.high %v2409, %v2409
    %v2418 = vcombine.high %v2416, %v2416
    %v2420 = vpack.i.b16 %v2409, %v2409
    %v2422 = vlaneseq
    %v2423 = vshrl.u32 %v2422, 7
    %v2424 = vsub.s32 0, %v2423
    %v2425 = vrot.slane %v2420, %v2424
    %v2427 = vpack.i.b16 %v2416, %v2416
    %v2429 = vlaneseq
    %v2430 = vshrl.u32 %v2429, 7
    %v2431 = vsub.s32 0, %v2430
    %v2432 = vrot.slane %v2427, %v2431
    %v2434 = vpack.i.b16 %v2417, %v2417
    %v2436 = vlaneseq
    %v2437 = vshrl.u32 %v2436, 7
    %v2438 = vsub.s32 0, %v2437
    %v2439 = vrot.slane %v2434, %v2438
    %v2441 = vpack.i.b16 %v2418, %v2418
    %v2443 = vlaneseq
    %v2444 = vshrl.u32 %v2443, 7
    %v2445 = vsub.s32 0, %v2444
    %v2446 = vrot.slane %v2441, %v2445
    %v2447 = vadd.bf16 %v2389, %v2425
    %v2448 = vadd.bf16 %v2390, %v2432
    %v2449 = vadd.bf16 %v2391, %v2439
    %v2450 = vadd.bf16 %v2392, %v2446
    %v2451 = vmax.bf16 %v2447, 0
    %v2452 = vmax.bf16 %v2448, 0
    %v2453 = vmax.bf16 %v2449, 0
    %v2454 = vmax.bf16 %v2450, 0
    %v2455 = vld [vmem:[%s8] sm:$0xff]
    %v2456 = vld [vmem:[%s8 + $0x8] sm:$0xff]
    %v2457 = vld [vmem:[%s8 + $0x10] sm:$0xff]
    %v2458 = vld [vmem:[%s8 + $0x18] sm:$0xf]
    %v2459 = vld [vmem:[%s8 + $0x1c] sm:$0xff]
    %v2460 = vld [vmem:[%s8 + $0x24] sm:$0xff]
    %v2461 = vld [vmem:[%s8 + $0x2c] sm:$0xff]
    %v2462 = vld [vmem:[%s8 + $0x34] sm:$0xf]
    %v2463 = vld [vmem:[%s8 + $0x38] sm:$0xff]
    %v2464 = vld [vmem:[%s8 + $0x40] sm:$0xff]
    %v2465 = vld [vmem:[%s8 + $0x48] sm:$0xff]
    %v2466 = vld [vmem:[%s8 + $0x50] sm:$0xf]
    %v2467 = vld [vmem:[%s8 + $0x54] sm:$0xff]
    %v2468 = vld [vmem:[%s8 + $0x5c] sm:$0xff]
    %v2469 = vld [vmem:[%s8 + $0x64] sm:$0xff]
    %v2470 = vld [vmem:[%s8 + $0x6c] sm:$0xf]
    %v2471 = vld [vmem:[%s8 + $0x70] sm:$0xff]
    %v2472 = vld [vmem:[%s8 + $0x78] sm:$0xff]
    %v2473 = vld [vmem:[%s8 + $0x80] sm:$0xff]
    %v2474 = vld [vmem:[%s8 + $0x88] sm:$0xf]
    %v2475 = vld [vmem:[%s8 + $0x8c] sm:$0xff]
    %v2476 = vld [vmem:[%s8 + $0x94] sm:$0xff]
    %v2477 = vld [vmem:[%s8 + $0x9c] sm:$0xff]
    %v2478 = vld [vmem:[%s8 + $0xa4] sm:$0xf]
    %v2479 = vld [vmem:[%s8 + $0xa8] sm:$0xff]
    %v2480 = vld [vmem:[%s8 + $0xb0] sm:$0xff]
    %v2481 = vld [vmem:[%s8 + $0xb8] sm:$0xff]
    %v2482 = vld [vmem:[%s8 + $0xc0] sm:$0xf]
    %v2483 = vld [vmem:[%s8 + $0xc4] sm:$0xff]
    %v2484 = vld [vmem:[%s8 + $0xcc] sm:$0xff]
    %v2485 = vld [vmem:[%s8 + $0xd4] sm:$0xff]
    %v2486 = vld [vmem:[%s8 + $0xdc] sm:$0xf]
    %v2487 = vld [vmem:[%s8 + $0xe0] sm:$0xff]
    %v2488 = vld [vmem:[%s8 + $0xe8] sm:$0xff]
    %v2489 = vld [vmem:[%s8 + $0xf0] sm:$0xff]
    %v2490 = vld [vmem:[%s8 + $0xf8] sm:$0xf]
    %v2491 = vld [vmem:[%s8 + $0xfc] sm:$0xff]
    %v2492 = vld [vmem:[%s8 + $0x104] sm:$0xff]
    %v2493 = vld [vmem:[%s8 + $0x10c] sm:$0xff]
    %v2494 = vld [vmem:[%s8 + $0x114] sm:$0xf]
    %v2495 = vld [vmem:[%s8 + $0x118] sm:$0xff]
    %v2496 = vld [vmem:[%s8 + $0x120] sm:$0xff]
    %v2497 = vld [vmem:[%s8 + $0x128] sm:$0xff]
    %v2498 = vld [vmem:[%s8 + $0x130] sm:$0xf]
    %v2499 = vld [vmem:[%s8 + $0x134] sm:$0xff]
    %v2500 = vld [vmem:[%s8 + $0x13c] sm:$0xff]
    %v2501 = vld [vmem:[%s8 + $0x144] sm:$0xff]
    %v2502 = vld [vmem:[%s8 + $0x14c] sm:$0xf]
    %v2503 = vld [vmem:[%s8 + $0x150] sm:$0xff]
    %v2504 = vld [vmem:[%s8 + $0x158] sm:$0xff]
    %v2505 = vld [vmem:[%s8 + $0x160] sm:$0xff]
    %v2506 = vld [vmem:[%s8 + $0x168] sm:$0xf]
    %v2507 = vld [vmem:[%s8 + $0x16c] sm:$0xff]
    %v2508 = vld [vmem:[%s8 + $0x174] sm:$0xff]
    %v2509 = vld [vmem:[%s8 + $0x17c] sm:$0xff]
    %v2510 = vld [vmem:[%s8 + $0x184] sm:$0xf]
    %v2511 = vld [vmem:[%s8 + $0x188] sm:$0xff]
    %v2512 = vld [vmem:[%s8 + $0x190] sm:$0xff]
    %v2513 = vld [vmem:[%s8 + $0x198] sm:$0xff]
    %v2514 = vld [vmem:[%s8 + $0x1a0] sm:$0xf]
    %v2515 = vld [vmem:[%s8 + $0x1a4] sm:$0xff]
    %v2516 = vld [vmem:[%s8 + $0x1ac] sm:$0xff]
    %v2517 = vld [vmem:[%s8 + $0x1b4] sm:$0xff]
    %v2518 = vld [vmem:[%s8 + $0x1bc] sm:$0xf]
    %v2519 = vld [vmem:[%s8 + $0x1c0] sm:$0xff]
    %v2520 = vld [vmem:[%s8 + $0x1c8] sm:$0xff]
    %v2521 = vld [vmem:[%s8 + $0x1d0] sm:$0xff]
    %v2522 = vld [vmem:[%s8 + $0x1d8] sm:$0xf]
    %v2523 = vld [vmem:[%s8 + $0x1dc] sm:$0xff]
    %v2524 = vld [vmem:[%s8 + $0x1e4] sm:$0xff]
    %v2525 = vld [vmem:[%s8 + $0x1ec] sm:$0xff]
    %v2526 = vld [vmem:[%s8 + $0x1f4] sm:$0xf]
    %v2527 = vld [vmem:[%s8 + $0x1f8] sm:$0xff]
    %v2528 = vld [vmem:[%s8 + $0x200] sm:$0xff]
    %v2529 = vld [vmem:[%s8 + $0x208] sm:$0xff]
    %v2530 = vld [vmem:[%s8 + $0x210] sm:$0xf]
    %v2531 = vld [vmem:[%s8 + $0x214] sm:$0xff]
    %v2532 = vld [vmem:[%s8 + $0x21c] sm:$0xff]
    %v2533 = vld [vmem:[%s8 + $0x224] sm:$0xff]
    %v2534 = vld [vmem:[%s8 + $0x22c] sm:$0xf]
    %v2535 = vld [vmem:[%s8 + $0x230] sm:$0xff]
    %v2536 = vld [vmem:[%s8 + $0x238] sm:$0xff]
    %v2537 = vld [vmem:[%s8 + $0x240] sm:$0xff]
    %v2538 = vld [vmem:[%s8 + $0x248] sm:$0xf]
    %v2539 = vld [vmem:[%s8 + $0x24c] sm:$0xff]
    %v2540 = vld [vmem:[%s8 + $0x254] sm:$0xff]
    %v2541 = vld [vmem:[%s8 + $0x25c] sm:$0xff]
    %v2542 = vld [vmem:[%s8 + $0x264] sm:$0xf]
    %v2543 = vld [vmem:[%s8 + $0x268] sm:$0xff]
    %v2544 = vld [vmem:[%s8 + $0x270] sm:$0xff]
    %v2545 = vld [vmem:[%s8 + $0x278] sm:$0xff]
    %v2546 = vld [vmem:[%s8 + $0x280] sm:$0xf]
    %v2547 = vld [vmem:[%s8 + $0x284] sm:$0xff]
    %v2548 = vld [vmem:[%s8 + $0x28c] sm:$0xff]
    %v2549 = vld [vmem:[%s8 + $0x294] sm:$0xff]
    %v2550 = vld [vmem:[%s8 + $0x29c] sm:$0xf]
    %v2551 = vld [vmem:[%s8 + $0x2a0] sm:$0xff]
    %v2552 = vld [vmem:[%s8 + $0x2a8] sm:$0xff]
    %v2553 = vld [vmem:[%s8 + $0x2b0] sm:$0xff]
    %v2554 = vld [vmem:[%s8 + $0x2b8] sm:$0xf]
    %v2555 = vld [vmem:[%s8 + $0x2bc] sm:$0xff]
    %v2556 = vld [vmem:[%s8 + $0x2c4] sm:$0xff]
    %v2557 = vld [vmem:[%s8 + $0x2cc] sm:$0xff]
    %v2558 = vld [vmem:[%s8 + $0x2d4] sm:$0xf]
    %v2559 = vld [vmem:[%s8 + $0x2d8] sm:$0xff]
    %v2560 = vld [vmem:[%s8 + $0x2e0] sm:$0xff]
    %v2561 = vld [vmem:[%s8 + $0x2e8] sm:$0xff]
    %v2562 = vld [vmem:[%s8 + $0x2f0] sm:$0xf]
    %v2563 = vld [vmem:[%s8 + $0x2f4] sm:$0xff]
    %v2564 = vld [vmem:[%s8 + $0x2fc] sm:$0xff]
    %v2565 = vld [vmem:[%s8 + $0x304] sm:$0xff]
    %v2566 = vld [vmem:[%s8 + $0x30c] sm:$0xf]
    %v2567 = vld [vmem:[%s8 + $0x310] sm:$0xff]
    %v2568 = vld [vmem:[%s8 + $0x318] sm:$0xff]
    %v2569 = vld [vmem:[%s8 + $0x320] sm:$0xff]
    %v2570 = vld [vmem:[%s8 + $0x328] sm:$0xf]
    %v2571 = vld [vmem:[%s8 + $0x32c] sm:$0xff]
    %v2572 = vld [vmem:[%s8 + $0x334] sm:$0xff]
    %v2573 = vld [vmem:[%s8 + $0x33c] sm:$0xff]
    %v2574 = vld [vmem:[%s8 + $0x344] sm:$0xf]
    %v2575 = vld [vmem:[%s8 + $0x348] sm:$0xff]
    %v2576 = vld [vmem:[%s8 + $0x350] sm:$0xff]
    %v2577 = vld [vmem:[%s8 + $0x358] sm:$0xff]
    %v2578 = vld [vmem:[%s8 + $0x360] sm:$0xf]
    %v2579 = vld [vmem:[%s8 + $0x364] sm:$0xff]
    %v2580 = vld [vmem:[%s8 + $0x36c] sm:$0xff]
    %v2581 = vld [vmem:[%s8 + $0x374] sm:$0xff]
    %v2582 = vld [vmem:[%s8 + $0x37c] sm:$0xf]
    %v2583 = vld [vmem:[%s8 + $0x380] sm:$0xff]
    %v2584 = vld [vmem:[%s8 + $0x388] sm:$0xff]
    %v2585 = vld [vmem:[%s8 + $0x390] sm:$0xff]
    %v2586 = vld [vmem:[%s8 + $0x398] sm:$0xf]
    %v2587 = vld [vmem:[%s8 + $0x39c] sm:$0xff]
    %v2588 = vld [vmem:[%s8 + $0x3a4] sm:$0xff]
    %v2589 = vld [vmem:[%s8 + $0x3ac] sm:$0xff]
    %v2590 = vld [vmem:[%s8 + $0x3b4] sm:$0xf]
    %v2591 = vld [vmem:[%s8 + $0x3b8] sm:$0xff]
    %v2592 = vld [vmem:[%s8 + $0x3c0] sm:$0xff]
    %v2593 = vld [vmem:[%s8 + $0x3c8] sm:$0xff]
    %v2594 = vld [vmem:[%s8 + $0x3d0] sm:$0xf]
    %v2595 = vld [vmem:[%s8 + $0x3d4] sm:$0xff]
    %v2596 = vld [vmem:[%s8 + $0x3dc] sm:$0xff]
    %v2597 = vld [vmem:[%s8 + $0x3e4] sm:$0xff]
    %v2598 = vld [vmem:[%s8 + $0x3ec] sm:$0xf]
    %v2599 = vld [vmem:[%s8 + $0x3f0] sm:$0xff]
    %v2600 = vld [vmem:[%s8 + $0x3f8] sm:$0xff]
    %v2601 = vld [vmem:[%s8 + $0x400] sm:$0xff]
    %v2602 = vld [vmem:[%s8 + $0x408] sm:$0xf]
    %v2603 = vld [vmem:[%s8 + $0x40c] sm:$0xff]
    %v2604 = vld [vmem:[%s8 + $0x414] sm:$0xff]
    %v2605 = vld [vmem:[%s8 + $0x41c] sm:$0xff]
    %v2606 = vld [vmem:[%s8 + $0x424] sm:$0xf]
    %v2607 = vld [vmem:[%s8 + $0x428] sm:$0xff]
    %v2608 = vld [vmem:[%s8 + $0x430] sm:$0xff]
    %v2609 = vld [vmem:[%s8 + $0x438] sm:$0xff]
    %v2610 = vld [vmem:[%s8 + $0x440] sm:$0xf]
    %v2611 = vld [vmem:[%s8 + $0x444] sm:$0xff]
    %v2612 = vld [vmem:[%s8 + $0x44c] sm:$0xff]
    %v2613 = vld [vmem:[%s8 + $0x454] sm:$0xff]
    %v2614 = vld [vmem:[%s8 + $0x45c] sm:$0xf]
    %v2615 = vld [vmem:[%s8 + $0x460] sm:$0xff]
    %v2616 = vld [vmem:[%s8 + $0x468] sm:$0xff]
    %v2617 = vld [vmem:[%s8 + $0x470] sm:$0xff]
    %v2618 = vld [vmem:[%s8 + $0x478] sm:$0xf]
    %v2619 = vld [vmem:[%s8 + $0x47c] sm:$0xff]
    %v2620 = vld [vmem:[%s8 + $0x484] sm:$0xff]
    %v2621 = vld [vmem:[%s8 + $0x48c] sm:$0xff]
    %v2622 = vld [vmem:[%s8 + $0x494] sm:$0xf]
    %v2623 = vld [vmem:[%s8 + $0x498] sm:$0xff]
    %v2624 = vld [vmem:[%s8 + $0x4a0] sm:$0xff]
    %v2625 = vld [vmem:[%s8 + $0x4a8] sm:$0xff]
    %v2626 = vld [vmem:[%s8 + $0x4b0] sm:$0xf]
    %v2627 = vld [vmem:[%s8 + $0x4b4] sm:$0xff]
    %v2628 = vld [vmem:[%s8 + $0x4bc] sm:$0xff]
    %v2629 = vld [vmem:[%s8 + $0x4c4] sm:$0xff]
    %v2630 = vld [vmem:[%s8 + $0x4cc] sm:$0xf]
    %v2631 = vld [vmem:[%s8 + $0x4d0] sm:$0xff]
    %v2632 = vld [vmem:[%s8 + $0x4d8] sm:$0xff]
    %v2633 = vld [vmem:[%s8 + $0x4e0] sm:$0xff]
    %v2634 = vld [vmem:[%s8 + $0x4e8] sm:$0xf]
    %v2635 = vld [vmem:[%s8 + $0x4ec] sm:$0xff]
    %v2636 = vld [vmem:[%s8 + $0x4f4] sm:$0xff]
    %v2637 = vld [vmem:[%s8 + $0x4fc] sm:$0xff]
    %v2638 = vld [vmem:[%s8 + $0x504] sm:$0xf]
    %v2639 = vld [vmem:[%s8 + $0x508] sm:$0xff]
    %v2640 = vld [vmem:[%s8 + $0x510] sm:$0xff]
    %v2641 = vld [vmem:[%s8 + $0x518] sm:$0xff]
    %v2642 = vld [vmem:[%s8 + $0x520] sm:$0xf]
    %v2643 = vld [vmem:[%s8 + $0x524] sm:$0xff]
    %v2644 = vld [vmem:[%s8 + $0x52c] sm:$0xff]
    %v2645 = vld [vmem:[%s8 + $0x534] sm:$0xff]
    %v2646 = vld [vmem:[%s8 + $0x53c] sm:$0xf]
    %v2647 = vld [vmem:[%s8 + $0x540] sm:$0xff]
    %v2648 = vld [vmem:[%s8 + $0x548] sm:$0xff]
    %v2649 = vld [vmem:[%s8 + $0x550] sm:$0xff]
    %v2650 = vld [vmem:[%s8 + $0x558] sm:$0xf]
    %v2651 = vld [vmem:[%s8 + $0x55c] sm:$0xff]
    %v2652 = vld [vmem:[%s8 + $0x564] sm:$0xff]
    %v2653 = vld [vmem:[%s8 + $0x56c] sm:$0xff]
    %v2654 = vld [vmem:[%s8 + $0x574] sm:$0xf]
    %v2655 = vld [vmem:[%s8 + $0x578] sm:$0xff]
    %v2656 = vld [vmem:[%s8 + $0x580] sm:$0xff]
    %v2657 = vld [vmem:[%s8 + $0x588] sm:$0xff]
    %v2658 = vld [vmem:[%s8 + $0x590] sm:$0xf]
    %v2659 = vld [vmem:[%s8 + $0x594] sm:$0xff]
    %v2660 = vld [vmem:[%s8 + $0x59c] sm:$0xff]
    %v2661 = vld [vmem:[%s8 + $0x5a4] sm:$0xff]
    %v2662 = vld [vmem:[%s8 + $0x5ac] sm:$0xf]
    %v2663 = vld [vmem:[%s8 + $0x5b0] sm:$0xff]
    %v2664 = vld [vmem:[%s8 + $0x5b8] sm:$0xff]
    %v2665 = vld [vmem:[%s8 + $0x5c0] sm:$0xff]
    %v2666 = vld [vmem:[%s8 + $0x5c8] sm:$0xf]
    %v2667 = vld [vmem:[%s8 + $0x5cc] sm:$0xff]
    %v2668 = vld [vmem:[%s8 + $0x5d4] sm:$0xff]
    %v2669 = vld [vmem:[%s8 + $0x5dc] sm:$0xff]
    %v2670 = vld [vmem:[%s8 + $0x5e4] sm:$0xf]
    %v2671 = vld [vmem:[%s8 + $0x5e8] sm:$0xff]
    %v2672 = vld [vmem:[%s8 + $0x5f0] sm:$0xff]
    %v2673 = vld [vmem:[%s8 + $0x5f8] sm:$0xff]
    %v2674 = vld [vmem:[%s8 + $0x600] sm:$0xf]
    %v2675 = vld [vmem:[%s8 + $0x604] sm:$0xff]
    %v2676 = vld [vmem:[%s8 + $0x60c] sm:$0xff]
    %v2677 = vld [vmem:[%s8 + $0x614] sm:$0xff]
    %v2678 = vld [vmem:[%s8 + $0x61c] sm:$0xf]
    %v2679 = vld [vmem:[%s8 + $0x620] sm:$0xff]
    %v2680 = vld [vmem:[%s8 + $0x628] sm:$0xff]
    %v2681 = vld [vmem:[%s8 + $0x630] sm:$0xff]
    %v2682 = vld [vmem:[%s8 + $0x638] sm:$0xf]
    %v2683 = vld [vmem:[%s8 + $0x63c] sm:$0xff]
    %v2684 = vld [vmem:[%s8 + $0x644] sm:$0xff]
    %v2685 = vld [vmem:[%s8 + $0x64c] sm:$0xff]
    %v2686 = vld [vmem:[%s8 + $0x654] sm:$0xf]
    %v2687 = vld [vmem:[%s8 + $0x658] sm:$0xff]
    %v2688 = vld [vmem:[%s8 + $0x660] sm:$0xff]
    %v2689 = vld [vmem:[%s8 + $0x668] sm:$0xff]
    %v2690 = vld [vmem:[%s8 + $0x670] sm:$0xf]
    %v2691 = vld [vmem:[%s8 + $0x674] sm:$0xff]
    %v2692 = vld [vmem:[%s8 + $0x67c] sm:$0xff]
    %v2693 = vld [vmem:[%s8 + $0x684] sm:$0xff]
    %v2694 = vld [vmem:[%s8 + $0x68c] sm:$0xf]
    %v2695 = vld [vmem:[%s8 + $0x690] sm:$0xff]
    %v2696 = vld [vmem:[%s8 + $0x698] sm:$0xff]
    %v2697 = vld [vmem:[%s8 + $0x6a0] sm:$0xff]
    %v2698 = vld [vmem:[%s8 + $0x6a8] sm:$0xf]
    %v2699 = vld [vmem:[%s8 + $0x6ac] sm:$0xff]
    %v2700 = vld [vmem:[%s8 + $0x6b4] sm:$0xff]
    %v2701 = vld [vmem:[%s8 + $0x6bc] sm:$0xff]
    %v2702 = vld [vmem:[%s8 + $0x6c4] sm:$0xf]
    %v2703 = vld [vmem:[%s8 + $0x6c8] sm:$0xff]
    %v2704 = vld [vmem:[%s8 + $0x6d0] sm:$0xff]
    %v2705 = vld [vmem:[%s8 + $0x6d8] sm:$0xff]
    %v2706 = vld [vmem:[%s8 + $0x6e0] sm:$0xf]
    %v2707 = vld [vmem:[%s8 + $0x6e4] sm:$0xff]
    %v2708 = vld [vmem:[%s8 + $0x6ec] sm:$0xff]
    %v2709 = vld [vmem:[%s8 + $0x6f4] sm:$0xff]
    %v2710 = vld [vmem:[%s8 + $0x6fc] sm:$0xf]
    %v2967 = vunpack.c.l.b16 %v2455
    %v2968 = vunpack.c.h.b16 %v2455
    %v2969 = vunpack.c.l.b16 %v2456
    %v2970 = vunpack.c.h.b16 %v2456
    %v2971 = vunpack.c.l.b16 %v2457
    %v2972 = vunpack.c.h.b16 %v2457
    %v2973 = vunpack.c.l.b16 %v2458
    %v2974 = vunpack.c.l.b16 %v2459
    %v2975 = vunpack.c.h.b16 %v2459
    %v2976 = vunpack.c.l.b16 %v2460
    %v2977 = vunpack.c.h.b16 %v2460
    %v2978 = vunpack.c.l.b16 %v2461
    %v2979 = vunpack.c.h.b16 %v2461
    %v2980 = vunpack.c.l.b16 %v2462
    %v2981 = vunpack.c.l.b16 %v2463
    %v2982 = vunpack.c.h.b16 %v2463
    %v2983 = vunpack.c.l.b16 %v2464
    %v2984 = vunpack.c.h.b16 %v2464
    %v2985 = vunpack.c.l.b16 %v2465
    %v2986 = vunpack.c.h.b16 %v2465
    %v2987 = vunpack.c.l.b16 %v2466
    %v2988 = vunpack.c.l.b16 %v2467
    %v2989 = vunpack.c.h.b16 %v2467
    %v2990 = vunpack.c.l.b16 %v2468
    %v2991 = vunpack.c.h.b16 %v2468
    %v2992 = vunpack.c.l.b16 %v2469
    %v2993 = vunpack.c.h.b16 %v2469
    %v2994 = vunpack.c.l.b16 %v2470
    %v2995 = vunpack.c.l.b16 %v2471
    %v2996 = vunpack.c.h.b16 %v2471
    %v2997 = vunpack.c.l.b16 %v2472
    %v2998 = vunpack.c.h.b16 %v2472
    %v2999 = vunpack.c.l.b16 %v2473
    %v3000 = vunpack.c.h.b16 %v2473
    %v3001 = vunpack.c.l.b16 %v2474
    %v3002 = vunpack.c.l.b16 %v2475
    %v3003 = vunpack.c.h.b16 %v2475
    %v3004 = vunpack.c.l.b16 %v2476
    %v3005 = vunpack.c.h.b16 %v2476
    %v3006 = vunpack.c.l.b16 %v2477
    %v3007 = vunpack.c.h.b16 %v2477
    %v3008 = vunpack.c.l.b16 %v2478
    %v3009 = vunpack.c.l.b16 %v2479
    %v3010 = vunpack.c.h.b16 %v2479
    %v3011 = vunpack.c.l.b16 %v2480
    %v3012 = vunpack.c.h.b16 %v2480
    %v3013 = vunpack.c.l.b16 %v2481
    %v3014 = vunpack.c.h.b16 %v2481
    %v3015 = vunpack.c.l.b16 %v2482
    %v3016 = vunpack.c.l.b16 %v2483
    %v3017 = vunpack.c.h.b16 %v2483
    %v3018 = vunpack.c.l.b16 %v2484
    %v3019 = vunpack.c.h.b16 %v2484
    %v3020 = vunpack.c.l.b16 %v2485
    %v3021 = vunpack.c.h.b16 %v2485
    %v3022 = vunpack.c.l.b16 %v2486
    %v3023 = vunpack.c.l.b16 %v2487
    %v3024 = vunpack.c.h.b16 %v2487
    %v3025 = vunpack.c.l.b16 %v2488
    %v3026 = vunpack.c.h.b16 %v2488
    %v3027 = vunpack.c.l.b16 %v2489
    %v3028 = vunpack.c.h.b16 %v2489
    %v3029 = vunpack.c.l.b16 %v2490
    %v3030 = vunpack.c.l.b16 %v2491
    %v3031 = vunpack.c.h.b16 %v2491
    %v3032 = vunpack.c.l.b16 %v2492
    %v3033 = vunpack.c.h.b16 %v2492
    %v3034 = vunpack.c.l.b16 %v2493
    %v3035 = vunpack.c.h.b16 %v2493
    %v3036 = vunpack.c.l.b16 %v2494
    %v3037 = vunpack.c.l.b16 %v2495
    %v3038 = vunpack.c.h.b16 %v2495
    %v3039 = vunpack.c.l.b16 %v2496
    %v3040 = vunpack.c.h.b16 %v2496
    %v3041 = vunpack.c.l.b16 %v2497
    %v3042 = vunpack.c.h.b16 %v2497
    %v3043 = vunpack.c.l.b16 %v2498
    %v3044 = vunpack.c.l.b16 %v2499
    %v3045 = vunpack.c.h.b16 %v2499
    %v3046 = vunpack.c.l.b16 %v2500
    %v3047 = vunpack.c.h.b16 %v2500
    %v3048 = vunpack.c.l.b16 %v2501
    %v3049 = vunpack.c.h.b16 %v2501
    %v3050 = vunpack.c.l.b16 %v2502
    %v3051 = vunpack.c.l.b16 %v2503
    %v3052 = vunpack.c.h.b16 %v2503
    %v3053 = vunpack.c.l.b16 %v2504
    %v3054 = vunpack.c.h.b16 %v2504
    %v3055 = vunpack.c.l.b16 %v2505
    %v3056 = vunpack.c.h.b16 %v2505
    %v3057 = vunpack.c.l.b16 %v2506
    %v3058 = vunpack.c.l.b16 %v2507
    %v3059 = vunpack.c.h.b16 %v2507
    %v3060 = vunpack.c.l.b16 %v2508
    %v3061 = vunpack.c.h.b16 %v2508
    %v3062 = vunpack.c.l.b16 %v2509
    %v3063 = vunpack.c.h.b16 %v2509
    %v3064 = vunpack.c.l.b16 %v2510
    %v3065 = vunpack.c.l.b16 %v2511
    %v3066 = vunpack.c.h.b16 %v2511
    %v3067 = vunpack.c.l.b16 %v2512
    %v3068 = vunpack.c.h.b16 %v2512
    %v3069 = vunpack.c.l.b16 %v2513
    %v3070 = vunpack.c.h.b16 %v2513
    %v3071 = vunpack.c.l.b16 %v2514
    %v3072 = vunpack.c.l.b16 %v2515
    %v3073 = vunpack.c.h.b16 %v2515
    %v3074 = vunpack.c.l.b16 %v2516
    %v3075 = vunpack.c.h.b16 %v2516
    %v3076 = vunpack.c.l.b16 %v2517
    %v3077 = vunpack.c.h.b16 %v2517
    %v3078 = vunpack.c.l.b16 %v2518
    %v3079 = vunpack.c.l.b16 %v2519
    %v3080 = vunpack.c.h.b16 %v2519
    %v3081 = vunpack.c.l.b16 %v2520
    %v3082 = vunpack.c.h.b16 %v2520
    %v3083 = vunpack.c.l.b16 %v2521
    %v3084 = vunpack.c.h.b16 %v2521
    %v3085 = vunpack.c.l.b16 %v2522
    %v3086 = vunpack.c.l.b16 %v2523
    %v3087 = vunpack.c.h.b16 %v2523
    %v3088 = vunpack.c.l.b16 %v2524
    %v3089 = vunpack.c.h.b16 %v2524
    %v3090 = vunpack.c.l.b16 %v2525
    %v3091 = vunpack.c.h.b16 %v2525
    %v3092 = vunpack.c.l.b16 %v2526
    %v3093 = vunpack.c.l.b16 %v2527
    %v3094 = vunpack.c.h.b16 %v2527
    %v3095 = vunpack.c.l.b16 %v2528
    %v3096 = vunpack.c.h.b16 %v2528
    %v3097 = vunpack.c.l.b16 %v2529
    %v3098 = vunpack.c.h.b16 %v2529
    %v3099 = vunpack.c.l.b16 %v2530
    %v3100 = vunpack.c.l.b16 %v2531
    %v3101 = vunpack.c.h.b16 %v2531
    %v3102 = vunpack.c.l.b16 %v2532
    %v3103 = vunpack.c.h.b16 %v2532
    %v3104 = vunpack.c.l.b16 %v2533
    %v3105 = vunpack.c.h.b16 %v2533
    %v3106 = vunpack.c.l.b16 %v2534
    %v3107 = vunpack.c.l.b16 %v2535
    %v3108 = vunpack.c.h.b16 %v2535
    %v3109 = vunpack.c.l.b16 %v2536
    %v3110 = vunpack.c.h.b16 %v2536
    %v3111 = vunpack.c.l.b16 %v2537
    %v3112 = vunpack.c.h.b16 %v2537
    %v3113 = vunpack.c.l.b16 %v2538
    %v3114 = vunpack.c.l.b16 %v2539
    %v3115 = vunpack.c.h.b16 %v2539
    %v3116 = vunpack.c.l.b16 %v2540
    %v3117 = vunpack.c.h.b16 %v2540
    %v3118 = vunpack.c.l.b16 %v2541
    %v3119 = vunpack.c.h.b16 %v2541
    %v3120 = vunpack.c.l.b16 %v2542
    %v3121 = vunpack.c.l.b16 %v2543
    %v3122 = vunpack.c.h.b16 %v2543
    %v3123 = vunpack.c.l.b16 %v2544
    %v3124 = vunpack.c.h.b16 %v2544
    %v3125 = vunpack.c.l.b16 %v2545
    %v3126 = vunpack.c.h.b16 %v2545
    %v3127 = vunpack.c.l.b16 %v2546
    %v3128 = vunpack.c.l.b16 %v2547
    %v3129 = vunpack.c.h.b16 %v2547
    %v3130 = vunpack.c.l.b16 %v2548
    %v3131 = vunpack.c.h.b16 %v2548
    %v3132 = vunpack.c.l.b16 %v2549
    %v3133 = vunpack.c.h.b16 %v2549
    %v3134 = vunpack.c.l.b16 %v2550
    %v3135 = vunpack.c.l.b16 %v2551
    %v3136 = vunpack.c.h.b16 %v2551
    %v3137 = vunpack.c.l.b16 %v2552
    %v3138 = vunpack.c.h.b16 %v2552
    %v3139 = vunpack.c.l.b16 %v2553
    %v3140 = vunpack.c.h.b16 %v2553
    %v3141 = vunpack.c.l.b16 %v2554
    %v3142 = vunpack.c.l.b16 %v2555
    %v3143 = vunpack.c.h.b16 %v2555
    %v3144 = vunpack.c.l.b16 %v2556
    %v3145 = vunpack.c.h.b16 %v2556
    %v3146 = vunpack.c.l.b16 %v2557
    %v3147 = vunpack.c.h.b16 %v2557
    %v3148 = vunpack.c.l.b16 %v2558
    %v3149 = vunpack.c.l.b16 %v2559
    %v3150 = vunpack.c.h.b16 %v2559
    %v3151 = vunpack.c.l.b16 %v2560
    %v3152 = vunpack.c.h.b16 %v2560
    %v3153 = vunpack.c.l.b16 %v2561
    %v3154 = vunpack.c.h.b16 %v2561
    %v3155 = vunpack.c.l.b16 %v2562
    %v3156 = vunpack.c.l.b16 %v2563
    %v3157 = vunpack.c.h.b16 %v2563
    %v3158 = vunpack.c.l.b16 %v2564
    %v3159 = vunpack.c.h.b16 %v2564
    %v3160 = vunpack.c.l.b16 %v2565
    %v3161 = vunpack.c.h.b16 %v2565
    %v3162 = vunpack.c.l.b16 %v2566
    %v3163 = vunpack.c.l.b16 %v2567
    %v3164 = vunpack.c.h.b16 %v2567
    %v3165 = vunpack.c.l.b16 %v2568
    %v3166 = vunpack.c.h.b16 %v2568
    %v3167 = vunpack.c.l.b16 %v2569
    %v3168 = vunpack.c.h.b16 %v2569
    %v3169 = vunpack.c.l.b16 %v2570
    %v3170 = vunpack.c.l.b16 %v2571
    %v3171 = vunpack.c.h.b16 %v2571
    %v3172 = vunpack.c.l.b16 %v2572
    %v3173 = vunpack.c.h.b16 %v2572
    %v3174 = vunpack.c.l.b16 %v2573
    %v3175 = vunpack.c.h.b16 %v2573
    %v3176 = vunpack.c.l.b16 %v2574
    %v3177 = vunpack.c.l.b16 %v2575
    %v3178 = vunpack.c.h.b16 %v2575
    %v3179 = vunpack.c.l.b16 %v2576
    %v3180 = vunpack.c.h.b16 %v2576
    %v3181 = vunpack.c.l.b16 %v2577
    %v3182 = vunpack.c.h.b16 %v2577
    %v3183 = vunpack.c.l.b16 %v2578
    %v3184 = vunpack.c.l.b16 %v2579
    %v3185 = vunpack.c.h.b16 %v2579
    %v3186 = vunpack.c.l.b16 %v2580
    %v3187 = vunpack.c.h.b16 %v2580
    %v3188 = vunpack.c.l.b16 %v2581
    %v3189 = vunpack.c.h.b16 %v2581
    %v3190 = vunpack.c.l.b16 %v2582
    %v3191 = vunpack.c.l.b16 %v2583
    %v3192 = vunpack.c.h.b16 %v2583
    %v3193 = vunpack.c.l.b16 %v2584
    %v3194 = vunpack.c.h.b16 %v2584
    %v3195 = vunpack.c.l.b16 %v2585
    %v3196 = vunpack.c.h.b16 %v2585
    %v3197 = vunpack.c.l.b16 %v2586
    %v3198 = vunpack.c.l.b16 %v2587
    %v3199 = vunpack.c.h.b16 %v2587
    %v3200 = vunpack.c.l.b16 %v2588
    %v3201 = vunpack.c.h.b16 %v2588
    %v3202 = vunpack.c.l.b16 %v2589
    %v3203 = vunpack.c.h.b16 %v2589
    %v3204 = vunpack.c.l.b16 %v2590
    %v3205 = vunpack.c.l.b16 %v2591
    %v3206 = vunpack.c.h.b16 %v2591
    %v3207 = vunpack.c.l.b16 %v2592
    %v3208 = vunpack.c.h.b16 %v2592
    %v3209 = vunpack.c.l.b16 %v2593
    %v3210 = vunpack.c.h.b16 %v2593
    %v3211 = vunpack.c.l.b16 %v2594
    %v3212 = vunpack.c.l.b16 %v2595
    %v3213 = vunpack.c.h.b16 %v2595
    %v3214 = vunpack.c.l.b16 %v2596
    %v3215 = vunpack.c.h.b16 %v2596
    %v3216 = vunpack.c.l.b16 %v2597
    %v3217 = vunpack.c.h.b16 %v2597
    %v3218 = vunpack.c.l.b16 %v2598
    %v3219 = vunpack.c.l.b16 %v2599
    %v3220 = vunpack.c.h.b16 %v2599
    %v3221 = vunpack.c.l.b16 %v2600
    %v3222 = vunpack.c.h.b16 %v2600
    %v3223 = vunpack.c.l.b16 %v2601
    %v3224 = vunpack.c.h.b16 %v2601
    %v3225 = vunpack.c.l.b16 %v2602
    %v3226 = vunpack.c.l.b16 %v2603
    %v3227 = vunpack.c.h.b16 %v2603
    %v3228 = vunpack.c.l.b16 %v2604
    %v3229 = vunpack.c.h.b16 %v2604
    %v3230 = vunpack.c.l.b16 %v2605
    %v3231 = vunpack.c.h.b16 %v2605
    %v3232 = vunpack.c.l.b16 %v2606
    %v3233 = vunpack.c.l.b16 %v2607
    %v3234 = vunpack.c.h.b16 %v2607
    %v3235 = vunpack.c.l.b16 %v2608
    %v3236 = vunpack.c.h.b16 %v2608
    %v3237 = vunpack.c.l.b16 %v2609
    %v3238 = vunpack.c.h.b16 %v2609
    %v3239 = vunpack.c.l.b16 %v2610
    %v3240 = vunpack.c.l.b16 %v2611
    %v3241 = vunpack.c.h.b16 %v2611
    %v3242 = vunpack.c.l.b16 %v2612
    %v3243 = vunpack.c.h.b16 %v2612
    %v3244 = vunpack.c.l.b16 %v2613
    %v3245 = vunpack.c.h.b16 %v2613
    %v3246 = vunpack.c.l.b16 %v2614
    %v3247 = vunpack.c.l.b16 %v2615
    %v3248 = vunpack.c.h.b16 %v2615
    %v3249 = vunpack.c.l.b16 %v2616
    %v3250 = vunpack.c.h.b16 %v2616
    %v3251 = vunpack.c.l.b16 %v2617
    %v3252 = vunpack.c.h.b16 %v2617
    %v3253 = vunpack.c.l.b16 %v2618
    %v3254 = vunpack.c.l.b16 %v2619
    %v3255 = vunpack.c.h.b16 %v2619
    %v3256 = vunpack.c.l.b16 %v2620
    %v3257 = vunpack.c.h.b16 %v2620
    %v3258 = vunpack.c.l.b16 %v2621
    %v3259 = vunpack.c.h.b16 %v2621
    %v3260 = vunpack.c.l.b16 %v2622
    %v3261 = vunpack.c.l.b16 %v2623
    %v3262 = vunpack.c.h.b16 %v2623
    %v3263 = vunpack.c.l.b16 %v2624
    %v3264 = vunpack.c.h.b16 %v2624
    %v3265 = vunpack.c.l.b16 %v2625
    %v3266 = vunpack.c.h.b16 %v2625
    %v3267 = vunpack.c.l.b16 %v2626
    %v3268 = vunpack.c.l.b16 %v2627
    %v3269 = vunpack.c.h.b16 %v2627
    %v3270 = vunpack.c.l.b16 %v2628
    %v3271 = vunpack.c.h.b16 %v2628
    %v3272 = vunpack.c.l.b16 %v2629
    %v3273 = vunpack.c.h.b16 %v2629
    %v3274 = vunpack.c.l.b16 %v2630
    %v3275 = vunpack.c.l.b16 %v2631
    %v3276 = vunpack.c.h.b16 %v2631
    %v3277 = vunpack.c.l.b16 %v2632
    %v3278 = vunpack.c.h.b16 %v2632
    %v3279 = vunpack.c.l.b16 %v2633
    %v3280 = vunpack.c.h.b16 %v2633
    %v3281 = vunpack.c.l.b16 %v2634
    %v3282 = vunpack.c.l.b16 %v2635
    %v3283 = vunpack.c.h.b16 %v2635
    %v3284 = vunpack.c.l.b16 %v2636
    %v3285 = vunpack.c.h.b16 %v2636
    %v3286 = vunpack.c.l.b16 %v2637
    %v3287 = vunpack.c.h.b16 %v2637
    %v3288 = vunpack.c.l.b16 %v2638
    %v3289 = vunpack.c.l.b16 %v2639
    %v3290 = vunpack.c.h.b16 %v2639
    %v3291 = vunpack.c.l.b16 %v2640
    %v3292 = vunpack.c.h.b16 %v2640
    %v3293 = vunpack.c.l.b16 %v2641
    %v3294 = vunpack.c.h.b16 %v2641
    %v3295 = vunpack.c.l.b16 %v2642
    %v3296 = vunpack.c.l.b16 %v2643
    %v3297 = vunpack.c.h.b16 %v2643
    %v3298 = vunpack.c.l.b16 %v2644
    %v3299 = vunpack.c.h.b16 %v2644
    %v3300 = vunpack.c.l.b16 %v2645
    %v3301 = vunpack.c.h.b16 %v2645
    %v3302 = vunpack.c.l.b16 %v2646
    %v3303 = vunpack.c.l.b16 %v2647
    %v3304 = vunpack.c.h.b16 %v2647
    %v3305 = vunpack.c.l.b16 %v2648
    %v3306 = vunpack.c.h.b16 %v2648
    %v3307 = vunpack.c.l.b16 %v2649
    %v3308 = vunpack.c.h.b16 %v2649
    %v3309 = vunpack.c.l.b16 %v2650
    %v3310 = vunpack.c.l.b16 %v2651
    %v3311 = vunpack.c.h.b16 %v2651
    %v3312 = vunpack.c.l.b16 %v2652
    %v3313 = vunpack.c.h.b16 %v2652
    %v3314 = vunpack.c.l.b16 %v2653
    %v3315 = vunpack.c.h.b16 %v2653
    %v3316 = vunpack.c.l.b16 %v2654
    %v3317 = vunpack.c.l.b16 %v2655
    %v3318 = vunpack.c.h.b16 %v2655
    %v3319 = vunpack.c.l.b16 %v2656
    %v3320 = vunpack.c.h.b16 %v2656
    %v3321 = vunpack.c.l.b16 %v2657
    %v3322 = vunpack.c.h.b16 %v2657
    %v3323 = vunpack.c.l.b16 %v2658
    %v3324 = vunpack.c.l.b16 %v2659
    %v3325 = vunpack.c.h.b16 %v2659
    %v3326 = vunpack.c.l.b16 %v2660
    %v3327 = vunpack.c.h.b16 %v2660
    %v3328 = vunpack.c.l.b16 %v2661
    %v3329 = vunpack.c.h.b16 %v2661
    %v3330 = vunpack.c.l.b16 %v2662
    %v3331 = vunpack.c.l.b16 %v2663
    %v3332 = vunpack.c.h.b16 %v2663
    %v3333 = vunpack.c.l.b16 %v2664
    %v3334 = vunpack.c.h.b16 %v2664
    %v3335 = vunpack.c.l.b16 %v2665
    %v3336 = vunpack.c.h.b16 %v2665
    %v3337 = vunpack.c.l.b16 %v2666
    %v3338 = vunpack.c.l.b16 %v2667
    %v3339 = vunpack.c.h.b16 %v2667
    %v3340 = vunpack.c.l.b16 %v2668
    %v3341 = vunpack.c.h.b16 %v2668
    %v3342 = vunpack.c.l.b16 %v2669
    %v3343 = vunpack.c.h.b16 %v2669
    %v3344 = vunpack.c.l.b16 %v2670
    %v3345 = vunpack.c.l.b16 %v2671
    %v3346 = vunpack.c.h.b16 %v2671
    %v3347 = vunpack.c.l.b16 %v2672
    %v3348 = vunpack.c.h.b16 %v2672
    %v3349 = vunpack.c.l.b16 %v2673
    %v3350 = vunpack.c.h.b16 %v2673
    %v3351 = vunpack.c.l.b16 %v2674
    %v3352 = vunpack.c.l.b16 %v2675
    %v3353 = vunpack.c.h.b16 %v2675
    %v3354 = vunpack.c.l.b16 %v2676
    %v3355 = vunpack.c.h.b16 %v2676
    %v3356 = vunpack.c.l.b16 %v2677
    %v3357 = vunpack.c.h.b16 %v2677
    %v3358 = vunpack.c.l.b16 %v2678
    %v3359 = vunpack.c.l.b16 %v2679
    %v3360 = vunpack.c.h.b16 %v2679
    %v3361 = vunpack.c.l.b16 %v2680
    %v3362 = vunpack.c.h.b16 %v2680
    %v3363 = vunpack.c.l.b16 %v2681
    %v3364 = vunpack.c.h.b16 %v2681
    %v3365 = vunpack.c.l.b16 %v2682
    %v3366 = vunpack.c.l.b16 %v2683
    %v3367 = vunpack.c.h.b16 %v2683
    %v3368 = vunpack.c.l.b16 %v2684
    %v3369 = vunpack.c.h.b16 %v2684
    %v3370 = vunpack.c.l.b16 %v2685
    %v3371 = vunpack.c.h.b16 %v2685
    %v3372 = vunpack.c.l.b16 %v2686
    %v3373 = vunpack.c.l.b16 %v2687
    %v3374 = vunpack.c.h.b16 %v2687
    %v3375 = vunpack.c.l.b16 %v2688
    %v3376 = vunpack.c.h.b16 %v2688
    %v3377 = vunpack.c.l.b16 %v2689
    %v3378 = vunpack.c.h.b16 %v2689
    %v3379 = vunpack.c.l.b16 %v2690
    %v3380 = vunpack.c.l.b16 %v2691
    %v3381 = vunpack.c.h.b16 %v2691
    %v3382 = vunpack.c.l.b16 %v2692
    %v3383 = vunpack.c.h.b16 %v2692
    %v3384 = vunpack.c.l.b16 %v2693
    %v3385 = vunpack.c.h.b16 %v2693
    %v3386 = vunpack.c.l.b16 %v2694
    %v3387 = vunpack.c.l.b16 %v2695
    %v3388 = vunpack.c.h.b16 %v2695
    %v3389 = vunpack.c.l.b16 %v2696
    %v3390 = vunpack.c.h.b16 %v2696
    %v3391 = vunpack.c.l.b16 %v2697
    %v3392 = vunpack.c.h.b16 %v2697
    %v3393 = vunpack.c.l.b16 %v2698
    %v3394 = vunpack.c.l.b16 %v2699
    %v3395 = vunpack.c.h.b16 %v2699
    %v3396 = vunpack.c.l.b16 %v2700
    %v3397 = vunpack.c.h.b16 %v2700
    %v3398 = vunpack.c.l.b16 %v2701
    %v3399 = vunpack.c.h.b16 %v2701
    %v3400 = vunpack.c.l.b16 %v2702
    %v3401 = vunpack.c.l.b16 %v2703
    %v3402 = vunpack.c.h.b16 %v2703
    %v3403 = vunpack.c.l.b16 %v2704
    %v3404 = vunpack.c.h.b16 %v2704
    %v3405 = vunpack.c.l.b16 %v2705
    %v3406 = vunpack.c.h.b16 %v2705
    %v3407 = vunpack.c.l.b16 %v2706
    %v3408 = vunpack.c.l.b16 %v2707
    %v3409 = vunpack.c.h.b16 %v2707
    %v3410 = vunpack.c.l.b16 %v2708
    %v3411 = vunpack.c.h.b16 %v2708
    %v3412 = vunpack.c.l.b16 %v2709
    %v3413 = vunpack.c.h.b16 %v2709
    %v3414 = vunpack.c.l.b16 %v2710
    %v3415 = vpack.c.b16 %v2974, %v2967
    %v3416 = vpack.c.b16 %v2975, %v2968
    %v3417 = vpack.c.b16 %v2976, %v2969
    %v3418 = vpack.c.b16 %v2977, %v2970
    %v3419 = vpack.c.b16 %v2978, %v2971
    %v3420 = vpack.c.b16 %v2979, %v2972
    %v3421 = vpack.c.b16 %v2980, %v2973
    %v3422 = vpack.c.b16 %v2988, %v2981
    %v3423 = vpack.c.b16 %v2989, %v2982
    %v3424 = vpack.c.b16 %v2990, %v2983
    %v3425 = vpack.c.b16 %v2991, %v2984
    %v3426 = vpack.c.b16 %v2992, %v2985
    %v3427 = vpack.c.b16 %v2993, %v2986
    %v3428 = vpack.c.b16 %v2994, %v2987
    %v3429 = vpack.c.b16 %v3002, %v2995
    %v3430 = vpack.c.b16 %v3003, %v2996
    %v3431 = vpack.c.b16 %v3004, %v2997
    %v3432 = vpack.c.b16 %v3005, %v2998
    %v3433 = vpack.c.b16 %v3006, %v2999
    %v3434 = vpack.c.b16 %v3007, %v3000
    %v3435 = vpack.c.b16 %v3008, %v3001
    %v3436 = vpack.c.b16 %v3016, %v3009
    %v3437 = vpack.c.b16 %v3017, %v3010
    %v3438 = vpack.c.b16 %v3018, %v3011
    %v3439 = vpack.c.b16 %v3019, %v3012
    %v3440 = vpack.c.b16 %v3020, %v3013
    %v3441 = vpack.c.b16 %v3021, %v3014
    %v3442 = vpack.c.b16 %v3022, %v3015
    %v3443 = vpack.c.b16 %v3030, %v3023
    %v3444 = vpack.c.b16 %v3031, %v3024
    %v3445 = vpack.c.b16 %v3032, %v3025
    %v3446 = vpack.c.b16 %v3033, %v3026
    %v3447 = vpack.c.b16 %v3034, %v3027
    %v3448 = vpack.c.b16 %v3035, %v3028
    %v3449 = vpack.c.b16 %v3036, %v3029
    %v3450 = vpack.c.b16 %v3044, %v3037
    %v3451 = vpack.c.b16 %v3045, %v3038
    %v3452 = vpack.c.b16 %v3046, %v3039
    %v3453 = vpack.c.b16 %v3047, %v3040
    %v3454 = vpack.c.b16 %v3048, %v3041
    %v3455 = vpack.c.b16 %v3049, %v3042
    %v3456 = vpack.c.b16 %v3050, %v3043
    %v3457 = vpack.c.b16 %v3058, %v3051
    %v3458 = vpack.c.b16 %v3059, %v3052
    %v3459 = vpack.c.b16 %v3060, %v3053
    %v3460 = vpack.c.b16 %v3061, %v3054
    %v3461 = vpack.c.b16 %v3062, %v3055
    %v3462 = vpack.c.b16 %v3063, %v3056
    %v3463 = vpack.c.b16 %v3064, %v3057
    %v3464 = vpack.c.b16 %v3072, %v3065
    %v3465 = vpack.c.b16 %v3073, %v3066
    %v3466 = vpack.c.b16 %v3074, %v3067
    %v3467 = vpack.c.b16 %v3075, %v3068
    %v3468 = vpack.c.b16 %v3076, %v3069
    %v3469 = vpack.c.b16 %v3077, %v3070
    %v3470 = vpack.c.b16 %v3078, %v3071
    %v3471 = vpack.c.b16 %v3086, %v3079
    %v3472 = vpack.c.b16 %v3087, %v3080
    %v3473 = vpack.c.b16 %v3088, %v3081
    %v3474 = vpack.c.b16 %v3089, %v3082
    %v3475 = vpack.c.b16 %v3090, %v3083
    %v3476 = vpack.c.b16 %v3091, %v3084
    %v3477 = vpack.c.b16 %v3092, %v3085
    %v3478 = vpack.c.b16 %v3100, %v3093
    %v3479 = vpack.c.b16 %v3101, %v3094
    %v3480 = vpack.c.b16 %v3102, %v3095
    %v3481 = vpack.c.b16 %v3103, %v3096
    %v3482 = vpack.c.b16 %v3104, %v3097
    %v3483 = vpack.c.b16 %v3105, %v3098
    %v3484 = vpack.c.b16 %v3106, %v3099
    %v3485 = vpack.c.b16 %v3114, %v3107
    %v3486 = vpack.c.b16 %v3115, %v3108
    %v3487 = vpack.c.b16 %v3116, %v3109
    %v3488 = vpack.c.b16 %v3117, %v3110
    %v3489 = vpack.c.b16 %v3118, %v3111
    %v3490 = vpack.c.b16 %v3119, %v3112
    %v3491 = vpack.c.b16 %v3120, %v3113
    %v3492 = vpack.c.b16 %v3128, %v3121
    %v3493 = vpack.c.b16 %v3129, %v3122
    %v3494 = vpack.c.b16 %v3130, %v3123
    %v3495 = vpack.c.b16 %v3131, %v3124
    %v3496 = vpack.c.b16 %v3132, %v3125
    %v3497 = vpack.c.b16 %v3133, %v3126
    %v3498 = vpack.c.b16 %v3134, %v3127
    %v3499 = vpack.c.b16 %v3142, %v3135
    %v3500 = vpack.c.b16 %v3143, %v3136
    %v3501 = vpack.c.b16 %v3144, %v3137
    %v3502 = vpack.c.b16 %v3145, %v3138
    %v3503 = vpack.c.b16 %v3146, %v3139
    %v3504 = vpack.c.b16 %v3147, %v3140
    %v3505 = vpack.c.b16 %v3148, %v3141
    %v3506 = vpack.c.b16 %v3156, %v3149
    %v3507 = vpack.c.b16 %v3157, %v3150
    %v3508 = vpack.c.b16 %v3158, %v3151
    %v3509 = vpack.c.b16 %v3159, %v3152
    %v3510 = vpack.c.b16 %v3160, %v3153
    %v3511 = vpack.c.b16 %v3161, %v3154
    %v3512 = vpack.c.b16 %v3162, %v3155
    %v3513 = vpack.c.b16 %v3170, %v3163
    %v3514 = vpack.c.b16 %v3171, %v3164
    %v3515 = vpack.c.b16 %v3172, %v3165
    %v3516 = vpack.c.b16 %v3173, %v3166
    %v3517 = vpack.c.b16 %v3174, %v3167
    %v3518 = vpack.c.b16 %v3175, %v3168
    %v3519 = vpack.c.b16 %v3176, %v3169
    %v3520 = vpack.c.b16 %v3184, %v3177
    %v3521 = vpack.c.b16 %v3185, %v3178
    %v3522 = vpack.c.b16 %v3186, %v3179
    %v3523 = vpack.c.b16 %v3187, %v3180
    %v3524 = vpack.c.b16 %v3188, %v3181
    %v3525 = vpack.c.b16 %v3189, %v3182
    %v3526 = vpack.c.b16 %v3190, %v3183
    %v3527 = vpack.c.b16 %v3198, %v3191
    %v3528 = vpack.c.b16 %v3199, %v3192
    %v3529 = vpack.c.b16 %v3200, %v3193
    %v3530 = vpack.c.b16 %v3201, %v3194
    %v3531 = vpack.c.b16 %v3202, %v3195
    %v3532 = vpack.c.b16 %v3203, %v3196
    %v3533 = vpack.c.b16 %v3204, %v3197
    %v3534 = vpack.c.b16 %v3212, %v3205
    %v3535 = vpack.c.b16 %v3213, %v3206
    %v3536 = vpack.c.b16 %v3214, %v3207
    %v3537 = vpack.c.b16 %v3215, %v3208
    %v3538 = vpack.c.b16 %v3216, %v3209
    %v3539 = vpack.c.b16 %v3217, %v3210
    %v3540 = vpack.c.b16 %v3218, %v3211
    %v3541 = vpack.c.b16 %v3226, %v3219
    %v3542 = vpack.c.b16 %v3227, %v3220
    %v3543 = vpack.c.b16 %v3228, %v3221
    %v3544 = vpack.c.b16 %v3229, %v3222
    %v3545 = vpack.c.b16 %v3230, %v3223
    %v3546 = vpack.c.b16 %v3231, %v3224
    %v3547 = vpack.c.b16 %v3232, %v3225
    %v3548 = vpack.c.b16 %v3240, %v3233
    %v3549 = vpack.c.b16 %v3241, %v3234
    %v3550 = vpack.c.b16 %v3242, %v3235
    %v3551 = vpack.c.b16 %v3243, %v3236
    %v3552 = vpack.c.b16 %v3244, %v3237
    %v3553 = vpack.c.b16 %v3245, %v3238
    %v3554 = vpack.c.b16 %v3246, %v3239
    %v3555 = vpack.c.b16 %v3254, %v3247
    %v3556 = vpack.c.b16 %v3255, %v3248
    %v3557 = vpack.c.b16 %v3256, %v3249
    %v3558 = vpack.c.b16 %v3257, %v3250
    %v3559 = vpack.c.b16 %v3258, %v3251
    %v3560 = vpack.c.b16 %v3259, %v3252
    %v3561 = vpack.c.b16 %v3260, %v3253
    %v3562 = vpack.c.b16 %v3268, %v3261
    %v3563 = vpack.c.b16 %v3269, %v3262
    %v3564 = vpack.c.b16 %v3270, %v3263
    %v3565 = vpack.c.b16 %v3271, %v3264
    %v3566 = vpack.c.b16 %v3272, %v3265
    %v3567 = vpack.c.b16 %v3273, %v3266
    %v3568 = vpack.c.b16 %v3274, %v3267
    %v3569 = vpack.c.b16 %v3282, %v3275
    %v3570 = vpack.c.b16 %v3283, %v3276
    %v3571 = vpack.c.b16 %v3284, %v3277
    %v3572 = vpack.c.b16 %v3285, %v3278
    %v3573 = vpack.c.b16 %v3286, %v3279
    %v3574 = vpack.c.b16 %v3287, %v3280
    %v3575 = vpack.c.b16 %v3288, %v3281
    %v3576 = vpack.c.b16 %v3296, %v3289
    %v3577 = vpack.c.b16 %v3297, %v3290
    %v3578 = vpack.c.b16 %v3298, %v3291
    %v3579 = vpack.c.b16 %v3299, %v3292
    %v3580 = vpack.c.b16 %v3300, %v3293
    %v3581 = vpack.c.b16 %v3301, %v3294
    %v3582 = vpack.c.b16 %v3302, %v3295
    %v3583 = vpack.c.b16 %v3310, %v3303
    %v3584 = vpack.c.b16 %v3311, %v3304
    %v3585 = vpack.c.b16 %v3312, %v3305
    %v3586 = vpack.c.b16 %v3313, %v3306
    %v3587 = vpack.c.b16 %v3314, %v3307
    %v3588 = vpack.c.b16 %v3315, %v3308
    %v3589 = vpack.c.b16 %v3316, %v3309
    %v3590 = vpack.c.b16 %v3324, %v3317
    %v3591 = vpack.c.b16 %v3325, %v3318
    %v3592 = vpack.c.b16 %v3326, %v3319
    %v3593 = vpack.c.b16 %v3327, %v3320
    %v3594 = vpack.c.b16 %v3328, %v3321
    %v3595 = vpack.c.b16 %v3329, %v3322
    %v3596 = vpack.c.b16 %v3330, %v3323
    %v3597 = vpack.c.b16 %v3338, %v3331
    %v3598 = vpack.c.b16 %v3339, %v3332
    %v3599 = vpack.c.b16 %v3340, %v3333
    %v3600 = vpack.c.b16 %v3341, %v3334
    %v3601 = vpack.c.b16 %v3342, %v3335
    %v3602 = vpack.c.b16 %v3343, %v3336
    %v3603 = vpack.c.b16 %v3344, %v3337
    %v3604 = vpack.c.b16 %v3352, %v3345
    %v3605 = vpack.c.b16 %v3353, %v3346
    %v3606 = vpack.c.b16 %v3354, %v3347
    %v3607 = vpack.c.b16 %v3355, %v3348
    %v3608 = vpack.c.b16 %v3356, %v3349
    %v3609 = vpack.c.b16 %v3357, %v3350
    %v3610 = vpack.c.b16 %v3358, %v3351
    %v3611 = vpack.c.b16 %v3366, %v3359
    %v3612 = vpack.c.b16 %v3367, %v3360
    %v3613 = vpack.c.b16 %v3368, %v3361
    %v3614 = vpack.c.b16 %v3369, %v3362
    %v3615 = vpack.c.b16 %v3370, %v3363
    %v3616 = vpack.c.b16 %v3371, %v3364
    %v3617 = vpack.c.b16 %v3372, %v3365
    %v3618 = vpack.c.b16 %v3380, %v3373
    %v3619 = vpack.c.b16 %v3381, %v3374
    %v3620 = vpack.c.b16 %v3382, %v3375
    %v3621 = vpack.c.b16 %v3383, %v3376
    %v3622 = vpack.c.b16 %v3384, %v3377
    %v3623 = vpack.c.b16 %v3385, %v3378
    %v3624 = vpack.c.b16 %v3386, %v3379
    %v3625 = vpack.c.b16 %v3394, %v3387
    %v3626 = vpack.c.b16 %v3395, %v3388
    %v3627 = vpack.c.b16 %v3396, %v3389
    %v3628 = vpack.c.b16 %v3397, %v3390
    %v3629 = vpack.c.b16 %v3398, %v3391
    %v3630 = vpack.c.b16 %v3399, %v3392
    %v3631 = vpack.c.b16 %v3400, %v3393
    %v3632 = vpack.c.b16 %v3408, %v3401
    %v3633 = vpack.c.b16 %v3409, %v3402
    %v3634 = vpack.c.b16 %v3410, %v3403
    %v3635 = vpack.c.b16 %v3411, %v3404
    %v3636 = vpack.c.b16 %v3412, %v3405
    %v3637 = vpack.c.b16 %v3413, %v3406
    %v3638 = vpack.c.b16 %v3414, %v3407
    %3863 = vmatprep.subr.bf16.mxu0 %v3416
    %3864 = vmatpush1.bf16.msra.mxu0 %v3415
    %3865 = vmatprep.subr.bf16.mxu0 %v3423
    %3866 = vmatpush1.bf16.msra.mxu0 %v3422
    %3867 = vmatprep.subr.bf16.mxu0 %v3430
    %3868 = vmatpush1.bf16.msra.mxu0 %v3429
    %3869 = vmatprep.subr.bf16.mxu0 %v3437
    %3870 = vmatpush1.bf16.msra.mxu0 %v3436
    %3871 = vmatprep.subr.bf16.mxu0 %v3444
    %3872 = vmatpush1.bf16.msra.mxu0 %v3443
    %3873 = vmatprep.subr.bf16.mxu0 %v3451
    %3874 = vmatpush1.bf16.msra.mxu0 %v3450
    %3875 = vmatprep.subr.bf16.mxu0 %v3458
    %3876 = vmatpush1.bf16.msra.mxu0 %v3457
    %3877 = vmatprep.subr.bf16.mxu0 %v3465
    %3878 = vmatpush1.bf16.msra.mxu0 %v3464
    %3879 = vmatprep.subr.bf16.mxu0 %v3472
    %3880 = vmatpush1.bf16.msra.mxu0 %v3471
    %3881 = vmatprep.subr.bf16.mxu0 %v3479
    %3882 = vmatpush1.bf16.msra.mxu0 %v3478
    %3883 = vmatprep.subr.bf16.mxu0 %v3486
    %3884 = vmatpush1.bf16.msra.mxu0 %v3485
    %3885 = vmatprep.subr.bf16.mxu0 %v3493
    %3886 = vmatpush1.bf16.msra.mxu0 %v3492
    %3887 = vmatprep.subr.bf16.mxu0 %v3500
    %3888 = vmatpush1.bf16.msra.mxu0 %v3499
    %3889 = vmatprep.subr.bf16.mxu0 %v3507
    %3890 = vmatpush1.bf16.msra.mxu0 %v3506
    %3891 = vmatprep.subr.bf16.mxu0 %v3514
    %3892 = vmatpush1.bf16.msra.mxu0 %v3513
    %3893 = vmatprep.subr.bf16.mxu0 %v3521
    %3894 = vmatpush1.bf16.msra.mxu0 %v3520
    %3895 = vmatprep.mubr.bf16.mxu0 %v2452
    %3896 = vmatmul.mubr.bf16.gmra.mrb[0].mxu0 %v2451
    %v3897 = vpop.f32.mrb[0].mxu0
    %v3898 = vadd.f32 0.0, %v3897
    %v3899 = vpop.f32.mrb[0].mxu0
    %v3900 = vadd.f32 0.0, %v3899
    %v3901 = vpop.f32.mrb[0].mxu0
    %v3902 = vpop.f32.mrb[0].mxu0
    %3903 = vdwg.mxu0
    %3904 = vmatprep.subr.bf16.mxu0 %v3528
    %3905 = vmatpush1.bf16.msra.mxu0 %v3527
    %3906 = vmatprep.subr.bf16.mxu0 %v3535
    %3907 = vmatpush1.bf16.msra.mxu0 %v3534
    %3908 = vmatprep.subr.bf16.mxu0 %v3542
    %3909 = vmatpush1.bf16.msra.mxu0 %v3541
    %3910 = vmatprep.subr.bf16.mxu0 %v3549
    %3911 = vmatpush1.bf16.msra.mxu0 %v3548
    %3912 = vmatprep.subr.bf16.mxu0 %v3556
    %3913 = vmatpush1.bf16.msra.mxu0 %v3555
    %3914 = vmatprep.subr.bf16.mxu0 %v3563
    %3915 = vmatpush1.bf16.msra.mxu0 %v3562
    %3916 = vmatprep.subr.bf16.mxu0 %v3570
    %3917 = vmatpush1.bf16.msra.mxu0 %v3569
    %3918 = vmatprep.subr.bf16.mxu0 %v3577
    %3919 = vmatpush1.bf16.msra.mxu0 %v3576
    %3920 = vmatprep.subr.bf16.mxu0 %v3584
    %3921 = vmatpush1.bf16.msra.mxu0 %v3583
    %3922 = vmatprep.subr.bf16.mxu0 %v3591
    %3923 = vmatpush1.bf16.msra.mxu0 %v3590
    %3924 = vmatprep.subr.bf16.mxu0 %v3598
    %3925 = vmatpush1.bf16.msra.mxu0 %v3597
    %3926 = vmatprep.subr.bf16.mxu0 %v3605
    %3927 = vmatpush1.bf16.msra.mxu0 %v3604
    %3928 = vmatprep.subr.bf16.mxu0 %v3612
    %3929 = vmatpush1.bf16.msra.mxu0 %v3611
    %3930 = vmatprep.subr.bf16.mxu0 %v3619
    %3931 = vmatpush1.bf16.msra.mxu0 %v3618
    %3932 = vmatprep.subr.bf16.mxu0 %v3626
    %3933 = vmatpush1.bf16.msra.mxu0 %v3625
    %3934 = vmatprep.subr.bf16.mxu0 %v3633
    %3935 = vmatpush1.bf16.msra.mxu0 %v3632
    %3936 = vmatprep.mubr.bf16.mxu0 %v2454
    %3937 = vmatmul.mubr.bf16.gmra.mrb[0].mxu0 %v2453
    %v3938 = vpop.f32.mrb[0].mxu0
    %v3939 = vadd.f32 %v3898, %v3938
    %v3940 = vpop.f32.mrb[0].mxu0
    %v3941 = vadd.f32 %v3900, %v3940
    %v3942 = vpop.f32.mrb[0].mxu0
    %v3943 = vpop.f32.mrb[0].mxu0
    %3944 = vdwg.mxu0
    %3945 = vmatprep.subr.bf16.mxu0 %v3418
    %3946 = vmatpush1.bf16.msra.mxu0 %v3417
    %3947 = vmatprep.subr.bf16.mxu0 %v3425
    %3948 = vmatpush1.bf16.msra.mxu0 %v3424
    %3949 = vmatprep.subr.bf16.mxu0 %v3432
    %3950 = vmatpush1.bf16.msra.mxu0 %v3431
    %3951 = vmatprep.subr.bf16.mxu0 %v3439
    %3952 = vmatpush1.bf16.msra.mxu0 %v3438
    %3953 = vmatprep.subr.bf16.mxu0 %v3446
    %3954 = vmatpush1.bf16.msra.mxu0 %v3445
    %3955 = vmatprep.subr.bf16.mxu0 %v3453
    %3956 = vmatpush1.bf16.msra.mxu0 %v3452
    %3957 = vmatprep.subr.bf16.mxu0 %v3460
    %3958 = vmatpush1.bf16.msra.mxu0 %v3459
    %3959 = vmatprep.subr.bf16.mxu0 %v3467
    %3960 = vmatpush1.bf16.msra.mxu0 %v3466
    %3961 = vmatprep.subr.bf16.mxu0 %v3474
    %3962 = vmatpush1.bf16.msra.mxu0 %v3473
    %3963 = vmatprep.subr.bf16.mxu0 %v3481
    %3964 = vmatpush1.bf16.msra.mxu0 %v3480
    %3965 = vmatprep.subr.bf16.mxu0 %v3488
    %3966 = vmatpush1.bf16.msra.mxu0 %v3487
    %3967 = vmatprep.subr.bf16.mxu0 %v3495
    %3968 = vmatpush1.bf16.msra.mxu0 %v3494
    %3969 = vmatprep.subr.bf16.mxu0 %v3502
    %3970 = vmatpush1.bf16.msra.mxu0 %v3501
    %3971 = vmatprep.subr.bf16.mxu0 %v3509
    %3972 = vmatpush1.bf16.msra.mxu0 %v3508
    %3973 = vmatprep.subr.bf16.mxu0 %v3516
    %3974 = vmatpush1.bf16.msra.mxu0 %v3515
    %3975 = vmatprep.subr.bf16.mxu0 %v3523
    %3976 = vmatpush1.bf16.msra.mxu0 %v3522
    %3977 = vmatprep.mubr.bf16.mxu0 %v2452
    %3978 = vmatmul.mubr.bf16.gmra.mrb[0].mxu0 %v2451
    %v3979 = vpop.f32.mrb[0].mxu0
    %v3980 = vadd.f32 0.0, %v3979
    %v3981 = vpop.f32.mrb[0].mxu0
    %v3982 = vadd.f32 0.0, %v3981
    %v3983 = vpop.f32.mrb[0].mxu0
    %v3984 = vpop.f32.mrb[0].mxu0
    %3985 = vdwg.mxu0
    %3986 = vmatprep.subr.bf16.mxu0 %v3530
    %3987 = vmatpush1.bf16.msra.mxu0 %v3529
    %3988 = vmatprep.subr.bf16.mxu0 %v3537
    %3989 = vmatpush1.bf16.msra.mxu0 %v3536
    %3990 = vmatprep.subr.bf16.mxu0 %v3544
    %3991 = vmatpush1.bf16.msra.mxu0 %v3543
    %3992 = vmatprep.subr.bf16.mxu0 %v3551
    %3993 = vmatpush1.bf16.msra.mxu0 %v3550
    %3994 = vmatprep.subr.bf16.mxu0 %v3558
    %3995 = vmatpush1.bf16.msra.mxu0 %v3557
    %3996 = vmatprep.subr.bf16.mxu0 %v3565
    %3997 = vmatpush1.bf16.msra.mxu0 %v3564
    %3998 = vmatprep.subr.bf16.mxu0 %v3572
    %3999 = vmatpush1.bf16.msra.mxu0 %v3571
    %4000 = vmatprep.subr.bf16.mxu0 %v3579
    %4001 = vmatpush1.bf16.msra.mxu0 %v3578
    %4002 = vmatprep.subr.bf16.mxu0 %v3586
    %4003 = vmatpush1.bf16.msra.mxu0 %v3585
    %4004 = vmatprep.subr.bf16.mxu0 %v3593
    %4005 = vmatpush1.bf16.msra.mxu0 %v3592
    %4006 = vmatprep.subr.bf16.mxu0 %v3600
    %4007 = vmatpush1.bf16.msra.mxu0 %v3599
    %4008 = vmatprep.subr.bf16.mxu0 %v3607
    %4009 = vmatpush1.bf16.msra.mxu0 %v3606
    %4010 = vmatprep.subr.bf16.mxu0 %v3614
    %4011 = vmatpush1.bf16.msra.mxu0 %v3613
    %4012 = vmatprep.subr.bf16.mxu0 %v3621
    %4013 = vmatpush1.bf16.msra.mxu0 %v3620
    %4014 = vmatprep.subr.bf16.mxu0 %v3628
    %4015 = vmatpush1.bf16.msra.mxu0 %v3627
    %4016 = vmatprep.subr.bf16.mxu0 %v3635
    %4017 = vmatpush1.bf16.msra.mxu0 %v3634
    %4018 = vmatprep.mubr.bf16.mxu0 %v2454
    %4019 = vmatmul.mubr.bf16.gmra.mrb[0].mxu0 %v2453
    %v4020 = vpop.f32.mrb[0].mxu0
    %v4021 = vadd.f32 %v3980, %v4020
    %v4022 = vpop.f32.mrb[0].mxu0
    %v4023 = vadd.f32 %v3982, %v4022
    %v4024 = vpop.f32.mrb[0].mxu0
    %v4025 = vpop.f32.mrb[0].mxu0
    %4026 = vdwg.mxu0
    %4027 = vmatprep.subr.bf16.mxu0 %v3420
    %4028 = vmatpush1.bf16.msra.mxu0 %v3419
    %4029 = vmatprep.subr.bf16.mxu0 %v3427
    %4030 = vmatpush1.bf16.msra.mxu0 %v3426
    %4031 = vmatprep.subr.bf16.mxu0 %v3434
    %4032 = vmatpush1.bf16.msra.mxu0 %v3433
    %4033 = vmatprep.subr.bf16.mxu0 %v3441
    %4034 = vmatpush1.bf16.msra.mxu0 %v3440
    %4035 = vmatprep.subr.bf16.mxu0 %v3448
    %4036 = vmatpush1.bf16.msra.mxu0 %v3447
    %4037 = vmatprep.subr.bf16.mxu0 %v3455
    %4038 = vmatpush1.bf16.msra.mxu0 %v3454
    %4039 = vmatprep.subr.bf16.mxu0 %v3462
    %4040 = vmatpush1.bf16.msra.mxu0 %v3461
    %4041 = vmatprep.subr.bf16.mxu0 %v3469
    %4042 = vmatpush1.bf16.msra.mxu0 %v3468
    %4043 = vmatprep.subr.bf16.mxu0 %v3476
    %4044 = vmatpush1.bf16.msra.mxu0 %v3475
    %4045 = vmatprep.subr.bf16.mxu0 %v3483
    %4046 = vmatpush1.bf16.msra.mxu0 %v3482
    %4047 = vmatprep.subr.bf16.mxu0 %v3490
    %4048 = vmatpush1.bf16.msra.mxu0 %v3489
    %4049 = vmatprep.subr.bf16.mxu0 %v3497
    %4050 = vmatpush1.bf16.msra.mxu0 %v3496
    %4051 = vmatprep.subr.bf16.mxu0 %v3504
    %4052 = vmatpush1.bf16.msra.mxu0 %v3503
    %4053 = vmatprep.subr.bf16.mxu0 %v3511
    %4054 = vmatpush1.bf16.msra.mxu0 %v3510
    %4055 = vmatprep.subr.bf16.mxu0 %v3518
    %4056 = vmatpush1.bf16.msra.mxu0 %v3517
    %4057 = vmatprep.subr.bf16.mxu0 %v3525
    %4058 = vmatpush1.bf16.msra.mxu0 %v3524
    %4059 = vmatprep.mubr.bf16.mxu0 %v2452
    %4060 = vmatmul.mubr.bf16.gmra.mrb[0].mxu0 %v2451
    %v4061 = vpop.f32.mrb[0].mxu0
    %v4062 = vadd.f32 0.0, %v4061
    %v4063 = vpop.f32.mrb[0].mxu0
    %v4064 = vadd.f32 0.0, %v4063
    %v4065 = vpop.f32.mrb[0].mxu0
    %v4066 = vpop.f32.mrb[0].mxu0
    %4067 = vdwg.mxu0
    %4068 = vmatprep.subr.bf16.mxu0 %v3532
    %4069 = vmatpush1.bf16.msra.mxu0 %v3531
    %4070 = vmatprep.subr.bf16.mxu0 %v3539
    %4071 = vmatpush1.bf16.msra.mxu0 %v3538
    %4072 = vmatprep.subr.bf16.mxu0 %v3546
    %4073 = vmatpush1.bf16.msra.mxu0 %v3545
    %4074 = vmatprep.subr.bf16.mxu0 %v3553
    %4075 = vmatpush1.bf16.msra.mxu0 %v3552
    %4076 = vmatprep.subr.bf16.mxu0 %v3560
    %4077 = vmatpush1.bf16.msra.mxu0 %v3559
    %4078 = vmatprep.subr.bf16.mxu0 %v3567
    %4079 = vmatpush1.bf16.msra.mxu0 %v3566
    %4080 = vmatprep.subr.bf16.mxu0 %v3574
    %4081 = vmatpush1.bf16.msra.mxu0 %v3573
    %4082 = vmatprep.subr.bf16.mxu0 %v3581
    %4083 = vmatpush1.bf16.msra.mxu0 %v3580
    %4084 = vmatprep.subr.bf16.mxu0 %v3588
    %4085 = vmatpush1.bf16.msra.mxu0 %v3587
    %4086 = vmatprep.subr.bf16.mxu0 %v3595
    %4087 = vmatpush1.bf16.msra.mxu0 %v3594
    %4088 = vmatprep.subr.bf16.mxu0 %v3602
    %4089 = vmatpush1.bf16.msra.mxu0 %v3601
    %4090 = vmatprep.subr.bf16.mxu0 %v3609
    %4091 = vmatpush1.bf16.msra.mxu0 %v3608
    %4092 = vmatprep.subr.bf16.mxu0 %v3616
    %4093 = vmatpush1.bf16.msra.mxu0 %v3615
    %4094 = vmatprep.subr.bf16.mxu0 %v3623
    %4095 = vmatpush1.bf16.msra.mxu0 %v3622
    %4096 = vmatprep.subr.bf16.mxu0 %v3630
    %4097 = vmatpush1.bf16.msra.mxu0 %v3629
    %4098 = vmatprep.subr.bf16.mxu0 %v3637
    %4099 = vmatpush1.bf16.msra.mxu0 %v3636
    %4100 = vmatprep.mubr.bf16.mxu0 %v2454
    %4101 = vmatmul.mubr.bf16.gmra.mrb[0].mxu0 %v2453
    %v4102 = vpop.f32.mrb[0].mxu0
    %v4103 = vadd.f32 %v4062, %v4102
    %v4104 = vpop.f32.mrb[0].mxu0
    %v4105 = vadd.f32 %v4064, %v4104
    %v4106 = vpop.f32.mrb[0].mxu0
    %v4107 = vpop.f32.mrb[0].mxu0
    %4108 = vdwg.mxu0
    %4109 = vmatprep.subr.bf16.mxu0 0
    %4110 = vmatpush1.bf16.msra.mxu0 %v3421
    %4111 = vmatprep.subr.bf16.mxu0 0
    %4112 = vmatpush1.bf16.msra.mxu0 %v3428
    %4113 = vmatprep.subr.bf16.mxu0 0
    %4114 = vmatpush1.bf16.msra.mxu0 %v3435
    %4115 = vmatprep.subr.bf16.mxu0 0
    %4116 = vmatpush1.bf16.msra.mxu0 %v3442
    %4117 = vmatprep.subr.bf16.mxu0 0
    %4118 = vmatpush1.bf16.msra.mxu0 %v3449
    %4119 = vmatprep.subr.bf16.mxu0 0
    %4120 = vmatpush1.bf16.msra.mxu0 %v3456
    %4121 = vmatprep.subr.bf16.mxu0 0
    %4122 = vmatpush1.bf16.msra.mxu0 %v3463
    %4123 = vmatprep.subr.bf16.mxu0 0
    %4124 = vmatpush1.bf16.msra.mxu0 %v3470
    %4125 = vmatprep.subr.bf16.mxu0 0
    %4126 = vmatpush1.bf16.msra.mxu0 %v3477
    %4127 = vmatprep.subr.bf16.mxu0 0
    %4128 = vmatpush1.bf16.msra.mxu0 %v3484
    %4129 = vmatprep.subr.bf16.mxu0 0
    %4130 = vmatpush1.bf16.msra.mxu0 %v3491
    %4131 = vmatprep.subr.bf16.mxu0 0
    %4132 = vmatpush1.bf16.msra.mxu0 %v3498
    %4133 = vmatprep.subr.bf16.mxu0 0
    %4134 = vmatpush1.bf16.msra.mxu0 %v3505
    %4135 = vmatprep.subr.bf16.mxu0 0
    %4136 = vmatpush1.bf16.msra.mxu0 %v3512
    %4137 = vmatprep.subr.bf16.mxu0 0
    %4138 = vmatpush1.bf16.msra.mxu0 %v3519
    %4139 = vmatprep.subr.bf16.mxu0 0
    %4140 = vmatpush1.bf16.msra.mxu0 %v3526
    %4141 = vmatprep.mubr.bf16.mxu0 %v2452
    %4142 = vmatmul.mubr.bf16.gmra.mrb[0].mxu0 %v2451
    %v4143 = vpop.f32.mrb[0].mxu0
    %v4144 = vadd.f32 0.0, %v4143
    %v4145 = vpop.f32.mrb[0].mxu0
    %v4146 = vpop.f32.mrb[0].mxu0
    %v4147 = vpop.f32.mrb[0].mxu0
    %4148 = vdwg.mxu0
    %4149 = vmatprep.subr.bf16.mxu0 0
    %4150 = vmatpush1.bf16.msra.mxu0 %v3533
    %4151 = vmatprep.subr.bf16.mxu0 0
    %4152 = vmatpush1.bf16.msra.mxu0 %v3540
    %4153 = vmatprep.subr.bf16.mxu0 0
    %4154 = vmatpush1.bf16.msra.mxu0 %v3547
    %4155 = vmatprep.subr.bf16.mxu0 0
    %4156 = vmatpush1.bf16.msra.mxu0 %v3554
    %4157 = vmatprep.subr.bf16.mxu0 0
    %4158 = vmatpush1.bf16.msra.mxu0 %v3561
    %4159 = vmatprep.subr.bf16.mxu0 0
    %4160 = vmatpush1.bf16.msra.mxu0 %v3568
    %4161 = vmatprep.subr.bf16.mxu0 0
    %4162 = vmatpush1.bf16.msra.mxu0 %v3575
    %4163 = vmatprep.subr.bf16.mxu0 0
    %4164 = vmatpush1.bf16.msra.mxu0 %v3582
    %4165 = vmatprep.subr.bf16.mxu0 0
    %4166 = vmatpush1.bf16.msra.mxu0 %v3589
    %4167 = vmatprep.subr.bf16.mxu0 0
    %4168 = vmatpush1.bf16.msra.mxu0 %v3596
    %4169 = vmatprep.subr.bf16.mxu0 0
    %4170 = vmatpush1.bf16.msra.mxu0 %v3603
    %4171 = vmatprep.subr.bf16.mxu0 0
    %4172 = vmatpush1.bf16.msra.mxu0 %v3610
    %4173 = vmatprep.subr.bf16.mxu0 0
    %4174 = vmatpush1.bf16.msra.mxu0 %v3617
    %4175 = vmatprep.subr.bf16.mxu0 0
    %4176 = vmatpush1.bf16.msra.mxu0 %v3624
    %4177 = vmatprep.subr.bf16.mxu0 0
    %4178 = vmatpush1.bf16.msra.mxu0 %v3631
    %4179 = vmatprep.subr.bf16.mxu0 0
    %4180 = vmatpush1.bf16.msra.mxu0 %v3638
    %4181 = vmatprep.mubr.bf16.mxu0 %v2454
    %4182 = vmatmul.mubr.bf16.gmra.mrb[0].mxu0 %v2453
    %v4183 = vpop.f32.mrb[0].mxu0
    %v4184 = vadd.f32 %v4144, %v4183
    %v4185 = vpop.f32.mrb[0].mxu0
    %v4186 = vpop.f32.mrb[0].mxu0
    %v4187 = vpop.f32.mrb[0].mxu0
    %4188 = vdwg.mxu0
    %v4189 = vpack.c.bf16 %v3939, %v3939
    %v4190 = vpack.c.bf16 %v3941, %v3941
    %v4191 = vpack.c.bf16 %v4021, %v4021
    %v4192 = vpack.c.bf16 %v4023, %v4023
    %v4193 = vpack.c.bf16 %v4103, %v4103
    %v4194 = vpack.c.bf16 %v4105, %v4105
    %v4195 = vpack.c.bf16 %v4184, %v4184
    %v4196 = vld [vmem:[%s9] sm:$0x7f]
    %v4198 = vcombine.high %v4196, %v4196
    %v4200 = vunpack.c.l.s4 1966171168
    %v4201 = vunpack.c.0.s8 %v4200
    %v4202 = vlaneseq
    %v4203 = vshrl.u32 %v4202, 7
    %v4204 = vsub.s32 %v4201, %v4203
    %v4205 = vrot.slane %v4196, %v4204
    %v4207 = vunpack.c.l.s4 1966171168
    %v4208 = vunpack.c.0.s8 %v4207
    %v4209 = vlaneseq
    %v4210 = vshrl.u32 %v4209, 7
    %v4211 = vsub.s32 %v4208, %v4210
    %v4212 = vrot.slane %v4198, %v4211
    %v4213 = vcombine.high %v4205, %v4205
    %v4214 = vcombine.high %v4212, %v4212
    %v4216 = vunpack.c.l.s4 1966171168
    %v4217 = vunpack.c.0.s8 %v4216
    %v4218 = vlaneseq
    %v4219 = vshrl.u32 %v4218, 7
    %v4220 = vsub.s32 %v4217, %v4219
    %v4221 = vrot.slane %v4205, %v4220
    %v4223 = vunpack.c.l.s4 1966171168
    %v4224 = vunpack.c.0.s8 %v4223
    %v4225 = vlaneseq
    %v4226 = vshrl.u32 %v4225, 7
    %v4227 = vsub.s32 %v4224, %v4226
    %v4228 = vrot.slane %v4212, %v4227
    %v4230 = vunpack.c.l.s4 1966171168
    %v4231 = vunpack.c.0.s8 %v4230
    %v4232 = vlaneseq
    %v4233 = vshrl.u32 %v4232, 7
    %v4234 = vsub.s32 %v4231, %v4233
    %v4235 = vrot.slane %v4213, %v4234
    %v4237 = vunpack.c.l.s4 1966171168
    %v4238 = vunpack.c.0.s8 %v4237
    %v4239 = vlaneseq
    %v4240 = vshrl.u32 %v4239, 7
    %v4241 = vsub.s32 %v4238, %v4240
    %v4242 = vrot.slane %v4214, %v4241
    %v4243 = vcombine.high %v4221, %v4221
    %v4244 = vcombine.high %v4228, %v4228
    %v4245 = vcombine.high %v4235, %v4235
    %v4247 = vpack.i.b16 %v4221, %v4221
    %v4249 = vlaneseq
    %v4250 = vshrl.u32 %v4249, 7
    %v4251 = vsub.s32 0, %v4250
    %v4252 = vrot.slane %v4247, %v4251
    %v4254 = vpack.i.b16 %v4235, %v4235
    %v4256 = vlaneseq
    %v4257 = vshrl.u32 %v4256, 7
    %v4258 = vsub.s32 0, %v4257
    %v4259 = vrot.slane %v4254, %v4258
    %v4261 = vpack.i.b16 %v4243, %v4243
    %v4263 = vlaneseq
    %v4264 = vshrl.u32 %v4263, 7
    %v4265 = vsub.s32 0, %v4264
    %v4266 = vrot.slane %v4261, %v4265
    %v4268 = vpack.i.b16 %v4245, %v4245
    %v4270 = vlaneseq
    %v4271 = vshrl.u32 %v4270, 7
    %v4272 = vsub.s32 0, %v4271
    %v4273 = vrot.slane %v4268, %v4272
    %v4275 = vpack.i.b16 %v4228, %v4228
    %v4277 = vlaneseq
    %v4278 = vshrl.u32 %v4277, 7
    %v4279 = vsub.s32 0, %v4278
    %v4280 = vrot.slane %v4275, %v4279
    %v4282 = vpack.i.b16 %v4242, %v4242
    %v4284 = vlaneseq
    %v4285 = vshrl.u32 %v4284, 7
    %v4286 = vsub.s32 0, %v4285
    %v4287 = vrot.slane %v4282, %v4286
    %v4289 = vpack.i.b16 %v4244, %v4244
    %v4291 = vlaneseq
    %v4292 = vshrl.u32 %v4291, 7
    %v4293 = vsub.s32 0, %v4292
    %v4294 = vrot.slane %v4289, %v4293
    %v4295 = vadd.bf16 %v4189, %v4252
    %v4296 = vadd.bf16 %v4190, %v4259
    %v4297 = vadd.bf16 %v4191, %v4266
    %v4298 = vadd.bf16 %v4192, %v4273
    %v4299 = vadd.bf16 %v4193, %v4280
    %v4300 = vadd.bf16 %v4194, %v4287
    %v4301 = vadd.bf16 %v4195, %v4294
    %v4302 = vxor.u32 %v4295, 2147516416
    %v4303 = vxor.u32 %v4296, 2147516416
    %v4304 = vxor.u32 %v4297, 2147516416
    %v4305 = vxor.u32 %v4298, 2147516416
    %v4306 = vxor.u32 %v4299, 2147516416
    %v4307 = vxor.u32 %v4300, 2147516416
    %v4308 = vxor.u32 %v4301, 2147516416
    %v4310 = vmul.bf16 %v4302, 1069105081
    %v4311 = vpow.bf16.pop %v4310
    %v4313 = vmul.bf16 %v4303, 1069105081
    %v4314 = vpow.bf16.pop %v4313
    %v4316 = vmul.bf16 %v4304, 1069105081
    %v4317 = vpow.bf16.pop %v4316
    %v4319 = vmul.bf16 %v4305, 1069105081
    %v4320 = vpow.bf16.pop %v4319
    %v4322 = vmul.bf16 %v4306, 1069105081
    %v4323 = vpow.bf16.pop %v4322
    %v4325 = vmul.bf16 %v4307, 1069105081
    %v4326 = vpow.bf16.pop %v4325
    %v4328 = vmul.bf16 %v4308, 1069105081
    %v4329 = vpow.bf16.pop %v4328
    %v4330 = vadd.bf16 %v4311, 1065369472
    %v4331 = vadd.bf16 %v4314, 1065369472
    %v4332 = vadd.bf16 %v4317, 1065369472
    %v4333 = vadd.bf16 %v4320, 1065369472
    %v4334 = vadd.bf16 %v4323, 1065369472
    %v4335 = vadd.bf16 %v4326, 1065369472
    %v4336 = vadd.bf16 %v4329, 1065369472
    %v4337 = vrcp.bf16.pop %v4330
    %v4338 = vmul.bf16 1065369472, %v4337
    %v4339 = vrcp.bf16.pop %v4331
    %v4340 = vmul.bf16 1065369472, %v4339
    %v4341 = vrcp.bf16.pop %v4332
    %v4342 = vmul.bf16 1065369472, %v4341
    %v4343 = vrcp.bf16.pop %v4333
    %v4344 = vmul.bf16 1065369472, %v4343
    %v4345 = vrcp.bf16.pop %v4334
    %v4346 = vmul.bf16 1065369472, %v4345
    %v4347 = vrcp.bf16.pop %v4335
    %v4348 = vmul.bf16 1065369472, %v4347
    %v4349 = vrcp.bf16.pop %v4336
    %v4350 = vmul.bf16 1065369472, %v4349
    %v4358 = vunpack.c.l.b16 %v4338
    %v4359 = vunpack.c.l.b16 %v4340
    %v4360 = vunpack.c.l.b16 %v4342
    %v4361 = vunpack.c.l.b16 %v4344
    %v4362 = vunpack.c.l.b16 %v4346
    %v4363 = vunpack.c.l.b16 %v4348
    %v4364 = vunpack.c.l.b16 %v4350
    %v4365 = vpack.c.b16 %v4359, %v4358
    %v4366 = vpack.c.b16 %v4361, %v4360
    %v4367 = vpack.c.b16 %v4363, %v4362
    %v4368 = vpack.c.b16 %v4364, %v4364
    %4373 = vst [vmem:[#allocation2] sm:$0xff] %v4365
    %4374 = vst [vmem:[#allocation2 + $0x8] sm:$0xff] %v4366
    %4375 = vst [vmem:[#allocation2 + $0x10] sm:$0xff] %v4367
    %vm4376 = vcmask 125952
    %4377 = vst.msk [vmem:[#allocation2 + $0x18] sm:$0xf] %vm4376, %v4368
    %vm4378 = vcmask 162816
    %4379 = vst.msk [vmem:[#allocation4] sm:$0xff] %vm4378, %v2102
    %4380 = vst.msk [vmem:[#allocation6] sm:$0xff] %vm4378, %v2104
    // Predicated region
    $region42: #{tpu_custom_call.1} parent=1 // pred_check
      _
    $region43: #{tpu_custom_call.1} parent=1 // pred_check_branch
      %4382 = sbr.rel (0) target = $region45
    $region44: #{tpu_custom_call.1} parent=1 // pred_region
      %s4384 = ssub.s32 448, 448
      %4385 = vsyncadd [#allocation3], %s4384
      %s4387 = sshll.u32 [#allocation2], 4
      %s4388 = int_to_ptr.vmem [resolvable:$true] %s4387
      %4390 = dma.vmem_to_hbm [thread:$0]  %s4388, 448, %s10, [#allocation3]
    $region45: #{tpu_custom_call.1} parent=1 // pred_fallthru
      _
    // Predicated region
    $region46: #{tpu_custom_call.1} parent=1 // pred_check
      _
    $region47: #{tpu_custom_call.1} parent=1 // pred_check_branch
      %4392 = sbr.rel (0) target = $region49
    $region48: #{tpu_custom_call.1} parent=1 // pred_region
      %s4394 = ssub.s32 128, 128
      %4395 = vsyncadd [#allocation5], %s4394
      %s4397 = sshll.u32 [#allocation4], 4
      %s4398 = int_to_ptr.vmem [resolvable:$true] %s4397
      %4400 = dma.vmem_to_hbm [thread:$0]  %s4398, 128, %s11, [#allocation5]
    $region49: #{tpu_custom_call.1} parent=1 // pred_fallthru
      _
    // Predicated region
    $region50: #{tpu_custom_call.1} parent=1 // pred_check
      _
    $region51: #{tpu_custom_call.1} parent=1 // pred_check_branch
      %4402 = sbr.rel (0) target = $region53
    $region52: #{tpu_custom_call.1} parent=1 // pred_region
      %s4404 = ssub.s32 128, 128
      %4405 = vsyncadd [#allocation5], %s4404
      %s4407 = sshll.u32 [#allocation6], 4
      %s4408 = int_to_ptr.vmem [resolvable:$true] %s4407
      %4410 = dma.vmem_to_hbm [thread:$0]  %s4408, 128, %s12, [#allocation5]
    $region53: #{tpu_custom_call.1} parent=1 // pred_fallthru
      _
    // Predicated region
    $region54: #{tpu_custom_call.1} parent=1 // pred_check
      _
    $region55: #{tpu_custom_call.1} parent=1 // pred_check_branch
      %4412 = sbr.rel (0) target = $region57
    $region56: #{tpu_custom_call.1} parent=1 // pred_region
      %4413 = dma.done [#allocation3], 448
    $region57: #{tpu_custom_call.1} parent=1 // pred_fallthru
      _
    // Predicated region
    $region58: #{tpu_custom_call.1} parent=1 // pred_check
      _
    $region59: #{tpu_custom_call.1} parent=1 // pred_check_branch
      %4415 = sbr.rel (0) target = $region61
    $region60: #{tpu_custom_call.1} parent=1 // pred_region
      %4416 = dma.done [#allocation5], 128
    $region61: #{tpu_custom_call.1} parent=1 // pred_fallthru
      _
    // Predicated region
    $region62: #{tpu_custom_call.1} parent=1 // pred_check
      _
    $region63: #{tpu_custom_call.1} parent=1 // pred_check_branch
      %4418 = sbr.rel (0) target = $region65
    $region64: #{tpu_custom_call.1} parent=1 // pred_region
      %4419 = dma.done [#allocation5], 128
    $region65: #{tpu_custom_call.1} parent=1 // pred_fallthru
      _
    %4420 = vsyncpa [#allocation3], 1
    %4421 = vsyncpa [#allocation5], 1

</llo_original>
